<compile_context>
chip_gen: v5e
topology: v5e:2x2
jax: 0.10.0
libtpu: 0.0.40
codegen_flags: <defaults>
</compile_context>

<pallas_src>
import functools

import jax
import jax.numpy as jnp
from jax import lax
from jax.experimental import pallas as pl
from jax.experimental.pallas import tpu as pltpu

K = 7
PAD = (K - 1) // 2


def _attn_kernel(wf_ref, bf_ref, x_ref, y_ref, att_ref, sum_ref, max_ref, pad_ref,
                 *, w, inv_2c):
    """Channel mean/max reduction + BN-folded 7x7 conv + 2-way softmax.

    wf_ref : (2*2*K*K,) f32 SMEM -- BN-folded conv weights, flat OIHW order
    bf_ref : (2,)        f32 SMEM -- BN-folded conv bias
    x_ref, y_ref : (1, CT, HW) VMEM input tiles (one channel tile of one image)
    att_ref      : (1, 2, HW) f32 VMEM output tile (softmax attention maps)
    sum_ref, max_ref : (1, HW) f32 VMEM scratch (running channel sum / max)
    pad_ref          : (2, HW + 2*(PAD*w + PAD)) f32 VMEM scratch (zero-bordered maps)
    """
    ci_grid = pl.program_id(1)
    nc = pl.num_programs(1)
    hw = x_ref.shape[2]
    off = PAD * w + PAD

    # ---- partial channel sum / max of this channel tile ----------------------
    # Vectorized sublane reductions (XLU) over the (CT, HW) tile; f32 accumulation.
    xt = x_ref[0].astype(jnp.float32)                     # (CT, HW)
    yt = y_ref[0].astype(jnp.float32)
    psum = (jnp.sum(xt, axis=0, keepdims=True)
            + jnp.sum(yt, axis=0, keepdims=True))         # (1, HW)
    pmax = jnp.maximum(jnp.max(xt, axis=0, keepdims=True),
                       jnp.max(yt, axis=0, keepdims=True))

    @pl.when(ci_grid == 0)
    def _():
        sum_ref[...] = psum
        max_ref[...] = pmax

    @pl.when(ci_grid > 0)
    def _():
        sum_ref[...] = sum_ref[...] + psum
        max_ref[...] = jnp.maximum(max_ref[...], pmax)

    # ---- finalize once per image: 7x7 conv (flat space) + softmax ------------
    @pl.when(ci_grid == nc - 1)
    def _():
        pad_ref[...] = jnp.zeros(pad_ref.shape, pad_ref.dtype)
        pad_ref[0:1, off:off + hw] = sum_ref[...] * inv_2c   # mean map
        pad_ref[1:2, off:off + hw] = max_ref[...]            # max map

        # Column index of every flattened pixel; the 7 lane masks zero taps whose
        # column leaves [0, w) (a flat shift by dx-PAD would otherwise wrap into the
        # neighbouring row).  Top/bottom halo rows land in the zero border of
        # pad_ref automatically.
        col = lax.broadcasted_iota(jnp.int32, (1, hw), 1) % w
        masks = [(col >= PAD - dx) & (col < w + PAD - dx) for dx in range(K)]

        acc0 = jnp.zeros((1, hw), jnp.float32) + bf_ref[0]
        acc1 = jnp.zeros((1, hw), jnp.float32) + bf_ref[1]
        for cin in range(2):
            for dy in range(K):
                for dx in range(K):
                    q = off + (dy - PAD) * w + (dx - PAD)     # static offset >= 0
                    tap = pad_ref[cin:cin + 1, q:q + hw]      # loaded once,
                    if dx != PAD:                             # used by both outputs
                        tap = jnp.where(masks[dx], tap, 0.0)
                    w0 = wf_ref[(0 * 2 + cin) * K * K + dy * K + dx]
                    w1 = wf_ref[(1 * 2 + cin) * K * K + dy * K + dx]
                    acc0 = acc0 + w0 * tap
                    acc1 = acc1 + w1 * tap

        # numerically stable 2-way softmax
        m = jnp.maximum(acc0, acc1)
        e0 = jnp.exp(acc0 - m)
        e1 = jnp.exp(acc1 - m)
        s = e0 + e1
        inv = pl.reciprocal(s, approx=True)        # EUP slot
        inv = inv * (2.0 - s * inv)                # one Newton step -> f32 accuracy
        att_ref[0, 0:1, :] = e0 * inv
        att_ref[0, 1:2, :] = e1 * inv


def _apply_kernel(x_ref, y_ref, att_ref, o_ref):
    """out = x * attn0 + y * attn1, combine done in the input dtype."""
    a0 = att_ref[0, 0:1, :].astype(o_ref.dtype)
    a1 = att_ref[0, 1:2, :].astype(o_ref.dtype)
    o_ref[0] = x_ref[0] * a0 + y_ref[0] * a1


def _pick_c_tile(c, hw, itemsize, budget_bytes=2 * 1024 * 1024):
    """Largest channel tile whose (ct, hw) block fits the per-tensor budget and
    satisfies the TPU block constraint (second-minor: multiple of 8 or full dim)."""
    best = None
    for ct in range(1, c + 1):
        if c % ct:
            continue
        if ct != c and ct % 8:
            continue
        if ct * hw * itemsize <= budget_bytes:
            best = ct
    if best is None:
        best = 8 if c % 8 == 0 else c
    return best


def spatial_select_block(x, y, conv_w, conv_b, bn_gamma, bn_beta, bn_mean, bn_var,
                         eps=1e-5, c_tile=None):
    """x, y: (B, C, H, W).  conv_w: (2, 2, K, K).  conv_b / bn_*: (2,)."""
    b, c, h, w = x.shape
    hw = h * w

    # Fold eval-mode BatchNorm into the conv: out = scale*(conv(x)+b-mean) + beta
    scale = bn_gamma / jnp.sqrt(bn_var + eps)
    w_fold = (conv_w * scale[:, None, None, None]).astype(jnp.float32)
    b_fold = ((conv_b - bn_mean) * scale + bn_beta).astype(jnp.float32)
    w_flat = w_fold.reshape(-1)

    # Lane-dense layout: (B, C, H*W); the wrapper-side reshape is free for NCHW.
    xf = x.reshape(b, c, hw)
    yf = y.reshape(b, c, hw)

    if c_tile is None:
        c_tile = _pick_c_tile(c, hw, x.dtype.itemsize)
    assert c % c_tile == 0, "c_tile must divide C"
    nc = c // c_tile

    block_bytes = c_tile * hw * x.dtype.itemsize
    # Explicit VMEM budget: 2 double-buffered (ct, hw) inputs + f32 reduce temps
    # + attn/scratch + margin.  v5e's 16 MiB scoped default is too small.
    vmem_limit = int(min(96 * 1024 * 1024,
                         max(32 * 1024 * 1024, 12 * block_bytes + (8 << 20))))
    off = PAD * w + PAD

    att = pl.pallas_call(
        functools.partial(_attn_kernel, w=w, inv_2c=1.0 / (2 * c)),
        out_shape=jax.ShapeDtypeStruct((b, 2, hw), jnp.float32),
        grid=(b, nc),
        in_specs=[
            pl.BlockSpec(memory_space=pltpu.MemorySpace.SMEM),          # conv weights
            pl.BlockSpec(memory_space=pltpu.MemorySpace.SMEM),          # conv bias
            pl.BlockSpec((1, c_tile, hw), lambda bi, ci: (bi, ci, 0)),  # x
            pl.BlockSpec((1, c_tile, hw), lambda bi, ci: (bi, ci, 0)),  # y
        ],
        out_specs=pl.BlockSpec((1, 2, hw), lambda bi, ci: (bi, 0, 0)),
        scratch_shapes=[
            pltpu.VMEM((1, hw), jnp.float32),             # running channel sum
            pltpu.VMEM((1, hw), jnp.float32),             # running channel max
            pltpu.VMEM((2, hw + 2 * off), jnp.float32),   # zero-bordered flat maps
        ],
        compiler_params=pltpu.CompilerParams(
            dimension_semantics=("parallel", "arbitrary"),
            vmem_limit_bytes=vmem_limit),
    )(w_flat, b_fold, xf, yf)

    out = pl.pallas_call(
        _apply_kernel,
        out_shape=jax.ShapeDtypeStruct((b, c, hw), x.dtype),
        grid=(b, nc),
        in_specs=[
            pl.BlockSpec((1, c_tile, hw), lambda bi, ci: (bi, ci, 0)),  # x
            pl.BlockSpec((1, c_tile, hw), lambda bi, ci: (bi, ci, 0)),  # y
            pl.BlockSpec((1, 2, hw), lambda bi, ci: (bi, 0, 0)),        # attn maps
        ],
        out_specs=pl.BlockSpec((1, c_tile, hw), lambda bi, ci: (bi, ci, 0)),
        compiler_params=pltpu.CompilerParams(
            dimension_semantics=("parallel", "parallel"),
            vmem_limit_bytes=vmem_limit),
    )(xf, yf, att)

    return out.reshape(b, c, h, w)


def _reference(x, y, conv_w, conv_b, bn_gamma, bn_beta, bn_mean, bn_var, eps=1e-5):
    """Pure-JAX reference mirroring the PyTorch forward (eval-mode BN)."""
    cat = jnp.concatenate([x, y], axis=1)                            # (B, 2C, H, W)
    attn = jnp.concatenate(
        [cat.mean(axis=1, keepdims=True), cat.max(axis=1, keepdims=True)], axis=1)
    conv = lax.conv_general_dilated(
        attn, conv_w, window_strides=(1, 1),
        padding=[(PAD, PAD), (PAD, PAD)],
        dimension_numbers=("NCHW", "OIHW", "NCHW"))
    conv = conv + conv_b[None, :, None, None]
    bn = ((conv - bn_mean[None, :, None, None])
          / jnp.sqrt(bn_var[None, :, None, None] + eps)
          * bn_gamma[None, :, None, None] + bn_beta[None, :, None, None])
    att = jax.nn.softmax(bn, axis=1)
    return x * att[:, 0:1] + y * att[:, 1:2]


if __name__ == "__main__":
    key = jax.random.PRNGKey(0)
    kx, ky, kw, kb, kg, kbt, km, kv, kx2, ky2 = jax.random.split(key, 10)

    # Deterministic parameters (shapes per nn.Conv2d(2, 2, 7) / nn.BatchNorm2d(2)).
    fan_in = 2 * K * K
    bound = 1.0 / (fan_in ** 0.5)
    conv_w = jax.random.uniform(kw, (2, 2, K, K), jnp.float32, -bound, bound)
    conv_b = jax.random.uniform(kb, (2,), jnp.float32, -bound, bound)
    bn_gamma = jax.random.uniform(kg, (2,), jnp.float32, 0.5, 1.5)
    bn_beta = jax.random.uniform(kbt, (2,), jnp.float32, -0.2, 0.2)
    bn_mean = jax.random.uniform(km, (2,), jnp.float32, -0.3, 0.3)
    bn_var = jax.random.uniform(kv, (2,), jnp.float32, 0.5, 1.5)

    # Test 1: single channel tile per image (nc = 1).
    b, c, h, w = 2, 4, 16, 16
    x = jax.random.normal(kx, (b, c, h, w), jnp.float32)
    y = jax.random.normal(ky, (b, c, h, w), jnp.float32)
    out = spatial_select_block(x, y, conv_w, conv_b, bn_gamma, bn_beta, bn_mean, bn_var)
    out = jax.block_until_ready(out)
    ref = _reference(x, y, conv_w, conv_b, bn_gamma, bn_beta, bn_mean, bn_var)
    assert out.shape == (b, c, h, w)
    assert jnp.allclose(out, ref, atol=1e-4, rtol=1e-4), float(jnp.max(jnp.abs(out - ref)))

    # Test 2: multiple channel tiles (nc = 2) and non-square spatial shape.
    b2, c2, h2, w2 = 1, 16, 8, 16
    x2 = jax.random.normal(kx2, (b2, c2, h2, w2), jnp.float32)
    y2 = jax.random.normal(ky2, (b2, c2, h2, w2), jnp.float32)
    out2 = spatial_select_block(x2, y2, conv_w, conv_b, bn_gamma, bn_beta, bn_mean,
                                bn_var, c_tile=8)
    out2 = jax.block_until_ready(out2)
    ref2 = _reference(x2, y2, conv_w, conv_b, bn_gamma, bn_beta, bn_mean, bn_var)
    assert out2.shape == (b2, c2, h2, w2)
    assert jnp.allclose(out2, ref2, atol=1e-4, rtol=1e-4), float(jnp.max(jnp.abs(out2 - ref2)))

    print("KERNEL_OK")
</pallas_src>

<mosaic_0001>
module attributes {stable_mosaic.version = 11 : i64} {
  func.func @_attn_kernel(%arg0: i32, %arg1: i32, %arg2: memref<196xf32, #tpu.memory_space<smem>>, %arg3: memref<2xf32, #tpu.memory_space<smem>>, %arg4: memref<1x4x256xf32, #tpu.memory_space<vmem>>, %arg5: memref<1x4x256xf32, #tpu.memory_space<vmem>>, %arg6: memref<1x2x256xf32, #tpu.memory_space<vmem>>, %arg7: memref<1x256xf32, #tpu.memory_space<vmem>>, %arg8: memref<1x256xf32, #tpu.memory_space<vmem>>, %arg9: memref<2x358xf32, #tpu.memory_space<vmem>>) attributes {dimension_semantics = [#tpu.dimension_semantics<parallel>, #tpu.dimension_semantics<arbitrary>], iteration_bounds = array<i64: 2, 1>, scalar_prefetch = 0 : i64, scratch_operands = 3 : i64, tpu.core_type = #tpu.core_type<tc>, window_params = [{transform_indices = @transform_0, window_bounds = array<i64: 196>}, {transform_indices = @transform_1, window_bounds = array<i64: 2>}, {transform_indices = @transform_2, window_bounds = array<i64: 1, 4, 256>}, {transform_indices = @transform_3, window_bounds = array<i64: 1, 4, 256>}, {transform_indices = @transform_4, window_bounds = array<i64: 1, 2, 256>}]} {
    %c0 = arith.constant 0 : index
    %c0_0 = arith.constant 0 : index
    %c0_1 = arith.constant 0 : index
    %0 = vector.load %arg4[%c0, %c0_0, %c0_1] : memref<1x4x256xf32, #tpu.memory_space<vmem>>, vector<1x4x256xf32>
    %1 = vector.shape_cast %0 : vector<1x4x256xf32> to vector<4x256xf32>
    %c0_2 = arith.constant 0 : index
    %c0_3 = arith.constant 0 : index
    %c0_4 = arith.constant 0 : index
    %2 = vector.load %arg5[%c0_2, %c0_3, %c0_4] : memref<1x4x256xf32, #tpu.memory_space<vmem>>, vector<1x4x256xf32>
    %3 = vector.shape_cast %2 : vector<1x4x256xf32> to vector<4x256xf32>
    %cst = arith.constant dense<0.000000e+00> : vector<256xf32>
    %4 = vector.multi_reduction <add>, %1, %cst [0] : vector<4x256xf32> to vector<256xf32>
    %5 = vector.shape_cast %4 : vector<256xf32> to vector<1x256xf32>
    %cst_5 = arith.constant dense<0.000000e+00> : vector<256xf32>
    %6 = vector.multi_reduction <add>, %3, %cst_5 [0] : vector<4x256xf32> to vector<256xf32>
    %7 = vector.shape_cast %6 : vector<256xf32> to vector<1x256xf32>
    %8 = arith.addf %5, %7 : vector<1x256xf32>
    %cst_6 = arith.constant dense<0xFF800000> : vector<256xf32>
    %9 = vector.multi_reduction <maximumf>, %1, %cst_6 [0] : vector<4x256xf32> to vector<256xf32>
    %10 = vector.shape_cast %9 : vector<256xf32> to vector<1x256xf32>
    %cst_7 = arith.constant dense<0xFF800000> : vector<256xf32>
    %11 = vector.multi_reduction <maximumf>, %3, %cst_7 [0] : vector<4x256xf32> to vector<256xf32>
    %12 = vector.shape_cast %11 : vector<256xf32> to vector<1x256xf32>
    %13 = arith.maximumf %10, %12 : vector<1x256xf32>
    %c0_i32 = arith.constant 0 : i32
    %14 = arith.cmpi eq, %arg1, %c0_i32 : i32
    %15 = arith.extui %14 : i1 to i32
    %c0_i32_8 = arith.constant 0 : i32
    %16 = arith.cmpi ne, %15, %c0_i32_8 : i32
    scf.if %16 {
      %c0_13 = arith.constant 0 : index
      %c0_14 = arith.constant 0 : index
      %23 = vector.load %arg7[%c0_13, %c0_14] : memref<1x256xf32, #tpu.memory_space<vmem>>, vector<1x256xf32>
      tpu.vector_store %arg7[%c0_13, %c0_14], %8 {strides = array<i32>} : memref<1x256xf32, #tpu.memory_space<vmem>>, vector<1x256xf32>,
      %c0_15 = arith.constant 0 : index
      %c0_16 = arith.constant 0 : index
      %24 = vector.load %arg8[%c0_15, %c0_16] : memref<1x256xf32, #tpu.memory_space<vmem>>, vector<1x256xf32>
      tpu.vector_store %arg8[%c0_15, %c0_16], %13 {strides = array<i32>} : memref<1x256xf32, #tpu.memory_space<vmem>>, vector<1x256xf32>,
    } else {
    }
    %c0_i32_9 = arith.constant 0 : i32
    %17 = arith.cmpi sgt, %arg1, %c0_i32_9 : i32
    %18 = arith.extui %17 : i1 to i32
    %c0_i32_10 = arith.constant 0 : i32
    %19 = arith.cmpi ne, %18, %c0_i32_10 : i32
    scf.if %19 {
      %c0_13 = arith.constant 0 : index
      %c0_14 = arith.constant 0 : index
      %23 = vector.load %arg7[%c0_13, %c0_14] : memref<1x256xf32, #tpu.memory_space<vmem>>, vector<1x256xf32>
      %24 = arith.addf %23, %8 : vector<1x256xf32>
      %c0_15 = arith.constant 0 : index
      %c0_16 = arith.constant 0 : index
      %25 = vector.load %arg7[%c0_15, %c0_16] : memref<1x256xf32, #tpu.memory_space<vmem>>, vector<1x256xf32>
      tpu.vector_store %arg7[%c0_15, %c0_16], %24 {strides = array<i32>} : memref<1x256xf32, #tpu.memory_space<vmem>>, vector<1x256xf32>,
      %c0_17 = arith.constant 0 : index
      %c0_18 = arith.constant 0 : index
      %26 = vector.load %arg8[%c0_17, %c0_18] : memref<1x256xf32, #tpu.memory_space<vmem>>, vector<1x256xf32>
      %27 = arith.maximumf %26, %13 : vector<1x256xf32>
      %c0_19 = arith.constant 0 : index
      %c0_20 = arith.constant 0 : index
      %28 = vector.load %arg8[%c0_19, %c0_20] : memref<1x256xf32, #tpu.memory_space<vmem>>, vector<1x256xf32>
      tpu.vector_store %arg8[%c0_19, %c0_20], %27 {strides = array<i32>} : memref<1x256xf32, #tpu.memory_space<vmem>>, vector<1x256xf32>,
    } else {
    }
    %c0_i32_11 = arith.constant 0 : i32
    %20 = arith.cmpi eq, %arg1, %c0_i32_11 : i32
    %21 = arith.extui %20 : i1 to i32
    %c0_i32_12 = arith.constant 0 : i32
    %22 = arith.cmpi ne, %21, %c0_i32_12 : i32
    scf.if %22 {
      %cst_13 = arith.constant 0.000000e+00 : f32
      %23 = vector.broadcast %cst_13 : f32 to vector<2x358xf32>
      %c0_14 = arith.constant 0 : index
      %c0_15 = arith.constant 0 : index
      %24 = vector.load %arg9[%c0_14, %c0_15] : memref<2x358xf32, #tpu.memory_space<vmem>>, vector<2x358xf32>
      tpu.vector_store %arg9[%c0_14, %c0_15], %23 {strides = array<i32>} : memref<2x358xf32, #tpu.memory_space<vmem>>, vector<2x358xf32>,
      %c0_16 = arith.constant 0 : index
      %c0_17 = arith.constant 0 : index
      %25 = vector.load %arg7[%c0_16, %c0_17] : memref<1x256xf32, #tpu.memory_space<vmem>>, vector<1x256xf32>
      %cst_18 = arith.constant 1.250000e-01 : f32
      %26 = vector.broadcast %cst_18 : f32 to vector<1x256xf32>
      %27 = arith.mulf %25, %26 : vector<1x256xf32>
      %c0_19 = arith.constant 0 : index
      %c51 = arith.constant 51 : index
      %28 = vector.load %arg9[%c0_19, %c51] : memref<2x358xf32, #tpu.memory_space<vmem>>, vector<1x256xf32>
      tpu.vector_store %arg9[%c0_19, %c51], %27 {strides = array<i32>} : memref<2x358xf32, #tpu.memory_space<vmem>>, vector<1x256xf32>,
      %c0_20 = arith.constant 0 : index
      %c0_21 = arith.constant 0 : index
      %29 = vector.load %arg8[%c0_20, %c0_21] : memref<1x256xf32, #tpu.memory_space<vmem>>, vector<1x256xf32>
      %c1 = arith.constant 1 : index
      %c51_22 = arith.constant 51 : index
      %30 = vector.load %arg9[%c1, %c51_22] : memref<2x358xf32, #tpu.memory_space<vmem>>, vector<1x256xf32>
      tpu.vector_store %arg9[%c1, %c51_22], %29 {strides = array<i32>} : memref<2x358xf32, #tpu.memory_space<vmem>>, vector<1x256xf32>,
      %31 = tpu.iota {dimensions = array<i32: 1>} : vector<1x256xi32>
      %c16_i32 = arith.constant 16 : i32
      %c0_i32_23 = arith.constant 0 : i32
      %32 = arith.cmpi eq, %c16_i32, %c0_i32_23 : i32
      %c1_i32 = arith.constant 1 : i32
      %33 = arith.select %32, %c1_i32, %c16_i32 : i32
      %34 = vector.broadcast %33 : i32 to vector<1x256xi32>
      %35 = arith.remsi %31, %34 : vector<1x256xi32>
      %c0_i32_24 = arith.constant 0 : i32
      %36 = vector.broadcast %c0_i32_24 : i32 to vector<1x256xi32>
      %37 = arith.cmpi ne, %35, %36 : vector<1x256xi32>
      %c0_i32_25 = arith.constant 0 : i32
      %38 = vector.broadcast %c0_i32_25 : i32 to vector<1x256xi32>
      %39 = arith.cmpi slt, %35, %38 : vector<1x256xi32>
      %c0_i32_26 = arith.constant 0 : i32
      %40 = arith.cmpi slt, %33, %c0_i32_26 : i32
      %41 = vector.broadcast %40 : i1 to vector<1x256xi1>
      %42 = vector.broadcast %41 : vector<1x256xi1> to vector<1x256xi1>
      %43 = arith.xori %39, %42 : vector<1x256xi1>
      %44 = arith.andi %43, %37 : vector<1x256xi1>
      %45 = vector.broadcast %33 : i32 to vector<1x256xi32>
      %46 = arith.addi %35, %45 : vector<1x256xi32>
      %47 = arith.select %44, %46, %35 : vector<1x256xi1>, vector<1x256xi32>
      %c3_i32 = arith.constant 3 : i32
      %48 = vector.broadcast %c3_i32 : i32 to vector<1x256xi32>
      %49 = arith.cmpi sge, %47, %48 : vector<1x256xi32>
      %c19_i32 = arith.constant 19 : i32
      %50 = vector.broadcast %c19_i32 : i32 to vector<1x256xi32>
      %51 = arith.cmpi slt, %47, %50 : vector<1x256xi32>
      %52 = arith.andi %49, %51 : vector<1x256xi1>
      %c2_i32 = arith.constant 2 : i32
      %53 = vector.broadcast %c2_i32 : i32 to vector<1x256xi32>
      %54 = arith.cmpi sge, %47, %53 : vector<1x256xi32>
      %c18_i32 = arith.constant 18 : i32
      %55 = vector.broadcast %c18_i32 : i32 to vector<1x256xi32>
      %56 = arith.cmpi slt, %47, %55 : vector<1x256xi32>
      %57 = arith.andi %54, %56 : vector<1x256xi1>
      %c1_i32_27 = arith.constant 1 : i32
      %58 = vector.broadcast %c1_i32_27 : i32 to vector<1x256xi32>
      %59 = arith.cmpi sge, %47, %58 : vector<1x256xi32>
      %c17_i32 = arith.constant 17 : i32
      %60 = vector.broadcast %c17_i32 : i32 to vector<1x256xi32>
      %61 = arith.cmpi slt, %47, %60 : vector<1x256xi32>
      %62 = arith.andi %59, %61 : vector<1x256xi1>
      %c-1_i32 = arith.constant -1 : i32
      %63 = vector.broadcast %c-1_i32 : i32 to vector<1x256xi32>
      %64 = arith.cmpi sge, %47, %63 : vector<1x256xi32>
      %c15_i32 = arith.constant 15 : i32
      %65 = vector.broadcast %c15_i32 : i32 to vector<1x256xi32>
      %66 = arith.cmpi slt, %47, %65 : vector<1x256xi32>
      %67 = arith.andi %64, %66 : vector<1x256xi1>
      %c-2_i32 = arith.constant -2 : i32
      %68 = vector.broadcast %c-2_i32 : i32 to vector<1x256xi32>
      %69 = arith.cmpi sge, %47, %68 : vector<1x256xi32>
      %c14_i32 = arith.constant 14 : i32
      %70 = vector.broadcast %c14_i32 : i32 to vector<1x256xi32>
      %71 = arith.cmpi slt, %47, %70 : vector<1x256xi32>
      %72 = arith.andi %69, %71 : vector<1x256xi1>
      %c-3_i32 = arith.constant -3 : i32
      %73 = vector.broadcast %c-3_i32 : i32 to vector<1x256xi32>
      %74 = arith.cmpi sge, %47, %73 : vector<1x256xi32>
      %c13_i32 = arith.constant 13 : i32
      %75 = vector.broadcast %c13_i32 : i32 to vector<1x256xi32>
      %76 = arith.cmpi slt, %47, %75 : vector<1x256xi32>
      %77 = arith.andi %74, %76 : vector<1x256xi1>
      %cst_28 = arith.constant 0.000000e+00 : f32
      %78 = vector.broadcast %cst_28 : f32 to vector<1x256xf32>
      %c0_29 = arith.constant 0 : index
      %79 = memref.load %arg3[%c0_29] : memref<2xf32, #tpu.memory_space<smem>>
      %80 = vector.broadcast %79 : f32 to vector<1x256xf32>
      %81 = arith.addf %78, %80 : vector<1x256xf32>
      %cst_30 = arith.constant 0.000000e+00 : f32
      %82 = vector.broadcast %cst_30 : f32 to vector<1x256xf32>
      %c1_31 = arith.constant 1 : index
      %83 = memref.load %arg3[%c1_31] : memref<2xf32, #tpu.memory_space<smem>>
      %84 = vector.broadcast %83 : f32 to vector<1x256xf32>
      %85 = arith.addf %82, %84 : vector<1x256xf32>
      %c0_32 = arith.constant 0 : index
      %c0_33 = arith.constant 0 : index
      %86 = vector.load %arg9[%c0_32, %c0_33] : memref<2x358xf32, #tpu.memory_space<vmem>>, vector<1x256xf32>
      %cst_34 = arith.constant 0.000000e+00 : f32
      %87 = vector.broadcast %cst_34 : f32 to vector<1x256xf32>
      %88 = arith.select %52, %86, %87 : vector<1x256xi1>, vector<1x256xf32>
      %c0_35 = arith.constant 0 : index
      %89 = memref.load %arg2[%c0_35] : memref<196xf32, #tpu.memory_space<smem>>
      %c98 = arith.constant 98 : index
      %90 = memref.load %arg2[%c98] : memref<196xf32, #tpu.memory_space<smem>>
      %91 = vector.broadcast %89 : f32 to vector<1x256xf32>
      %92 = arith.mulf %91, %88 : vector<1x256xf32>
      %93 = arith.addf %81, %92 : vector<1x256xf32>
      %94 = vector.broadcast %90 : f32 to vector<1x256xf32>
      %95 = arith.mulf %94, %88 : vector<1x256xf32>
      %96 = arith.addf %85, %95 : vector<1x256xf32>
      %c0_36 = arith.constant 0 : index
      %c1_37 = arith.constant 1 : index
      %97 = vector.load %arg9[%c0_36, %c1_37] : memref<2x358xf32, #tpu.memory_space<vmem>>, vector<1x256xf32>
      %cst_38 = arith.constant 0.000000e+00 : f32
      %98 = vector.broadcast %cst_38 : f32 to vector<1x256xf32>
      %99 = arith.select %57, %97, %98 : vector<1x256xi1>, vector<1x256xf32>
      %c1_39 = arith.constant 1 : index
      %100 = memref.load %arg2[%c1_39] : memref<196xf32, #tpu.memory_space<smem>>
      %c99 = arith.constant 99 : index
      %101 = memref.load %arg2[%c99] : memref<196xf32, #tpu.memory_space<smem>>
      %102 = vector.broadcast %100 : f32 to vector<1x256xf32>
      %103 = arith.mulf %102, %99 : vector<1x256xf32>
      %104 = arith.addf %93, %103 : vector<1x256xf32>
      %105 = vector.broadcast %101 : f32 to vector<1x256xf32>
      %106 = arith.mulf %105, %99 : vector<1x256xf32>
      %107 = arith.addf %96, %106 : vector<1x256xf32>
      %c0_40 = arith.constant 0 : index
      %c2 = arith.constant 2 : index
      %108 = vector.load %arg9[%c0_40, %c2] : memref<2x358xf32, #tpu.memory_space<vmem>>, vector<1x256xf32>
      %cst_41 = arith.constant 0.000000e+00 : f32
      %109 = vector.broadcast %cst_41 : f32 to vector<1x256xf32>
      %110 = arith.select %62, %108, %109 : vector<1x256xi1>, vector<1x256xf32>
      %c2_42 = arith.constant 2 : index
      %111 = memref.load %arg2[%c2_42] : memref<196xf32, #tpu.memory_space<smem>>
      %c100 = arith.constant 100 : index
      %112 = memref.load %arg2[%c100] : memref<196xf32, #tpu.memory_space<smem>>
      %113 = vector.broadcast %111 : f32 to vector<1x256xf32>
      %114 = arith.mulf %113, %110 : vector<1x256xf32>
      %115 = arith.addf %104, %114 : vector<1x256xf32>
      %116 = vector.broadcast %112 : f32 to vector<1x256xf32>
      %117 = arith.mulf %116, %110 : vector<1x256xf32>
      %118 = arith.addf %107, %117 : vector<1x256xf32>
      %c0_43 = arith.constant 0 : index
      %c3 = arith.constant 3 : index
      %119 = vector.load %arg9[%c0_43, %c3] : memref<2x358xf32, #tpu.memory_space<vmem>>, vector<1x256xf32>
      %c3_44 = arith.constant 3 : index
      %120 = memref.load %arg2[%c3_44] : memref<196xf32, #tpu.memory_space<smem>>
      %c101 = arith.constant 101 : index
      %121 = memref.load %arg2[%c101] : memref<196xf32, #tpu.memory_space<smem>>
      %122 = vector.broadcast %120 : f32 to vector<1x256xf32>
      %123 = arith.mulf %122, %119 : vector<1x256xf32>
      %124 = arith.addf %115, %123 : vector<1x256xf32>
      %125 = vector.broadcast %121 : f32 to vector<1x256xf32>
      %126 = arith.mulf %125, %119 : vector<1x256xf32>
      %127 = arith.addf %118, %126 : vector<1x256xf32>
      %c0_45 = arith.constant 0 : index
      %c4 = arith.constant 4 : index
      %128 = vector.load %arg9[%c0_45, %c4] : memref<2x358xf32, #tpu.memory_space<vmem>>, vector<1x256xf32>
      %cst_46 = arith.constant 0.000000e+00 : f32
      %129 = vector.broadcast %cst_46 : f32 to vector<1x256xf32>
      %130 = arith.select %67, %128, %129 : vector<1x256xi1>, vector<1x256xf32>
      %c4_47 = arith.constant 4 : index
      %131 = memref.load %arg2[%c4_47] : memref<196xf32, #tpu.memory_space<smem>>
      %c102 = arith.constant 102 : index
      %132 = memref.load %arg2[%c102] : memref<196xf32, #tpu.memory_space<smem>>
      %133 = vector.broadcast %131 : f32 to vector<1x256xf32>
      %134 = arith.mulf %133, %130 : vector<1x256xf32>
      %135 = arith.addf %124, %134 : vector<1x256xf32>
      %136 = vector.broadcast %132 : f32 to vector<1x256xf32>
      %137 = arith.mulf %136, %130 : vector<1x256xf32>
      %138 = arith.addf %127, %137 : vector<1x256xf32>
      %c0_48 = arith.constant 0 : index
      %c5 = arith.constant 5 : index
      %139 = vector.load %arg9[%c0_48, %c5] : memref<2x358xf32, #tpu.memory_space<vmem>>, vector<1x256xf32>
      %cst_49 = arith.constant 0.000000e+00 : f32
      %140 = vector.broadcast %cst_49 : f32 to vector<1x256xf32>
      %141 = arith.select %72, %139, %140 : vector<1x256xi1>, vector<1x256xf32>
      %c5_50 = arith.constant 5 : index
      %142 = memref.load %arg2[%c5_50] : memref<196xf32, #tpu.memory_space<smem>>
      %c103 = arith.constant 103 : index
      %143 = memref.load %arg2[%c103] : memref<196xf32, #tpu.memory_space<smem>>
      %144 = vector.broadcast %142 : f32 to vector<1x256xf32>
      %145 = arith.mulf %144, %141 : vector<1x256xf32>
      %146 = arith.addf %135, %145 : vector<1x256xf32>
      %147 = vector.broadcast %143 : f32 to vector<1x256xf32>
      %148 = arith.mulf %147, %141 : vector<1x256xf32>
      %149 = arith.addf %138, %148 : vector<1x256xf32>
      %c0_51 = arith.constant 0 : index
      %c6 = arith.constant 6 : index
      %150 = vector.load %arg9[%c0_51, %c6] : memref<2x358xf32, #tpu.memory_space<vmem>>, vector<1x256xf32>
      %cst_52 = arith.constant 0.000000e+00 : f32
      %151 = vector.broadcast %cst_52 : f32 to vector<1x256xf32>
      %152 = arith.select %77, %150, %151 : vector<1x256xi1>, vector<1x256xf32>
      %c6_53 = arith.constant 6 : index
      %153 = memref.load %arg2[%c6_53] : memref<196xf32, #tpu.memory_space<smem>>
      %c104 = arith.constant 104 : index
      %154 = memref.load %arg2[%c104] : memref<196xf32, #tpu.memory_space<smem>>
      %155 = vector.broadcast %153 : f32 to vector<1x256xf32>
      %156 = arith.mulf %155, %152 : vector<1x256xf32>
      %157 = arith.addf %146, %156 : vector<1x256xf32>
      %158 = vector.broadcast %154 : f32 to vector<1x256xf32>
      %159 = arith.mulf %158, %152 : vector<1x256xf32>
      %160 = arith.addf %149, %159 : vector<1x256xf32>
      %c0_54 = arith.constant 0 : index
      %c16 = arith.constant 16 : index
      %161 = vector.load %arg9[%c0_54, %c16] : memref<2x358xf32, #tpu.memory_space<vmem>>, vector<1x256xf32>
      %cst_55 = arith.constant 0.000000e+00 : f32
      %162 = vector.broadcast %cst_55 : f32 to vector<1x256xf32>
      %163 = arith.select %52, %161, %162 : vector<1x256xi1>, vector<1x256xf32>
      %c7 = arith.constant 7 : index
      %164 = memref.load %arg2[%c7] : memref<196xf32, #tpu.memory_space<smem>>
      %c105 = arith.constant 105 : index
      %165 = memref.load %arg2[%c105] : memref<196xf32, #tpu.memory_space<smem>>
      %166 = vector.broadcast %164 : f32 to vector<1x256xf32>
      %167 = arith.mulf %166, %163 : vector<1x256xf32>
      %168 = arith.addf %157, %167 : vector<1x256xf32>
      %169 = vector.broadcast %165 : f32 to vector<1x256xf32>
      %170 = arith.mulf %169, %163 : vector<1x256xf32>
      %171 = arith.addf %160, %170 : vector<1x256xf32>
      %c0_56 = arith.constant 0 : index
      %c17 = arith.constant 17 : index
      %172 = vector.load %arg9[%c0_56, %c17] : memref<2x358xf32, #tpu.memory_space<vmem>>, vector<1x256xf32>
      %cst_57 = arith.constant 0.000000e+00 : f32
      %173 = vector.broadcast %cst_57 : f32 to vector<1x256xf32>
      %174 = arith.select %57, %172, %173 : vector<1x256xi1>, vector<1x256xf32>
      %c8 = arith.constant 8 : index
      %175 = memref.load %arg2[%c8] : memref<196xf32, #tpu.memory_space<smem>>
      %c106 = arith.constant 106 : index
      %176 = memref.load %arg2[%c106] : memref<196xf32, #tpu.memory_space<smem>>
      %177 = vector.broadcast %175 : f32 to vector<1x256xf32>
      %178 = arith.mulf %177, %174 : vector<1x256xf32>
      %179 = arith.addf %168, %178 : vector<1x256xf32>
      %180 = vector.broadcast %176 : f32 to vector<1x256xf32>
      %181 = arith.mulf %180, %174 : vector<1x256xf32>
      %182 = arith.addf %171, %181 : vector<1x256xf32>
      %c0_58 = arith.constant 0 : index
      %c18 = arith.constant 18 : index
      %183 = vector.load %arg9[%c0_58, %c18] : memref<2x358xf32, #tpu.memory_space<vmem>>, vector<1x256xf32>
      %cst_59 = arith.constant 0.000000e+00 : f32
      %184 = vector.broadcast %cst_59 : f32 to vector<1x256xf32>
      %185 = arith.select %62, %183, %184 : vector<1x256xi1>, vector<1x256xf32>
      %c9 = arith.constant 9 : index
      %186 = memref.load %arg2[%c9] : memref<196xf32, #tpu.memory_space<smem>>
      %c107 = arith.constant 107 : index
      %187 = memref.load %arg2[%c107] : memref<196xf32, #tpu.memory_space<smem>>
      %188 = vector.broadcast %186 : f32 to vector<1x256xf32>
      %189 = arith.mulf %188, %185 : vector<1x256xf32>
      %190 = arith.addf %179, %189 : vector<1x256xf32>
      %191 = vector.broadcast %187 : f32 to vector<1x256xf32>
      %192 = arith.mulf %191, %185 : vector<1x256xf32>
      %193 = arith.addf %182, %192 : vector<1x256xf32>
      %c0_60 = arith.constant 0 : index
      %c19 = arith.constant 19 : index
      %194 = vector.load %arg9[%c0_60, %c19] : memref<2x358xf32, #tpu.memory_space<vmem>>, vector<1x256xf32>
      %c10 = arith.constant 10 : index
      %195 = memref.load %arg2[%c10] : memref<196xf32, #tpu.memory_space<smem>>
      %c108 = arith.constant 108 : index
      %196 = memref.load %arg2[%c108] : memref<196xf32, #tpu.memory_space<smem>>
      %197 = vector.broadcast %195 : f32 to vector<1x256xf32>
      %198 = arith.mulf %197, %194 : vector<1x256xf32>
      %199 = arith.addf %190, %198 : vector<1x256xf32>
      %200 = vector.broadcast %196 : f32 to vector<1x256xf32>
      %201 = arith.mulf %200, %194 : vector<1x256xf32>
      %202 = arith.addf %193, %201 : vector<1x256xf32>
      %c0_61 = arith.constant 0 : index
      %c20 = arith.constant 20 : index
      %203 = vector.load %arg9[%c0_61, %c20] : memref<2x358xf32, #tpu.memory_space<vmem>>, vector<1x256xf32>
      %cst_62 = arith.constant 0.000000e+00 : f32
      %204 = vector.broadcast %cst_62 : f32 to vector<1x256xf32>
      %205 = arith.select %67, %203, %204 : vector<1x256xi1>, vector<1x256xf32>
      %c11 = arith.constant 11 : index
      %206 = memref.load %arg2[%c11] : memref<196xf32, #tpu.memory_space<smem>>
      %c109 = arith.constant 109 : index
      %207 = memref.load %arg2[%c109] : memref<196xf32, #tpu.memory_space<smem>>
      %208 = vector.broadcast %206 : f32 to vector<1x256xf32>
      %209 = arith.mulf %208, %205 : vector<1x256xf32>
      %210 = arith.addf %199, %209 : vector<1x256xf32>
      %211 = vector.broadcast %207 : f32 to vector<1x256xf32>
      %212 = arith.mulf %211, %205 : vector<1x256xf32>
      %213 = arith.addf %202, %212 : vector<1x256xf32>
      %c0_63 = arith.constant 0 : index
      %c21 = arith.constant 21 : index
      %214 = vector.load %arg9[%c0_63, %c21] : memref<2x358xf32, #tpu.memory_space<vmem>>, vector<1x256xf32>
      %cst_64 = arith.constant 0.000000e+00 : f32
      %215 = vector.broadcast %cst_64 : f32 to vector<1x256xf32>
      %216 = arith.select %72, %214, %215 : vector<1x256xi1>, vector<1x256xf32>
      %c12 = arith.constant 12 : index
      %217 = memref.load %arg2[%c12] : memref<196xf32, #tpu.memory_space<smem>>
      %c110 = arith.constant 110 : index
      %218 = memref.load %arg2[%c110] : memref<196xf32, #tpu.memory_space<smem>>
      %219 = vector.broadcast %217 : f32 to vector<1x256xf32>
      %220 = arith.mulf %219, %216 : vector<1x256xf32>
      %221 = arith.addf %210, %220 : vector<1x256xf32>
      %222 = vector.broadcast %218 : f32 to vector<1x256xf32>
      %223 = arith.mulf %222, %216 : vector<1x256xf32>
      %224 = arith.addf %213, %223 : vector<1x256xf32>
      %c0_65 = arith.constant 0 : index
      %c22 = arith.constant 22 : index
      %225 = vector.load %arg9[%c0_65, %c22] : memref<2x358xf32, #tpu.memory_space<vmem>>, vector<1x256xf32>
      %cst_66 = arith.constant 0.000000e+00 : f32
      %226 = vector.broadcast %cst_66 : f32 to vector<1x256xf32>
      %227 = arith.select %77, %225, %226 : vector<1x256xi1>, vector<1x256xf32>
      %c13 = arith.constant 13 : index
      %228 = memref.load %arg2[%c13] : memref<196xf32, #tpu.memory_space<smem>>
      %c111 = arith.constant 111 : index
      %229 = memref.load %arg2[%c111] : memref<196xf32, #tpu.memory_space<smem>>
      %230 = vector.broadcast %228 : f32 to vector<1x256xf32>
      %231 = arith.mulf %230, %227 : vector<1x256xf32>
      %232 = arith.addf %221, %231 : vector<1x256xf32>
      %233 = vector.broadcast %229 : f32 to vector<1x256xf32>
      %234 = arith.mulf %233, %227 : vector<1x256xf32>
      %235 = arith.addf %224, %234 : vector<1x256xf32>
      %c0_67 = arith.constant 0 : index
      %c32 = arith.constant 32 : index
      %236 = vector.load %arg9[%c0_67, %c32] : memref<2x358xf32, #tpu.memory_space<vmem>>, vector<1x256xf32>
      %cst_68 = arith.constant 0.000000e+00 : f32
      %237 = vector.broadcast %cst_68 : f32 to vector<1x256xf32>
      %238 = arith.select %52, %236, %237 : vector<1x256xi1>, vector<1x256xf32>
      %c14 = arith.constant 14 : index
      %239 = memref.load %arg2[%c14] : memref<196xf32, #tpu.memory_space<smem>>
      %c112 = arith.constant 112 : index
      %240 = memref.load %arg2[%c112] : memref<196xf32, #tpu.memory_space<smem>>
      %241 = vector.broadcast %239 : f32 to vector<1x256xf32>
      %242 = arith.mulf %241, %238 : vector<1x256xf32>
      %243 = arith.addf %232, %242 : vector<1x256xf32>
      %244 = vector.broadcast %240 : f32 to vector<1x256xf32>
      %245 = arith.mulf %244, %238 : vector<1x256xf32>
      %246 = arith.addf %235, %245 : vector<1x256xf32>
      %c0_69 = arith.constant 0 : index
      %c33 = arith.constant 33 : index
      %247 = vector.load %arg9[%c0_69, %c33] : memref<2x358xf32, #tpu.memory_space<vmem>>, vector<1x256xf32>
      %cst_70 = arith.constant 0.000000e+00 : f32
      %248 = vector.broadcast %cst_70 : f32 to vector<1x256xf32>
      %249 = arith.select %57, %247, %248 : vector<1x256xi1>, vector<1x256xf32>
      %c15 = arith.constant 15 : index
      %250 = memref.load %arg2[%c15] : memref<196xf32, #tpu.memory_space<smem>>
      %c113 = arith.constant 113 : index
      %251 = memref.load %arg2[%c113] : memref<196xf32, #tpu.memory_space<smem>>
      %252 = vector.broadcast %250 : f32 to vector<1x256xf32>
      %253 = arith.mulf %252, %249 : vector<1x256xf32>
      %254 = arith.addf %243, %253 : vector<1x256xf32>
      %255 = vector.broadcast %251 : f32 to vector<1x256xf32>
      %256 = arith.mulf %255, %249 : vector<1x256xf32>
      %257 = arith.addf %246, %256 : vector<1x256xf32>
      %c0_71 = arith.constant 0 : index
      %c34 = arith.constant 34 : index
      %258 = vector.load %arg9[%c0_71, %c34] : memref<2x358xf32, #tpu.memory_space<vmem>>, vector<1x256xf32>
      %cst_72 = arith.constant 0.000000e+00 : f32
      %259 = vector.broadcast %cst_72 : f32 to vector<1x256xf32>
      %260 = arith.select %62, %258, %259 : vector<1x256xi1>, vector<1x256xf32>
      %c16_73 = arith.constant 16 : index
      %261 = memref.load %arg2[%c16_73] : memref<196xf32, #tpu.memory_space<smem>>
      %c114 = arith.constant 114 : index
      %262 = memref.load %arg2[%c114] : memref<196xf32, #tpu.memory_space<smem>>
      %263 = vector.broadcast %261 : f32 to vector<1x256xf32>
      %264 = arith.mulf %263, %260 : vector<1x256xf32>
      %265 = arith.addf %254, %264 : vector<1x256xf32>
      %266 = vector.broadcast %262 : f32 to vector<1x256xf32>
      %267 = arith.mulf %266, %260 : vector<1x256xf32>
      %268 = arith.addf %257, %267 : vector<1x256xf32>
      %c0_74 = arith.constant 0 : index
      %c35 = arith.constant 35 : index
      %269 = vector.load %arg9[%c0_74, %c35] : memref<2x358xf32, #tpu.memory_space<vmem>>, vector<1x256xf32>
      %c17_75 = arith.constant 17 : index
      %270 = memref.load %arg2[%c17_75] : memref<196xf32, #tpu.memory_space<smem>>
      %c115 = arith.constant 115 : index
      %271 = memref.load %arg2[%c115] : memref<196xf32, #tpu.memory_space<smem>>
      %272 = vector.broadcast %270 : f32 to vector<1x256xf32>
      %273 = arith.mulf %272, %269 : vector<1x256xf32>
      %274 = arith.addf %265, %273 : vector<1x256xf32>
      %275 = vector.broadcast %271 : f32 to vector<1x256xf32>
      %276 = arith.mulf %275, %269 : vector<1x256xf32>
      %277 = arith.addf %268, %276 : vector<1x256xf32>
      %c0_76 = arith.constant 0 : index
      %c36 = arith.constant 36 : index
      %278 = vector.load %arg9[%c0_76, %c36] : memref<2x358xf32, #tpu.memory_space<vmem>>, vector<1x256xf32>
      %cst_77 = arith.constant 0.000000e+00 : f32
      %279 = vector.broadcast %cst_77 : f32 to vector<1x256xf32>
      %280 = arith.select %67, %278, %279 : vector<1x256xi1>, vector<1x256xf32>
      %c18_78 = arith.constant 18 : index
      %281 = memref.load %arg2[%c18_78] : memref<196xf32, #tpu.memory_space<smem>>
      %c116 = arith.constant 116 : index
      %282 = memref.load %arg2[%c116] : memref<196xf32, #tpu.memory_space<smem>>
      %283 = vector.broadcast %281 : f32 to vector<1x256xf32>
      %284 = arith.mulf %283, %280 : vector<1x256xf32>
      %285 = arith.addf %274, %284 : vector<1x256xf32>
      %286 = vector.broadcast %282 : f32 to vector<1x256xf32>
      %287 = arith.mulf %286, %280 : vector<1x256xf32>
      %288 = arith.addf %277, %287 : vector<1x256xf32>
      %c0_79 = arith.constant 0 : index
      %c37 = arith.constant 37 : index
      %289 = vector.load %arg9[%c0_79, %c37] : memref<2x358xf32, #tpu.memory_space<vmem>>, vector<1x256xf32>
      %cst_80 = arith.constant 0.000000e+00 : f32
      %290 = vector.broadcast %cst_80 : f32 to vector<1x256xf32>
      %291 = arith.select %72, %289, %290 : vector<1x256xi1>, vector<1x256xf32>
      %c19_81 = arith.constant 19 : index
      %292 = memref.load %arg2[%c19_81] : memref<196xf32, #tpu.memory_space<smem>>
      %c117 = arith.constant 117 : index
      %293 = memref.load %arg2[%c117] : memref<196xf32, #tpu.memory_space<smem>>
      %294 = vector.broadcast %292 : f32 to vector<1x256xf32>
      %295 = arith.mulf %294, %291 : vector<1x256xf32>
      %296 = arith.addf %285, %295 : vector<1x256xf32>
      %297 = vector.broadcast %293 : f32 to vector<1x256xf32>
      %298 = arith.mulf %297, %291 : vector<1x256xf32>
      %299 = arith.addf %288, %298 : vector<1x256xf32>
      %c0_82 = arith.constant 0 : index
      %c38 = arith.constant 38 : index
      %300 = vector.load %arg9[%c0_82, %c38] : memref<2x358xf32, #tpu.memory_space<vmem>>, vector<1x256xf32>
      %cst_83 = arith.constant 0.000000e+00 : f32
      %301 = vector.broadcast %cst_83 : f32 to vector<1x256xf32>
      %302 = arith.select %77, %300, %301 : vector<1x256xi1>, vector<1x256xf32>
      %c20_84 = arith.constant 20 : index
      %303 = memref.load %arg2[%c20_84] : memref<196xf32, #tpu.memory_space<smem>>
      %c118 = arith.constant 118 : index
      %304 = memref.load %arg2[%c118] : memref<196xf32, #tpu.memory_space<smem>>
      %305 = vector.broadcast %303 : f32 to vector<1x256xf32>
      %306 = arith.mulf %305, %302 : vector<1x256xf32>
      %307 = arith.addf %296, %306 : vector<1x256xf32>
      %308 = vector.broadcast %304 : f32 to vector<1x256xf32>
      %309 = arith.mulf %308, %302 : vector<1x256xf32>
      %310 = arith.addf %299, %309 : vector<1x256xf32>
      %c0_85 = arith.constant 0 : index
      %c48 = arith.constant 48 : index
      %311 = vector.load %arg9[%c0_85, %c48] : memref<2x358xf32, #tpu.memory_space<vmem>>, vector<1x256xf32>
      %cst_86 = arith.constant 0.000000e+00 : f32
      %312 = vector.broadcast %cst_86 : f32 to vector<1x256xf32>
      %313 = arith.select %52, %311, %312 : vector<1x256xi1>, vector<1x256xf32>
      %c21_87 = arith.constant 21 : index
      %314 = memref.load %arg2[%c21_87] : memref<196xf32, #tpu.memory_space<smem>>
      %c119 = arith.constant 119 : index
      %315 = memref.load %arg2[%c119] : memref<196xf32, #tpu.memory_space<smem>>
      %316 = vector.broadcast %314 : f32 to vector<1x256xf32>
      %317 = arith.mulf %316, %313 : vector<1x256xf32>
      %318 = arith.addf %307, %317 : vector<1x256xf32>
      %319 = vector.broadcast %315 : f32 to vector<1x256xf32>
      %320 = arith.mulf %319, %313 : vector<1x256xf32>
      %321 = arith.addf %310, %320 : vector<1x256xf32>
      %c0_88 = arith.constant 0 : index
      %c49 = arith.constant 49 : index
      %322 = vector.load %arg9[%c0_88, %c49] : memref<2x358xf32, #tpu.memory_space<vmem>>, vector<1x256xf32>
      %cst_89 = arith.constant 0.000000e+00 : f32
      %323 = vector.broadcast %cst_89 : f32 to vector<1x256xf32>
      %324 = arith.select %57, %322, %323 : vector<1x256xi1>, vector<1x256xf32>
      %c22_90 = arith.constant 22 : index
      %325 = memref.load %arg2[%c22_90] : memref<196xf32, #tpu.memory_space<smem>>
      %c120 = arith.constant 120 : index
      %326 = memref.load %arg2[%c120] : memref<196xf32, #tpu.memory_space<smem>>
      %327 = vector.broadcast %325 : f32 to vector<1x256xf32>
      %328 = arith.mulf %327, %324 : vector<1x256xf32>
      %329 = arith.addf %318, %328 : vector<1x256xf32>
      %330 = vector.broadcast %326 : f32 to vector<1x256xf32>
      %331 = arith.mulf %330, %324 : vector<1x256xf32>
      %332 = arith.addf %321, %331 : vector<1x256xf32>
      %c0_91 = arith.constant 0 : index
      %c50 = arith.constant 50 : index
      %333 = vector.load %arg9[%c0_91, %c50] : memref<2x358xf32, #tpu.memory_space<vmem>>, vector<1x256xf32>
      %cst_92 = arith.constant 0.000000e+00 : f32
      %334 = vector.broadcast %cst_92 : f32 to vector<1x256xf32>
      %335 = arith.select %62, %333, %334 : vector<1x256xi1>, vector<1x256xf32>
      %c23 = arith.constant 23 : index
      %336 = memref.load %arg2[%c23] : memref<196xf32, #tpu.memory_space<smem>>
      %c121 = arith.constant 121 : index
      %337 = memref.load %arg2[%c121] : memref<196xf32, #tpu.memory_space<smem>>
      %338 = vector.broadcast %336 : f32 to vector<1x256xf32>
      %339 = arith.mulf %338, %335 : vector<1x256xf32>
      %340 = arith.addf %329, %339 : vector<1x256xf32>
      %341 = vector.broadcast %337 : f32 to vector<1x256xf32>
      %342 = arith.mulf %341, %335 : vector<1x256xf32>
      %343 = arith.addf %332, %342 : vector<1x256xf32>
      %c0_93 = arith.constant 0 : index
      %c51_94 = arith.constant 51 : index
      %344 = vector.load %arg9[%c0_93, %c51_94] : memref<2x358xf32, #tpu.memory_space<vmem>>, vector<1x256xf32>
      %c24 = arith.constant 24 : index
      %345 = memref.load %arg2[%c24] : memref<196xf32, #tpu.memory_space<smem>>
      %c122 = arith.constant 122 : index
      %346 = memref.load %arg2[%c122] : memref<196xf32, #tpu.memory_space<smem>>
      %347 = vector.broadcast %345 : f32 to vector<1x256xf32>
      %348 = arith.mulf %347, %344 : vector<1x256xf32>
      %349 = arith.addf %340, %348 : vector<1x256xf32>
      %350 = vector.broadcast %346 : f32 to vector<1x256xf32>
      %351 = arith.mulf %350, %344 : vector<1x256xf32>
      %352 = arith.addf %343, %351 : vector<1x256xf32>
      %c0_95 = arith.constant 0 : index
      %c52 = arith.constant 52 : index
      %353 = vector.load %arg9[%c0_95, %c52] : memref<2x358xf32, #tpu.memory_space<vmem>>, vector<1x256xf32>
      %cst_96 = arith.constant 0.000000e+00 : f32
      %354 = vector.broadcast %cst_96 : f32 to vector<1x256xf32>
      %355 = arith.select %67, %353, %354 : vector<1x256xi1>, vector<1x256xf32>
      %c25 = arith.constant 25 : index
      %356 = memref.load %arg2[%c25] : memref<196xf32, #tpu.memory_space<smem>>
      %c123 = arith.constant 123 : index
      %357 = memref.load %arg2[%c123] : memref<196xf32, #tpu.memory_space<smem>>
      %358 = vector.broadcast %356 : f32 to vector<1x256xf32>
      %359 = arith.mulf %358, %355 : vector<1x256xf32>
      %360 = arith.addf %349, %359 : vector<1x256xf32>
      %361 = vector.broadcast %357 : f32 to vector<1x256xf32>
      %362 = arith.mulf %361, %355 : vector<1x256xf32>
      %363 = arith.addf %352, %362 : vector<1x256xf32>
      %c0_97 = arith.constant 0 : index
      %c53 = arith.constant 53 : index
      %364 = vector.load %arg9[%c0_97, %c53] : memref<2x358xf32, #tpu.memory_space<vmem>>, vector<1x256xf32>
      %cst_98 = arith.constant 0.000000e+00 : f32
      %365 = vector.broadcast %cst_98 : f32 to vector<1x256xf32>
      %366 = arith.select %72, %364, %365 : vector<1x256xi1>, vector<1x256xf32>
      %c26 = arith.constant 26 : index
      %367 = memref.load %arg2[%c26] : memref<196xf32, #tpu.memory_space<smem>>
      %c124 = arith.constant 124 : index
      %368 = memref.load %arg2[%c124] : memref<196xf32, #tpu.memory_space<smem>>
      %369 = vector.broadcast %367 : f32 to vector<1x256xf32>
      %370 = arith.mulf %369, %366 : vector<1x256xf32>
      %371 = arith.addf %360, %370 : vector<1x256xf32>
      %372 = vector.broadcast %368 : f32 to vector<1x256xf32>
      %373 = arith.mulf %372, %366 : vector<1x256xf32>
      %374 = arith.addf %363, %373 : vector<1x256xf32>
      %c0_99 = arith.constant 0 : index
      %c54 = arith.constant 54 : index
      %375 = vector.load %arg9[%c0_99, %c54] : memref<2x358xf32, #tpu.memory_space<vmem>>, vector<1x256xf32>
      %cst_100 = arith.constant 0.000000e+00 : f32
      %376 = vector.broadcast %cst_100 : f32 to vector<1x256xf32>
      %377 = arith.select %77, %375, %376 : vector<1x256xi1>, vector<1x256xf32>
      %c27 = arith.constant 27 : index
      %378 = memref.load %arg2[%c27] : memref<196xf32, #tpu.memory_space<smem>>
      %c125 = arith.constant 125 : index
      %379 = memref.load %arg2[%c125] : memref<196xf32, #tpu.memory_space<smem>>
      %380 = vector.broadcast %378 : f32 to vector<1x256xf32>
      %381 = arith.mulf %380, %377 : vector<1x256xf32>
      %382 = arith.addf %371, %381 : vector<1x256xf32>
      %383 = vector.broadcast %379 : f32 to vector<1x256xf32>
      %384 = arith.mulf %383, %377 : vector<1x256xf32>
      %385 = arith.addf %374, %384 : vector<1x256xf32>
      %c0_101 = arith.constant 0 : index
      %c64 = arith.constant 64 : index
      %386 = vector.load %arg9[%c0_101, %c64] : memref<2x358xf32, #tpu.memory_space<vmem>>, vector<1x256xf32>
      %cst_102 = arith.constant 0.000000e+00 : f32
      %387 = vector.broadcast %cst_102 : f32 to vector<1x256xf32>
      %388 = arith.select %52, %386, %387 : vector<1x256xi1>, vector<1x256xf32>
      %c28 = arith.constant 28 : index
      %389 = memref.load %arg2[%c28] : memref<196xf32, #tpu.memory_space<smem>>
      %c126 = arith.constant 126 : index
      %390 = memref.load %arg2[%c126] : memref<196xf32, #tpu.memory_space<smem>>
      %391 = vector.broadcast %389 : f32 to vector<1x256xf32>
      %392 = arith.mulf %391, %388 : vector<1x256xf32>
      %393 = arith.addf %382, %392 : vector<1x256xf32>
      %394 = vector.broadcast %390 : f32 to vector<1x256xf32>
      %395 = arith.mulf %394, %388 : vector<1x256xf32>
      %396 = arith.addf %385, %395 : vector<1x256xf32>
      %c0_103 = arith.constant 0 : index
      %c65 = arith.constant 65 : index
      %397 = vector.load %arg9[%c0_103, %c65] : memref<2x358xf32, #tpu.memory_space<vmem>>, vector<1x256xf32>
      %cst_104 = arith.constant 0.000000e+00 : f32
      %398 = vector.broadcast %cst_104 : f32 to vector<1x256xf32>
      %399 = arith.select %57, %397, %398 : vector<1x256xi1>, vector<1x256xf32>
      %c29 = arith.constant 29 : index
      %400 = memref.load %arg2[%c29] : memref<196xf32, #tpu.memory_space<smem>>
      %c127 = arith.constant 127 : index
      %401 = memref.load %arg2[%c127] : memref<196xf32, #tpu.memory_space<smem>>
      %402 = vector.broadcast %400 : f32 to vector<1x256xf32>
      %403 = arith.mulf %402, %399 : vector<1x256xf32>
      %404 = arith.addf %393, %403 : vector<1x256xf32>
      %405 = vector.broadcast %401 : f32 to vector<1x256xf32>
      %406 = arith.mulf %405, %399 : vector<1x256xf32>
      %407 = arith.addf %396, %406 : vector<1x256xf32>
      %c0_105 = arith.constant 0 : index
      %c66 = arith.constant 66 : index
      %408 = vector.load %arg9[%c0_105, %c66] : memref<2x358xf32, #tpu.memory_space<vmem>>, vector<1x256xf32>
      %cst_106 = arith.constant 0.000000e+00 : f32
      %409 = vector.broadcast %cst_106 : f32 to vector<1x256xf32>
      %410 = arith.select %62, %408, %409 : vector<1x256xi1>, vector<1x256xf32>
      %c30 = arith.constant 30 : index
      %411 = memref.load %arg2[%c30] : memref<196xf32, #tpu.memory_space<smem>>
      %c128 = arith.constant 128 : index
      %412 = memref.load %arg2[%c128] : memref<196xf32, #tpu.memory_space<smem>>
      %413 = vector.broadcast %411 : f32 to vector<1x256xf32>
      %414 = arith.mulf %413, %410 : vector<1x256xf32>
      %415 = arith.addf %404, %414 : vector<1x256xf32>
      %416 = vector.broadcast %412 : f32 to vector<1x256xf32>
      %417 = arith.mulf %416, %410 : vector<1x256xf32>
      %418 = arith.addf %407, %417 : vector<1x256xf32>
      %c0_107 = arith.constant 0 : index
      %c67 = arith.constant 67 : index
      %419 = vector.load %arg9[%c0_107, %c67] : memref<2x358xf32, #tpu.memory_space<vmem>>, vector<1x256xf32>
      %c31 = arith.constant 31 : index
      %420 = memref.load %arg2[%c31] : memref<196xf32, #tpu.memory_space<smem>>
      %c129 = arith.constant 129 : index
      %421 = memref.load %arg2[%c129] : memref<196xf32, #tpu.memory_space<smem>>
      %422 = vector.broadcast %420 : f32 to vector<1x256xf32>
      %423 = arith.mulf %422, %419 : vector<1x256xf32>
      %424 = arith.addf %415, %423 : vector<1x256xf32>
      %425 = vector.broadcast %421 : f32 to vector<1x256xf32>
      %426 = arith.mulf %425, %419 : vector<1x256xf32>
      %427 = arith.addf %418, %426 : vector<1x256xf32>
      %c0_108 = arith.constant 0 : index
      %c68 = arith.constant 68 : index
      %428 = vector.load %arg9[%c0_108, %c68] : memref<2x358xf32, #tpu.memory_space<vmem>>, vector<1x256xf32>
      %cst_109 = arith.constant 0.000000e+00 : f32
      %429 = vector.broadcast %cst_109 : f32 to vector<1x256xf32>
      %430 = arith.select %67, %428, %429 : vector<1x256xi1>, vector<1x256xf32>
      %c32_110 = arith.constant 32 : index
      %431 = memref.load %arg2[%c32_110] : memref<196xf32, #tpu.memory_space<smem>>
      %c130 = arith.constant 130 : index
      %432 = memref.load %arg2[%c130] : memref<196xf32, #tpu.memory_space<smem>>
      %433 = vector.broadcast %431 : f32 to vector<1x256xf32>
      %434 = arith.mulf %433, %430 : vector<1x256xf32>
      %435 = arith.addf %424, %434 : vector<1x256xf32>
      %436 = vector.broadcast %432 : f32 to vector<1x256xf32>
      %437 = arith.mulf %436, %430 : vector<1x256xf32>
      %438 = arith.addf %427, %437 : vector<1x256xf32>
      %c0_111 = arith.constant 0 : index
      %c69 = arith.constant 69 : index
      %439 = vector.load %arg9[%c0_111, %c69] : memref<2x358xf32, #tpu.memory_space<vmem>>, vector<1x256xf32>
      %cst_112 = arith.constant 0.000000e+00 : f32
      %440 = vector.broadcast %cst_112 : f32 to vector<1x256xf32>
      %441 = arith.select %72, %439, %440 : vector<1x256xi1>, vector<1x256xf32>
      %c33_113 = arith.constant 33 : index
      %442 = memref.load %arg2[%c33_113] : memref<196xf32, #tpu.memory_space<smem>>
      %c131 = arith.constant 131 : index
      %443 = memref.load %arg2[%c131] : memref<196xf32, #tpu.memory_space<smem>>
      %444 = vector.broadcast %442 : f32 to vector<1x256xf32>
      %445 = arith.mulf %444, %441 : vector<1x256xf32>
      %446 = arith.addf %435, %445 : vector<1x256xf32>
      %447 = vector.broadcast %443 : f32 to vector<1x256xf32>
      %448 = arith.mulf %447, %441 : vector<1x256xf32>
      %449 = arith.addf %438, %448 : vector<1x256xf32>
      %c0_114 = arith.constant 0 : index
      %c70 = arith.constant 70 : index
      %450 = vector.load %arg9[%c0_114, %c70] : memref<2x358xf32, #tpu.memory_space<vmem>>, vector<1x256xf32>
      %cst_115 = arith.constant 0.000000e+00 : f32
      %451 = vector.broadcast %cst_115 : f32 to vector<1x256xf32>
      %452 = arith.select %77, %450, %451 : vector<1x256xi1>, vector<1x256xf32>
      %c34_116 = arith.constant 34 : index
      %453 = memref.load %arg2[%c34_116] : memref<196xf32, #tpu.memory_space<smem>>
      %c132 = arith.constant 132 : index
      %454 = memref.load %arg2[%c132] : memref<196xf32, #tpu.memory_space<smem>>
      %455 = vector.broadcast %453 : f32 to vector<1x256xf32>
      %456 = arith.mulf %455, %452 : vector<1x256xf32>
      %457 = arith.addf %446, %456 : vector<1x256xf32>
      %458 = vector.broadcast %454 : f32 to vector<1x256xf32>
      %459 = arith.mulf %458, %452 : vector<1x256xf32>
      %460 = arith.addf %449, %459 : vector<1x256xf32>
      %c0_117 = arith.constant 0 : index
      %c80 = arith.constant 80 : index
      %461 = vector.load %arg9[%c0_117, %c80] : memref<2x358xf32, #tpu.memory_space<vmem>>, vector<1x256xf32>
      %cst_118 = arith.constant 0.000000e+00 : f32
      %462 = vector.broadcast %cst_118 : f32 to vector<1x256xf32>
      %463 = arith.select %52, %461, %462 : vector<1x256xi1>, vector<1x256xf32>
      %c35_119 = arith.constant 35 : index
      %464 = memref.load %arg2[%c35_119] : memref<196xf32, #tpu.memory_space<smem>>
      %c133 = arith.constant 133 : index
      %465 = memref.load %arg2[%c133] : memref<196xf32, #tpu.memory_space<smem>>
      %466 = vector.broadcast %464 : f32 to vector<1x256xf32>
      %467 = arith.mulf %466, %463 : vector<1x256xf32>
      %468 = arith.addf %457, %467 : vector<1x256xf32>
      %469 = vector.broadcast %465 : f32 to vector<1x256xf32>
      %470 = arith.mulf %469, %463 : vector<1x256xf32>
      %471 = arith.addf %460, %470 : vector<1x256xf32>
      %c0_120 = arith.constant 0 : index
      %c81 = arith.constant 81 : index
      %472 = vector.load %arg9[%c0_120, %c81] : memref<2x358xf32, #tpu.memory_space<vmem>>, vector<1x256xf32>
      %cst_121 = arith.constant 0.000000e+00 : f32
      %473 = vector.broadcast %cst_121 : f32 to vector<1x256xf32>
      %474 = arith.select %57, %472, %473 : vector<1x256xi1>, vector<1x256xf32>
      %c36_122 = arith.constant 36 : index
      %475 = memref.load %arg2[%c36_122] : memref<196xf32, #tpu.memory_space<smem>>
      %c134 = arith.constant 134 : index
      %476 = memref.load %arg2[%c134] : memref<196xf32, #tpu.memory_space<smem>>
      %477 = vector.broadcast %475 : f32 to vector<1x256xf32>
      %478 = arith.mulf %477, %474 : vector<1x256xf32>
      %479 = arith.addf %468, %478 : vector<1x256xf32>
      %480 = vector.broadcast %476 : f32 to vector<1x256xf32>
      %481 = arith.mulf %480, %474 : vector<1x256xf32>
      %482 = arith.addf %471, %481 : vector<1x256xf32>
      %c0_123 = arith.constant 0 : index
      %c82 = arith.constant 82 : index
      %483 = vector.load %arg9[%c0_123, %c82] : memref<2x358xf32, #tpu.memory_space<vmem>>, vector<1x256xf32>
      %cst_124 = arith.constant 0.000000e+00 : f32
      %484 = vector.broadcast %cst_124 : f32 to vector<1x256xf32>
      %485 = arith.select %62, %483, %484 : vector<1x256xi1>, vector<1x256xf32>
      %c37_125 = arith.constant 37 : index
      %486 = memref.load %arg2[%c37_125] : memref<196xf32, #tpu.memory_space<smem>>
      %c135 = arith.constant 135 : index
      %487 = memref.load %arg2[%c135] : memref<196xf32, #tpu.memory_space<smem>>
      %488 = vector.broadcast %486 : f32 to vector<1x256xf32>
      %489 = arith.mulf %488, %485 : vector<1x256xf32>
      %490 = arith.addf %479, %489 : vector<1x256xf32>
      %491 = vector.broadcast %487 : f32 to vector<1x256xf32>
      %492 = arith.mulf %491, %485 : vector<1x256xf32>
      %493 = arith.addf %482, %492 : vector<1x256xf32>
      %c0_126 = arith.constant 0 : index
      %c83 = arith.constant 83 : index
      %494 = vector.load %arg9[%c0_126, %c83] : memref<2x358xf32, #tpu.memory_space<vmem>>, vector<1x256xf32>
      %c38_127 = arith.constant 38 : index
      %495 = memref.load %arg2[%c38_127] : memref<196xf32, #tpu.memory_space<smem>>
      %c136 = arith.constant 136 : index
      %496 = memref.load %arg2[%c136] : memref<196xf32, #tpu.memory_space<smem>>
      %497 = vector.broadcast %495 : f32 to vector<1x256xf32>
      %498 = arith.mulf %497, %494 : vector<1x256xf32>
      %499 = arith.addf %490, %498 : vector<1x256xf32>
      %500 = vector.broadcast %496 : f32 to vector<1x256xf32>
      %501 = arith.mulf %500, %494 : vector<1x256xf32>
      %502 = arith.addf %493, %501 : vector<1x256xf32>
      %c0_128 = arith.constant 0 : index
      %c84 = arith.constant 84 : index
      %503 = vector.load %arg9[%c0_128, %c84] : memref<2x358xf32, #tpu.memory_space<vmem>>, vector<1x256xf32>
      %cst_129 = arith.constant 0.000000e+00 : f32
      %504 = vector.broadcast %cst_129 : f32 to vector<1x256xf32>
      %505 = arith.select %67, %503, %504 : vector<1x256xi1>, vector<1x256xf32>
      %c39 = arith.constant 39 : index
      %506 = memref.load %arg2[%c39] : memref<196xf32, #tpu.memory_space<smem>>
      %c137 = arith.constant 137 : index
      %507 = memref.load %arg2[%c137] : memref<196xf32, #tpu.memory_space<smem>>
      %508 = vector.broadcast %506 : f32 to vector<1x256xf32>
      %509 = arith.mulf %508, %505 : vector<1x256xf32>
      %510 = arith.addf %499, %509 : vector<1x256xf32>
      %511 = vector.broadcast %507 : f32 to vector<1x256xf32>
      %512 = arith.mulf %511, %505 : vector<1x256xf32>
      %513 = arith.addf %502, %512 : vector<1x256xf32>
      %c0_130 = arith.constant 0 : index
      %c85 = arith.constant 85 : index
      %514 = vector.load %arg9[%c0_130, %c85] : memref<2x358xf32, #tpu.memory_space<vmem>>, vector<1x256xf32>
      %cst_131 = arith.constant 0.000000e+00 : f32
      %515 = vector.broadcast %cst_131 : f32 to vector<1x256xf32>
      %516 = arith.select %72, %514, %515 : vector<1x256xi1>, vector<1x256xf32>
      %c40 = arith.constant 40 : index
      %517 = memref.load %arg2[%c40] : memref<196xf32, #tpu.memory_space<smem>>
      %c138 = arith.constant 138 : index
      %518 = memref.load %arg2[%c138] : memref<196xf32, #tpu.memory_space<smem>>
      %519 = vector.broadcast %517 : f32 to vector<1x256xf32>
      %520 = arith.mulf %519, %516 : vector<1x256xf32>
      %521 = arith.addf %510, %520 : vector<1x256xf32>
      %522 = vector.broadcast %518 : f32 to vector<1x256xf32>
      %523 = arith.mulf %522, %516 : vector<1x256xf32>
      %524 = arith.addf %513, %523 : vector<1x256xf32>
      %c0_132 = arith.constant 0 : index
      %c86 = arith.constant 86 : index
      %525 = vector.load %arg9[%c0_132, %c86] : memref<2x358xf32, #tpu.memory_space<vmem>>, vector<1x256xf32>
      %cst_133 = arith.constant 0.000000e+00 : f32
      %526 = vector.broadcast %cst_133 : f32 to vector<1x256xf32>
      %527 = arith.select %77, %525, %526 : vector<1x256xi1>, vector<1x256xf32>
      %c41 = arith.constant 41 : index
      %528 = memref.load %arg2[%c41] : memref<196xf32, #tpu.memory_space<smem>>
      %c139 = arith.constant 139 : index
      %529 = memref.load %arg2[%c139] : memref<196xf32, #tpu.memory_space<smem>>
      %530 = vector.broadcast %528 : f32 to vector<1x256xf32>
      %531 = arith.mulf %530, %527 : vector<1x256xf32>
      %532 = arith.addf %521, %531 : vector<1x256xf32>
      %533 = vector.broadcast %529 : f32 to vector<1x256xf32>
      %534 = arith.mulf %533, %527 : vector<1x256xf32>
      %535 = arith.addf %524, %534 : vector<1x256xf32>
      %c0_134 = arith.constant 0 : index
      %c96 = arith.constant 96 : index
      %536 = vector.load %arg9[%c0_134, %c96] : memref<2x358xf32, #tpu.memory_space<vmem>>, vector<1x256xf32>
      %cst_135 = arith.constant 0.000000e+00 : f32
      %537 = vector.broadcast %cst_135 : f32 to vector<1x256xf32>
      %538 = arith.select %52, %536, %537 : vector<1x256xi1>, vector<1x256xf32>
      %c42 = arith.constant 42 : index
      %539 = memref.load %arg2[%c42] : memref<196xf32, #tpu.memory_space<smem>>
      %c140 = arith.constant 140 : index
      %540 = memref.load %arg2[%c140] : memref<196xf32, #tpu.memory_space<smem>>
      %541 = vector.broadcast %539 : f32 to vector<1x256xf32>
      %542 = arith.mulf %541, %538 : vector<1x256xf32>
      %543 = arith.addf %532, %542 : vector<1x256xf32>
      %544 = vector.broadcast %540 : f32 to vector<1x256xf32>
      %545 = arith.mulf %544, %538 : vector<1x256xf32>
      %546 = arith.addf %535, %545 : vector<1x256xf32>
      %c0_136 = arith.constant 0 : index
      %c97 = arith.constant 97 : index
      %547 = vector.load %arg9[%c0_136, %c97] : memref<2x358xf32, #tpu.memory_space<vmem>>, vector<1x256xf32>
      %cst_137 = arith.constant 0.000000e+00 : f32
      %548 = vector.broadcast %cst_137 : f32 to vector<1x256xf32>
      %549 = arith.select %57, %547, %548 : vector<1x256xi1>, vector<1x256xf32>
      %c43 = arith.constant 43 : index
      %550 = memref.load %arg2[%c43] : memref<196xf32, #tpu.memory_space<smem>>
      %c141 = arith.constant 141 : index
      %551 = memref.load %arg2[%c141] : memref<196xf32, #tpu.memory_space<smem>>
      %552 = vector.broadcast %550 : f32 to vector<1x256xf32>
      %553 = arith.mulf %552, %549 : vector<1x256xf32>
      %554 = arith.addf %543, %553 : vector<1x256xf32>
      %555 = vector.broadcast %551 : f32 to vector<1x256xf32>
      %556 = arith.mulf %555, %549 : vector<1x256xf32>
      %557 = arith.addf %546, %556 : vector<1x256xf32>
      %c0_138 = arith.constant 0 : index
      %c98_139 = arith.constant 98 : index
      %558 = vector.load %arg9[%c0_138, %c98_139] : memref<2x358xf32, #tpu.memory_space<vmem>>, vector<1x256xf32>
      %cst_140 = arith.constant 0.000000e+00 : f32
      %559 = vector.broadcast %cst_140 : f32 to vector<1x256xf32>
      %560 = arith.select %62, %558, %559 : vector<1x256xi1>, vector<1x256xf32>
      %c44 = arith.constant 44 : index
      %561 = memref.load %arg2[%c44] : memref<196xf32, #tpu.memory_space<smem>>
      %c142 = arith.constant 142 : index
      %562 = memref.load %arg2[%c142] : memref<196xf32, #tpu.memory_space<smem>>
      %563 = vector.broadcast %561 : f32 to vector<1x256xf32>
      %564 = arith.mulf %563, %560 : vector<1x256xf32>
      %565 = arith.addf %554, %564 : vector<1x256xf32>
      %566 = vector.broadcast %562 : f32 to vector<1x256xf32>
      %567 = arith.mulf %566, %560 : vector<1x256xf32>
      %568 = arith.addf %557, %567 : vector<1x256xf32>
      %c0_141 = arith.constant 0 : index
      %c99_142 = arith.constant 99 : index
      %569 = vector.load %arg9[%c0_141, %c99_142] : memref<2x358xf32, #tpu.memory_space<vmem>>, vector<1x256xf32>
      %c45 = arith.constant 45 : index
      %570 = memref.load %arg2[%c45] : memref<196xf32, #tpu.memory_space<smem>>
      %c143 = arith.constant 143 : index
      %571 = memref.load %arg2[%c143] : memref<196xf32, #tpu.memory_space<smem>>
      %572 = vector.broadcast %570 : f32 to vector<1x256xf32>
      %573 = arith.mulf %572, %569 : vector<1x256xf32>
      %574 = arith.addf %565, %573 : vector<1x256xf32>
      %575 = vector.broadcast %571 : f32 to vector<1x256xf32>
      %576 = arith.mulf %575, %569 : vector<1x256xf32>
      %577 = arith.addf %568, %576 : vector<1x256xf32>
      %c0_143 = arith.constant 0 : index
      %c100_144 = arith.constant 100 : index
      %578 = vector.load %arg9[%c0_143, %c100_144] : memref<2x358xf32, #tpu.memory_space<vmem>>, vector<1x256xf32>
      %cst_145 = arith.constant 0.000000e+00 : f32
      %579 = vector.broadcast %cst_145 : f32 to vector<1x256xf32>
      %580 = arith.select %67, %578, %579 : vector<1x256xi1>, vector<1x256xf32>
      %c46 = arith.constant 46 : index
      %581 = memref.load %arg2[%c46] : memref<196xf32, #tpu.memory_space<smem>>
      %c144 = arith.constant 144 : index
      %582 = memref.load %arg2[%c144] : memref<196xf32, #tpu.memory_space<smem>>
      %583 = vector.broadcast %581 : f32 to vector<1x256xf32>
      %584 = arith.mulf %583, %580 : vector<1x256xf32>
      %585 = arith.addf %574, %584 : vector<1x256xf32>
      %586 = vector.broadcast %582 : f32 to vector<1x256xf32>
      %587 = arith.mulf %586, %580 : vector<1x256xf32>
      %588 = arith.addf %577, %587 : vector<1x256xf32>
      %c0_146 = arith.constant 0 : index
      %c101_147 = arith.constant 101 : index
      %589 = vector.load %arg9[%c0_146, %c101_147] : memref<2x358xf32, #tpu.memory_space<vmem>>, vector<1x256xf32>
      %cst_148 = arith.constant 0.000000e+00 : f32
      %590 = vector.broadcast %cst_148 : f32 to vector<1x256xf32>
      %591 = arith.select %72, %589, %590 : vector<1x256xi1>, vector<1x256xf32>
      %c47 = arith.constant 47 : index
      %592 = memref.load %arg2[%c47] : memref<196xf32, #tpu.memory_space<smem>>
      %c145 = arith.constant 145 : index
      %593 = memref.load %arg2[%c145] : memref<196xf32, #tpu.memory_space<smem>>
      %594 = vector.broadcast %592 : f32 to vector<1x256xf32>
      %595 = arith.mulf %594, %591 : vector<1x256xf32>
      %596 = arith.addf %585, %595 : vector<1x256xf32>
      %597 = vector.broadcast %593 : f32 to vector<1x256xf32>
      %598 = arith.mulf %597, %591 : vector<1x256xf32>
      %599 = arith.addf %588, %598 : vector<1x256xf32>
      %c0_149 = arith.constant 0 : index
      %c102_150 = arith.constant 102 : index
      %600 = vector.load %arg9[%c0_149, %c102_150] : memref<2x358xf32, #tpu.memory_space<vmem>>, vector<1x256xf32>
      %cst_151 = arith.constant 0.000000e+00 : f32
      %601 = vector.broadcast %cst_151 : f32 to vector<1x256xf32>
      %602 = arith.select %77, %600, %601 : vector<1x256xi1>, vector<1x256xf32>
      %c48_152 = arith.constant 48 : index
      %603 = memref.load %arg2[%c48_152] : memref<196xf32, #tpu.memory_space<smem>>
      %c146 = arith.constant 146 : index
      %604 = memref.load %arg2[%c146] : memref<196xf32, #tpu.memory_space<smem>>
      %605 = vector.broadcast %603 : f32 to vector<1x256xf32>
      %606 = arith.mulf %605, %602 : vector<1x256xf32>
      %607 = arith.addf %596, %606 : vector<1x256xf32>
      %608 = vector.broadcast %604 : f32 to vector<1x256xf32>
      %609 = arith.mulf %608, %602 : vector<1x256xf32>
      %610 = arith.addf %599, %609 : vector<1x256xf32>
      %c1_153 = arith.constant 1 : index
      %c0_154 = arith.constant 0 : index
      %611 = vector.load %arg9[%c1_153, %c0_154] : memref<2x358xf32, #tpu.memory_space<vmem>>, vector<1x256xf32>
      %cst_155 = arith.constant 0.000000e+00 : f32
      %612 = vector.broadcast %cst_155 : f32 to vector<1x256xf32>
      %613 = arith.select %52, %611, %612 : vector<1x256xi1>, vector<1x256xf32>
      %c49_156 = arith.constant 49 : index
      %614 = memref.load %arg2[%c49_156] : memref<196xf32, #tpu.memory_space<smem>>
      %c147 = arith.constant 147 : index
      %615 = memref.load %arg2[%c147] : memref<196xf32, #tpu.memory_space<smem>>
      %616 = vector.broadcast %614 : f32 to vector<1x256xf32>
      %617 = arith.mulf %616, %613 : vector<1x256xf32>
      %618 = arith.addf %607, %617 : vector<1x256xf32>
      %619 = vector.broadcast %615 : f32 to vector<1x256xf32>
      %620 = arith.mulf %619, %613 : vector<1x256xf32>
      %621 = arith.addf %610, %620 : vector<1x256xf32>
      %c1_157 = arith.constant 1 : index
      %c1_158 = arith.constant 1 : index
      %622 = vector.load %arg9[%c1_157, %c1_158] : memref<2x358xf32, #tpu.memory_space<vmem>>, vector<1x256xf32>
      %cst_159 = arith.constant 0.000000e+00 : f32
      %623 = vector.broadcast %cst_159 : f32 to vector<1x256xf32>
      %624 = arith.select %57, %622, %623 : vector<1x256xi1>, vector<1x256xf32>
      %c50_160 = arith.constant 50 : index
      %625 = memref.load %arg2[%c50_160] : memref<196xf32, #tpu.memory_space<smem>>
      %c148 = arith.constant 148 : index
      %626 = memref.load %arg2[%c148] : memref<196xf32, #tpu.memory_space<smem>>
      %627 = vector.broadcast %625 : f32 to vector<1x256xf32>
      %628 = arith.mulf %627, %624 : vector<1x256xf32>
      %629 = arith.addf %618, %628 : vector<1x256xf32>
      %630 = vector.broadcast %626 : f32 to vector<1x256xf32>
      %631 = arith.mulf %630, %624 : vector<1x256xf32>
      %632 = arith.addf %621, %631 : vector<1x256xf32>
      %c1_161 = arith.constant 1 : index
      %c2_162 = arith.constant 2 : index
      %633 = vector.load %arg9[%c1_161, %c2_162] : memref<2x358xf32, #tpu.memory_space<vmem>>, vector<1x256xf32>
      %cst_163 = arith.constant 0.000000e+00 : f32
      %634 = vector.broadcast %cst_163 : f32 to vector<1x256xf32>
      %635 = arith.select %62, %633, %634 : vector<1x256xi1>, vector<1x256xf32>
      %c51_164 = arith.constant 51 : index
      %636 = memref.load %arg2[%c51_164] : memref<196xf32, #tpu.memory_space<smem>>
      %c149 = arith.constant 149 : index
      %637 = memref.load %arg2[%c149] : memref<196xf32, #tpu.memory_space<smem>>
      %638 = vector.broadcast %636 : f32 to vector<1x256xf32>
      %639 = arith.mulf %638, %635 : vector<1x256xf32>
      %640 = arith.addf %629, %639 : vector<1x256xf32>
      %641 = vector.broadcast %637 : f32 to vector<1x256xf32>
      %642 = arith.mulf %641, %635 : vector<1x256xf32>
      %643 = arith.addf %632, %642 : vector<1x256xf32>
      %c1_165 = arith.constant 1 : index
      %c3_166 = arith.constant 3 : index
      %644 = vector.load %arg9[%c1_165, %c3_166] : memref<2x358xf32, #tpu.memory_space<vmem>>, vector<1x256xf32>
      %c52_167 = arith.constant 52 : index
      %645 = memref.load %arg2[%c52_167] : memref<196xf32, #tpu.memory_space<smem>>
      %c150 = arith.constant 150 : index
      %646 = memref.load %arg2[%c150] : memref<196xf32, #tpu.memory_space<smem>>
      %647 = vector.broadcast %645 : f32 to vector<1x256xf32>
      %648 = arith.mulf %647, %644 : vector<1x256xf32>
      %649 = arith.addf %640, %648 : vector<1x256xf32>
      %650 = vector.broadcast %646 : f32 to vector<1x256xf32>
      %651 = arith.mulf %650, %644 : vector<1x256xf32>
      %652 = arith.addf %643, %651 : vector<1x256xf32>
      %c1_168 = arith.constant 1 : index
      %c4_169 = arith.constant 4 : index
      %653 = vector.load %arg9[%c1_168, %c4_169] : memref<2x358xf32, #tpu.memory_space<vmem>>, vector<1x256xf32>
      %cst_170 = arith.constant 0.000000e+00 : f32
      %654 = vector.broadcast %cst_170 : f32 to vector<1x256xf32>
      %655 = arith.select %67, %653, %654 : vector<1x256xi1>, vector<1x256xf32>
      %c53_171 = arith.constant 53 : index
      %656 = memref.load %arg2[%c53_171] : memref<196xf32, #tpu.memory_space<smem>>
      %c151 = arith.constant 151 : index
      %657 = memref.load %arg2[%c151] : memref<196xf32, #tpu.memory_space<smem>>
      %658 = vector.broadcast %656 : f32 to vector<1x256xf32>
      %659 = arith.mulf %658, %655 : vector<1x256xf32>
      %660 = arith.addf %649, %659 : vector<1x256xf32>
      %661 = vector.broadcast %657 : f32 to vector<1x256xf32>
      %662 = arith.mulf %661, %655 : vector<1x256xf32>
      %663 = arith.addf %652, %662 : vector<1x256xf32>
      %c1_172 = arith.constant 1 : index
      %c5_173 = arith.constant 5 : index
      %664 = vector.load %arg9[%c1_172, %c5_173] : memref<2x358xf32, #tpu.memory_space<vmem>>, vector<1x256xf32>
      %cst_174 = arith.constant 0.000000e+00 : f32
      %665 = vector.broadcast %cst_174 : f32 to vector<1x256xf32>
      %666 = arith.select %72, %664, %665 : vector<1x256xi1>, vector<1x256xf32>
      %c54_175 = arith.constant 54 : index
      %667 = memref.load %arg2[%c54_175] : memref<196xf32, #tpu.memory_space<smem>>
      %c152 = arith.constant 152 : index
      %668 = memref.load %arg2[%c152] : memref<196xf32, #tpu.memory_space<smem>>
      %669 = vector.broadcast %667 : f32 to vector<1x256xf32>
      %670 = arith.mulf %669, %666 : vector<1x256xf32>
      %671 = arith.addf %660, %670 : vector<1x256xf32>
      %672 = vector.broadcast %668 : f32 to vector<1x256xf32>
      %673 = arith.mulf %672, %666 : vector<1x256xf32>
      %674 = arith.addf %663, %673 : vector<1x256xf32>
      %c1_176 = arith.constant 1 : index
      %c6_177 = arith.constant 6 : index
      %675 = vector.load %arg9[%c1_176, %c6_177] : memref<2x358xf32, #tpu.memory_space<vmem>>, vector<1x256xf32>
      %cst_178 = arith.constant 0.000000e+00 : f32
      %676 = vector.broadcast %cst_178 : f32 to vector<1x256xf32>
      %677 = arith.select %77, %675, %676 : vector<1x256xi1>, vector<1x256xf32>
      %c55 = arith.constant 55 : index
      %678 = memref.load %arg2[%c55] : memref<196xf32, #tpu.memory_space<smem>>
      %c153 = arith.constant 153 : index
      %679 = memref.load %arg2[%c153] : memref<196xf32, #tpu.memory_space<smem>>
      %680 = vector.broadcast %678 : f32 to vector<1x256xf32>
      %681 = arith.mulf %680, %677 : vector<1x256xf32>
      %682 = arith.addf %671, %681 : vector<1x256xf32>
      %683 = vector.broadcast %679 : f32 to vector<1x256xf32>
      %684 = arith.mulf %683, %677 : vector<1x256xf32>
      %685 = arith.addf %674, %684 : vector<1x256xf32>
      %c1_179 = arith.constant 1 : index
      %c16_180 = arith.constant 16 : index
      %686 = vector.load %arg9[%c1_179, %c16_180] : memref<2x358xf32, #tpu.memory_space<vmem>>, vector<1x256xf32>
      %cst_181 = arith.constant 0.000000e+00 : f32
      %687 = vector.broadcast %cst_181 : f32 to vector<1x256xf32>
      %688 = arith.select %52, %686, %687 : vector<1x256xi1>, vector<1x256xf32>
      %c56 = arith.constant 56 : index
      %689 = memref.load %arg2[%c56] : memref<196xf32, #tpu.memory_space<smem>>
      %c154 = arith.constant 154 : index
      %690 = memref.load %arg2[%c154] : memref<196xf32, #tpu.memory_space<smem>>
      %691 = vector.broadcast %689 : f32 to vector<1x256xf32>
      %692 = arith.mulf %691, %688 : vector<1x256xf32>
      %693 = arith.addf %682, %692 : vector<1x256xf32>
      %694 = vector.broadcast %690 : f32 to vector<1x256xf32>
      %695 = arith.mulf %694, %688 : vector<1x256xf32>
      %696 = arith.addf %685, %695 : vector<1x256xf32>
      %c1_182 = arith.constant 1 : index
      %c17_183 = arith.constant 17 : index
      %697 = vector.load %arg9[%c1_182, %c17_183] : memref<2x358xf32, #tpu.memory_space<vmem>>, vector<1x256xf32>
      %cst_184 = arith.constant 0.000000e+00 : f32
      %698 = vector.broadcast %cst_184 : f32 to vector<1x256xf32>
      %699 = arith.select %57, %697, %698 : vector<1x256xi1>, vector<1x256xf32>
      %c57 = arith.constant 57 : index
      %700 = memref.load %arg2[%c57] : memref<196xf32, #tpu.memory_space<smem>>
      %c155 = arith.constant 155 : index
      %701 = memref.load %arg2[%c155] : memref<196xf32, #tpu.memory_space<smem>>
      %702 = vector.broadcast %700 : f32 to vector<1x256xf32>
      %703 = arith.mulf %702, %699 : vector<1x256xf32>
      %704 = arith.addf %693, %703 : vector<1x256xf32>
      %705 = vector.broadcast %701 : f32 to vector<1x256xf32>
      %706 = arith.mulf %705, %699 : vector<1x256xf32>
      %707 = arith.addf %696, %706 : vector<1x256xf32>
      %c1_185 = arith.constant 1 : index
      %c18_186 = arith.constant 18 : index
      %708 = vector.load %arg9[%c1_185, %c18_186] : memref<2x358xf32, #tpu.memory_space<vmem>>, vector<1x256xf32>
      %cst_187 = arith.constant 0.000000e+00 : f32
      %709 = vector.broadcast %cst_187 : f32 to vector<1x256xf32>
      %710 = arith.select %62, %708, %709 : vector<1x256xi1>, vector<1x256xf32>
      %c58 = arith.constant 58 : index
      %711 = memref.load %arg2[%c58] : memref<196xf32, #tpu.memory_space<smem>>
      %c156 = arith.constant 156 : index
      %712 = memref.load %arg2[%c156] : memref<196xf32, #tpu.memory_space<smem>>
      %713 = vector.broadcast %711 : f32 to vector<1x256xf32>
      %714 = arith.mulf %713, %710 : vector<1x256xf32>
      %715 = arith.addf %704, %714 : vector<1x256xf32>
      %716 = vector.broadcast %712 : f32 to vector<1x256xf32>
      %717 = arith.mulf %716, %710 : vector<1x256xf32>
      %718 = arith.addf %707, %717 : vector<1x256xf32>
      %c1_188 = arith.constant 1 : index
      %c19_189 = arith.constant 19 : index
      %719 = vector.load %arg9[%c1_188, %c19_189] : memref<2x358xf32, #tpu.memory_space<vmem>>, vector<1x256xf32>
      %c59 = arith.constant 59 : index
      %720 = memref.load %arg2[%c59] : memref<196xf32, #tpu.memory_space<smem>>
      %c157 = arith.constant 157 : index
      %721 = memref.load %arg2[%c157] : memref<196xf32, #tpu.memory_space<smem>>
      %722 = vector.broadcast %720 : f32 to vector<1x256xf32>
      %723 = arith.mulf %722, %719 : vector<1x256xf32>
      %724 = arith.addf %715, %723 : vector<1x256xf32>
      %725 = vector.broadcast %721 : f32 to vector<1x256xf32>
      %726 = arith.mulf %725, %719 : vector<1x256xf32>
      %727 = arith.addf %718, %726 : vector<1x256xf32>
      %c1_190 = arith.constant 1 : index
      %c20_191 = arith.constant 20 : index
      %728 = vector.load %arg9[%c1_190, %c20_191] : memref<2x358xf32, #tpu.memory_space<vmem>>, vector<1x256xf32>
      %cst_192 = arith.constant 0.000000e+00 : f32
      %729 = vector.broadcast %cst_192 : f32 to vector<1x256xf32>
      %730 = arith.select %67, %728, %729 : vector<1x256xi1>, vector<1x256xf32>
      %c60 = arith.constant 60 : index
      %731 = memref.load %arg2[%c60] : memref<196xf32, #tpu.memory_space<smem>>
      %c158 = arith.constant 158 : index
      %732 = memref.load %arg2[%c158] : memref<196xf32, #tpu.memory_space<smem>>
      %733 = vector.broadcast %731 : f32 to vector<1x256xf32>
      %734 = arith.mulf %733, %730 : vector<1x256xf32>
      %735 = arith.addf %724, %734 : vector<1x256xf32>
      %736 = vector.broadcast %732 : f32 to vector<1x256xf32>
      %737 = arith.mulf %736, %730 : vector<1x256xf32>
      %738 = arith.addf %727, %737 : vector<1x256xf32>
      %c1_193 = arith.constant 1 : index
      %c21_194 = arith.constant 21 : index
      %739 = vector.load %arg9[%c1_193, %c21_194] : memref<2x358xf32, #tpu.memory_space<vmem>>, vector<1x256xf32>
      %cst_195 = arith.constant 0.000000e+00 : f32
      %740 = vector.broadcast %cst_195 : f32 to vector<1x256xf32>
      %741 = arith.select %72, %739, %740 : vector<1x256xi1>, vector<1x256xf32>
      %c61 = arith.constant 61 : index
      %742 = memref.load %arg2[%c61] : memref<196xf32, #tpu.memory_space<smem>>
      %c159 = arith.constant 159 : index
      %743 = memref.load %arg2[%c159] : memref<196xf32, #tpu.memory_space<smem>>
      %744 = vector.broadcast %742 : f32 to vector<1x256xf32>
      %745 = arith.mulf %744, %741 : vector<1x256xf32>
      %746 = arith.addf %735, %745 : vector<1x256xf32>
      %747 = vector.broadcast %743 : f32 to vector<1x256xf32>
      %748 = arith.mulf %747, %741 : vector<1x256xf32>
      %749 = arith.addf %738, %748 : vector<1x256xf32>
      %c1_196 = arith.constant 1 : index
      %c22_197 = arith.constant 22 : index
      %750 = vector.load %arg9[%c1_196, %c22_197] : memref<2x358xf32, #tpu.memory_space<vmem>>, vector<1x256xf32>
      %cst_198 = arith.constant 0.000000e+00 : f32
      %751 = vector.broadcast %cst_198 : f32 to vector<1x256xf32>
      %752 = arith.select %77, %750, %751 : vector<1x256xi1>, vector<1x256xf32>
      %c62 = arith.constant 62 : index
      %753 = memref.load %arg2[%c62] : memref<196xf32, #tpu.memory_space<smem>>
      %c160 = arith.constant 160 : index
      %754 = memref.load %arg2[%c160] : memref<196xf32, #tpu.memory_space<smem>>
      %755 = vector.broadcast %753 : f32 to vector<1x256xf32>
      %756 = arith.mulf %755, %752 : vector<1x256xf32>
      %757 = arith.addf %746, %756 : vector<1x256xf32>
      %758 = vector.broadcast %754 : f32 to vector<1x256xf32>
      %759 = arith.mulf %758, %752 : vector<1x256xf32>
      %760 = arith.addf %749, %759 : vector<1x256xf32>
      %c1_199 = arith.constant 1 : index
      %c32_200 = arith.constant 32 : index
      %761 = vector.load %arg9[%c1_199, %c32_200] : memref<2x358xf32, #tpu.memory_space<vmem>>, vector<1x256xf32>
      %cst_201 = arith.constant 0.000000e+00 : f32
      %762 = vector.broadcast %cst_201 : f32 to vector<1x256xf32>
      %763 = arith.select %52, %761, %762 : vector<1x256xi1>, vector<1x256xf32>
      %c63 = arith.constant 63 : index
      %764 = memref.load %arg2[%c63] : memref<196xf32, #tpu.memory_space<smem>>
      %c161 = arith.constant 161 : index
      %765 = memref.load %arg2[%c161] : memref<196xf32, #tpu.memory_space<smem>>
      %766 = vector.broadcast %764 : f32 to vector<1x256xf32>
      %767 = arith.mulf %766, %763 : vector<1x256xf32>
      %768 = arith.addf %757, %767 : vector<1x256xf32>
      %769 = vector.broadcast %765 : f32 to vector<1x256xf32>
      %770 = arith.mulf %769, %763 : vector<1x256xf32>
      %771 = arith.addf %760, %770 : vector<1x256xf32>
      %c1_202 = arith.constant 1 : index
      %c33_203 = arith.constant 33 : index
      %772 = vector.load %arg9[%c1_202, %c33_203] : memref<2x358xf32, #tpu.memory_space<vmem>>, vector<1x256xf32>
      %cst_204 = arith.constant 0.000000e+00 : f32
      %773 = vector.broadcast %cst_204 : f32 to vector<1x256xf32>
      %774 = arith.select %57, %772, %773 : vector<1x256xi1>, vector<1x256xf32>
      %c64_205 = arith.constant 64 : index
      %775 = memref.load %arg2[%c64_205] : memref<196xf32, #tpu.memory_space<smem>>
      %c162 = arith.constant 162 : index
      %776 = memref.load %arg2[%c162] : memref<196xf32, #tpu.memory_space<smem>>
      %777 = vector.broadcast %775 : f32 to vector<1x256xf32>
      %778 = arith.mulf %777, %774 : vector<1x256xf32>
      %779 = arith.addf %768, %778 : vector<1x256xf32>
      %780 = vector.broadcast %776 : f32 to vector<1x256xf32>
      %781 = arith.mulf %780, %774 : vector<1x256xf32>
      %782 = arith.addf %771, %781 : vector<1x256xf32>
      %c1_206 = arith.constant 1 : index
      %c34_207 = arith.constant 34 : index
      %783 = vector.load %arg9[%c1_206, %c34_207] : memref<2x358xf32, #tpu.memory_space<vmem>>, vector<1x256xf32>
      %cst_208 = arith.constant 0.000000e+00 : f32
      %784 = vector.broadcast %cst_208 : f32 to vector<1x256xf32>
      %785 = arith.select %62, %783, %784 : vector<1x256xi1>, vector<1x256xf32>
      %c65_209 = arith.constant 65 : index
      %786 = memref.load %arg2[%c65_209] : memref<196xf32, #tpu.memory_space<smem>>
      %c163 = arith.constant 163 : index
      %787 = memref.load %arg2[%c163] : memref<196xf32, #tpu.memory_space<smem>>
      %788 = vector.broadcast %786 : f32 to vector<1x256xf32>
      %789 = arith.mulf %788, %785 : vector<1x256xf32>
      %790 = arith.addf %779, %789 : vector<1x256xf32>
      %791 = vector.broadcast %787 : f32 to vector<1x256xf32>
      %792 = arith.mulf %791, %785 : vector<1x256xf32>
      %793 = arith.addf %782, %792 : vector<1x256xf32>
      %c1_210 = arith.constant 1 : index
      %c35_211 = arith.constant 35 : index
      %794 = vector.load %arg9[%c1_210, %c35_211] : memref<2x358xf32, #tpu.memory_space<vmem>>, vector<1x256xf32>
      %c66_212 = arith.constant 66 : index
      %795 = memref.load %arg2[%c66_212] : memref<196xf32, #tpu.memory_space<smem>>
      %c164 = arith.constant 164 : index
      %796 = memref.load %arg2[%c164] : memref<196xf32, #tpu.memory_space<smem>>
      %797 = vector.broadcast %795 : f32 to vector<1x256xf32>
      %798 = arith.mulf %797, %794 : vector<1x256xf32>
      %799 = arith.addf %790, %798 : vector<1x256xf32>
      %800 = vector.broadcast %796 : f32 to vector<1x256xf32>
      %801 = arith.mulf %800, %794 : vector<1x256xf32>
      %802 = arith.addf %793, %801 : vector<1x256xf32>
      %c1_213 = arith.constant 1 : index
      %c36_214 = arith.constant 36 : index
      %803 = vector.load %arg9[%c1_213, %c36_214] : memref<2x358xf32, #tpu.memory_space<vmem>>, vector<1x256xf32>
      %cst_215 = arith.constant 0.000000e+00 : f32
      %804 = vector.broadcast %cst_215 : f32 to vector<1x256xf32>
      %805 = arith.select %67, %803, %804 : vector<1x256xi1>, vector<1x256xf32>
      %c67_216 = arith.constant 67 : index
      %806 = memref.load %arg2[%c67_216] : memref<196xf32, #tpu.memory_space<smem>>
      %c165 = arith.constant 165 : index
      %807 = memref.load %arg2[%c165] : memref<196xf32, #tpu.memory_space<smem>>
      %808 = vector.broadcast %806 : f32 to vector<1x256xf32>
      %809 = arith.mulf %808, %805 : vector<1x256xf32>
      %810 = arith.addf %799, %809 : vector<1x256xf32>
      %811 = vector.broadcast %807 : f32 to vector<1x256xf32>
      %812 = arith.mulf %811, %805 : vector<1x256xf32>
      %813 = arith.addf %802, %812 : vector<1x256xf32>
      %c1_217 = arith.constant 1 : index
      %c37_218 = arith.constant 37 : index
      %814 = vector.load %arg9[%c1_217, %c37_218] : memref<2x358xf32, #tpu.memory_space<vmem>>, vector<1x256xf32>
      %cst_219 = arith.constant 0.000000e+00 : f32
      %815 = vector.broadcast %cst_219 : f32 to vector<1x256xf32>
      %816 = arith.select %72, %814, %815 : vector<1x256xi1>, vector<1x256xf32>
      %c68_220 = arith.constant 68 : index
      %817 = memref.load %arg2[%c68_220] : memref<196xf32, #tpu.memory_space<smem>>
      %c166 = arith.constant 166 : index
      %818 = memref.load %arg2[%c166] : memref<196xf32, #tpu.memory_space<smem>>
      %819 = vector.broadcast %817 : f32 to vector<1x256xf32>
      %820 = arith.mulf %819, %816 : vector<1x256xf32>
      %821 = arith.addf %810, %820 : vector<1x256xf32>
      %822 = vector.broadcast %818 : f32 to vector<1x256xf32>
      %823 = arith.mulf %822, %816 : vector<1x256xf32>
      %824 = arith.addf %813, %823 : vector<1x256xf32>
      %c1_221 = arith.constant 1 : index
      %c38_222 = arith.constant 38 : index
      %825 = vector.load %arg9[%c1_221, %c38_222] : memref<2x358xf32, #tpu.memory_space<vmem>>, vector<1x256xf32>
      %cst_223 = arith.constant 0.000000e+00 : f32
      %826 = vector.broadcast %cst_223 : f32 to vector<1x256xf32>
      %827 = arith.select %77, %825, %826 : vector<1x256xi1>, vector<1x256xf32>
      %c69_224 = arith.constant 69 : index
      %828 = memref.load %arg2[%c69_224] : memref<196xf32, #tpu.memory_space<smem>>
      %c167 = arith.constant 167 : index
      %829 = memref.load %arg2[%c167] : memref<196xf32, #tpu.memory_space<smem>>
      %830 = vector.broadcast %828 : f32 to vector<1x256xf32>
      %831 = arith.mulf %830, %827 : vector<1x256xf32>
      %832 = arith.addf %821, %831 : vector<1x256xf32>
      %833 = vector.broadcast %829 : f32 to vector<1x256xf32>
      %834 = arith.mulf %833, %827 : vector<1x256xf32>
      %835 = arith.addf %824, %834 : vector<1x256xf32>
      %c1_225 = arith.constant 1 : index
      %c48_226 = arith.constant 48 : index
      %836 = vector.load %arg9[%c1_225, %c48_226] : memref<2x358xf32, #tpu.memory_space<vmem>>, vector<1x256xf32>
      %cst_227 = arith.constant 0.000000e+00 : f32
      %837 = vector.broadcast %cst_227 : f32 to vector<1x256xf32>
      %838 = arith.select %52, %836, %837 : vector<1x256xi1>, vector<1x256xf32>
      %c70_228 = arith.constant 70 : index
      %839 = memref.load %arg2[%c70_228] : memref<196xf32, #tpu.memory_space<smem>>
      %c168 = arith.constant 168 : index
      %840 = memref.load %arg2[%c168] : memref<196xf32, #tpu.memory_space<smem>>
      %841 = vector.broadcast %839 : f32 to vector<1x256xf32>
      %842 = arith.mulf %841, %838 : vector<1x256xf32>
      %843 = arith.addf %832, %842 : vector<1x256xf32>
      %844 = vector.broadcast %840 : f32 to vector<1x256xf32>
      %845 = arith.mulf %844, %838 : vector<1x256xf32>
      %846 = arith.addf %835, %845 : vector<1x256xf32>
      %c1_229 = arith.constant 1 : index
      %c49_230 = arith.constant 49 : index
      %847 = vector.load %arg9[%c1_229, %c49_230] : memref<2x358xf32, #tpu.memory_space<vmem>>, vector<1x256xf32>
      %cst_231 = arith.constant 0.000000e+00 : f32
      %848 = vector.broadcast %cst_231 : f32 to vector<1x256xf32>
      %849 = arith.select %57, %847, %848 : vector<1x256xi1>, vector<1x256xf32>
      %c71 = arith.constant 71 : index
      %850 = memref.load %arg2[%c71] : memref<196xf32, #tpu.memory_space<smem>>
      %c169 = arith.constant 169 : index
      %851 = memref.load %arg2[%c169] : memref<196xf32, #tpu.memory_space<smem>>
      %852 = vector.broadcast %850 : f32 to vector<1x256xf32>
      %853 = arith.mulf %852, %849 : vector<1x256xf32>
      %854 = arith.addf %843, %853 : vector<1x256xf32>
      %855 = vector.broadcast %851 : f32 to vector<1x256xf32>
      %856 = arith.mulf %855, %849 : vector<1x256xf32>
      %857 = arith.addf %846, %856 : vector<1x256xf32>
      %c1_232 = arith.constant 1 : index
      %c50_233 = arith.constant 50 : index
      %858 = vector.load %arg9[%c1_232, %c50_233] : memref<2x358xf32, #tpu.memory_space<vmem>>, vector<1x256xf32>
      %cst_234 = arith.constant 0.000000e+00 : f32
      %859 = vector.broadcast %cst_234 : f32 to vector<1x256xf32>
      %860 = arith.select %62, %858, %859 : vector<1x256xi1>, vector<1x256xf32>
      %c72 = arith.constant 72 : index
      %861 = memref.load %arg2[%c72] : memref<196xf32, #tpu.memory_space<smem>>
      %c170 = arith.constant 170 : index
      %862 = memref.load %arg2[%c170] : memref<196xf32, #tpu.memory_space<smem>>
      %863 = vector.broadcast %861 : f32 to vector<1x256xf32>
      %864 = arith.mulf %863, %860 : vector<1x256xf32>
      %865 = arith.addf %854, %864 : vector<1x256xf32>
      %866 = vector.broadcast %862 : f32 to vector<1x256xf32>
      %867 = arith.mulf %866, %860 : vector<1x256xf32>
      %868 = arith.addf %857, %867 : vector<1x256xf32>
      %c1_235 = arith.constant 1 : index
      %c51_236 = arith.constant 51 : index
      %869 = vector.load %arg9[%c1_235, %c51_236] : memref<2x358xf32, #tpu.memory_space<vmem>>, vector<1x256xf32>
      %c73 = arith.constant 73 : index
      %870 = memref.load %arg2[%c73] : memref<196xf32, #tpu.memory_space<smem>>
      %c171 = arith.constant 171 : index
      %871 = memref.load %arg2[%c171] : memref<196xf32, #tpu.memory_space<smem>>
      %872 = vector.broadcast %870 : f32 to vector<1x256xf32>
      %873 = arith.mulf %872, %869 : vector<1x256xf32>
      %874 = arith.addf %865, %873 : vector<1x256xf32>
      %875 = vector.broadcast %871 : f32 to vector<1x256xf32>
      %876 = arith.mulf %875, %869 : vector<1x256xf32>
      %877 = arith.addf %868, %876 : vector<1x256xf32>
      %c1_237 = arith.constant 1 : index
      %c52_238 = arith.constant 52 : index
      %878 = vector.load %arg9[%c1_237, %c52_238] : memref<2x358xf32, #tpu.memory_space<vmem>>, vector<1x256xf32>
      %cst_239 = arith.constant 0.000000e+00 : f32
      %879 = vector.broadcast %cst_239 : f32 to vector<1x256xf32>
      %880 = arith.select %67, %878, %879 : vector<1x256xi1>, vector<1x256xf32>
      %c74 = arith.constant 74 : index
      %881 = memref.load %arg2[%c74] : memref<196xf32, #tpu.memory_space<smem>>
      %c172 = arith.constant 172 : index
      %882 = memref.load %arg2[%c172] : memref<196xf32, #tpu.memory_space<smem>>
      %883 = vector.broadcast %881 : f32 to vector<1x256xf32>
      %884 = arith.mulf %883, %880 : vector<1x256xf32>
      %885 = arith.addf %874, %884 : vector<1x256xf32>
      %886 = vector.broadcast %882 : f32 to vector<1x256xf32>
      %887 = arith.mulf %886, %880 : vector<1x256xf32>
      %888 = arith.addf %877, %887 : vector<1x256xf32>
      %c1_240 = arith.constant 1 : index
      %c53_241 = arith.constant 53 : index
      %889 = vector.load %arg9[%c1_240, %c53_241] : memref<2x358xf32, #tpu.memory_space<vmem>>, vector<1x256xf32>
      %cst_242 = arith.constant 0.000000e+00 : f32
      %890 = vector.broadcast %cst_242 : f32 to vector<1x256xf32>
      %891 = arith.select %72, %889, %890 : vector<1x256xi1>, vector<1x256xf32>
      %c75 = arith.constant 75 : index
      %892 = memref.load %arg2[%c75] : memref<196xf32, #tpu.memory_space<smem>>
      %c173 = arith.constant 173 : index
      %893 = memref.load %arg2[%c173] : memref<196xf32, #tpu.memory_space<smem>>
      %894 = vector.broadcast %892 : f32 to vector<1x256xf32>
      %895 = arith.mulf %894, %891 : vector<1x256xf32>
      %896 = arith.addf %885, %895 : vector<1x256xf32>
      %897 = vector.broadcast %893 : f32 to vector<1x256xf32>
      %898 = arith.mulf %897, %891 : vector<1x256xf32>
      %899 = arith.addf %888, %898 : vector<1x256xf32>
      %c1_243 = arith.constant 1 : index
      %c54_244 = arith.constant 54 : index
      %900 = vector.load %arg9[%c1_243, %c54_244] : memref<2x358xf32, #tpu.memory_space<vmem>>, vector<1x256xf32>
      %cst_245 = arith.constant 0.000000e+00 : f32
      %901 = vector.broadcast %cst_245 : f32 to vector<1x256xf32>
      %902 = arith.select %77, %900, %901 : vector<1x256xi1>, vector<1x256xf32>
      %c76 = arith.constant 76 : index
      %903 = memref.load %arg2[%c76] : memref<196xf32, #tpu.memory_space<smem>>
      %c174 = arith.constant 174 : index
      %904 = memref.load %arg2[%c174] : memref<196xf32, #tpu.memory_space<smem>>
      %905 = vector.broadcast %903 : f32 to vector<1x256xf32>
      %906 = arith.mulf %905, %902 : vector<1x256xf32>
      %907 = arith.addf %896, %906 : vector<1x256xf32>
      %908 = vector.broadcast %904 : f32 to vector<1x256xf32>
      %909 = arith.mulf %908, %902 : vector<1x256xf32>
      %910 = arith.addf %899, %909 : vector<1x256xf32>
      %c1_246 = arith.constant 1 : index
      %c64_247 = arith.constant 64 : index
      %911 = vector.load %arg9[%c1_246, %c64_247] : memref<2x358xf32, #tpu.memory_space<vmem>>, vector<1x256xf32>
      %cst_248 = arith.constant 0.000000e+00 : f32
      %912 = vector.broadcast %cst_248 : f32 to vector<1x256xf32>
      %913 = arith.select %52, %911, %912 : vector<1x256xi1>, vector<1x256xf32>
      %c77 = arith.constant 77 : index
      %914 = memref.load %arg2[%c77] : memref<196xf32, #tpu.memory_space<smem>>
      %c175 = arith.constant 175 : index
      %915 = memref.load %arg2[%c175] : memref<196xf32, #tpu.memory_space<smem>>
      %916 = vector.broadcast %914 : f32 to vector<1x256xf32>
      %917 = arith.mulf %916, %913 : vector<1x256xf32>
      %918 = arith.addf %907, %917 : vector<1x256xf32>
      %919 = vector.broadcast %915 : f32 to vector<1x256xf32>
      %920 = arith.mulf %919, %913 : vector<1x256xf32>
      %921 = arith.addf %910, %920 : vector<1x256xf32>
      %c1_249 = arith.constant 1 : index
      %c65_250 = arith.constant 65 : index
      %922 = vector.load %arg9[%c1_249, %c65_250] : memref<2x358xf32, #tpu.memory_space<vmem>>, vector<1x256xf32>
      %cst_251 = arith.constant 0.000000e+00 : f32
      %923 = vector.broadcast %cst_251 : f32 to vector<1x256xf32>
      %924 = arith.select %57, %922, %923 : vector<1x256xi1>, vector<1x256xf32>
      %c78 = arith.constant 78 : index
      %925 = memref.load %arg2[%c78] : memref<196xf32, #tpu.memory_space<smem>>
      %c176 = arith.constant 176 : index
      %926 = memref.load %arg2[%c176] : memref<196xf32, #tpu.memory_space<smem>>
      %927 = vector.broadcast %925 : f32 to vector<1x256xf32>
      %928 = arith.mulf %927, %924 : vector<1x256xf32>
      %929 = arith.addf %918, %928 : vector<1x256xf32>
      %930 = vector.broadcast %926 : f32 to vector<1x256xf32>
      %931 = arith.mulf %930, %924 : vector<1x256xf32>
      %932 = arith.addf %921, %931 : vector<1x256xf32>
      %c1_252 = arith.constant 1 : index
      %c66_253 = arith.constant 66 : index
      %933 = vector.load %arg9[%c1_252, %c66_253] : memref<2x358xf32, #tpu.memory_space<vmem>>, vector<1x256xf32>
      %cst_254 = arith.constant 0.000000e+00 : f32
      %934 = vector.broadcast %cst_254 : f32 to vector<1x256xf32>
      %935 = arith.select %62, %933, %934 : vector<1x256xi1>, vector<1x256xf32>
      %c79 = arith.constant 79 : index
      %936 = memref.load %arg2[%c79] : memref<196xf32, #tpu.memory_space<smem>>
      %c177 = arith.constant 177 : index
      %937 = memref.load %arg2[%c177] : memref<196xf32, #tpu.memory_space<smem>>
      %938 = vector.broadcast %936 : f32 to vector<1x256xf32>
      %939 = arith.mulf %938, %935 : vector<1x256xf32>
      %940 = arith.addf %929, %939 : vector<1x256xf32>
      %941 = vector.broadcast %937 : f32 to vector<1x256xf32>
      %942 = arith.mulf %941, %935 : vector<1x256xf32>
      %943 = arith.addf %932, %942 : vector<1x256xf32>
      %c1_255 = arith.constant 1 : index
      %c67_256 = arith.constant 67 : index
      %944 = vector.load %arg9[%c1_255, %c67_256] : memref<2x358xf32, #tpu.memory_space<vmem>>, vector<1x256xf32>
      %c80_257 = arith.constant 80 : index
      %945 = memref.load %arg2[%c80_257] : memref<196xf32, #tpu.memory_space<smem>>
      %c178 = arith.constant 178 : index
      %946 = memref.load %arg2[%c178] : memref<196xf32, #tpu.memory_space<smem>>
      %947 = vector.broadcast %945 : f32 to vector<1x256xf32>
      %948 = arith.mulf %947, %944 : vector<1x256xf32>
      %949 = arith.addf %940, %948 : vector<1x256xf32>
      %950 = vector.broadcast %946 : f32 to vector<1x256xf32>
      %951 = arith.mulf %950, %944 : vector<1x256xf32>
      %952 = arith.addf %943, %951 : vector<1x256xf32>
      %c1_258 = arith.constant 1 : index
      %c68_259 = arith.constant 68 : index
      %953 = vector.load %arg9[%c1_258, %c68_259] : memref<2x358xf32, #tpu.memory_space<vmem>>, vector<1x256xf32>
      %cst_260 = arith.constant 0.000000e+00 : f32
      %954 = vector.broadcast %cst_260 : f32 to vector<1x256xf32>
      %955 = arith.select %67, %953, %954 : vector<1x256xi1>, vector<1x256xf32>
      %c81_261 = arith.constant 81 : index
      %956 = memref.load %arg2[%c81_261] : memref<196xf32, #tpu.memory_space<smem>>
      %c179 = arith.constant 179 : index
      %957 = memref.load %arg2[%c179] : memref<196xf32, #tpu.memory_space<smem>>
      %958 = vector.broadcast %956 : f32 to vector<1x256xf32>
      %959 = arith.mulf %958, %955 : vector<1x256xf32>
      %960 = arith.addf %949, %959 : vector<1x256xf32>
      %961 = vector.broadcast %957 : f32 to vector<1x256xf32>
      %962 = arith.mulf %961, %955 : vector<1x256xf32>
      %963 = arith.addf %952, %962 : vector<1x256xf32>
      %c1_262 = arith.constant 1 : index
      %c69_263 = arith.constant 69 : index
      %964 = vector.load %arg9[%c1_262, %c69_263] : memref<2x358xf32, #tpu.memory_space<vmem>>, vector<1x256xf32>
      %cst_264 = arith.constant 0.000000e+00 : f32
      %965 = vector.broadcast %cst_264 : f32 to vector<1x256xf32>
      %966 = arith.select %72, %964, %965 : vector<1x256xi1>, vector<1x256xf32>
      %c82_265 = arith.constant 82 : index
      %967 = memref.load %arg2[%c82_265] : memref<196xf32, #tpu.memory_space<smem>>
      %c180 = arith.constant 180 : index
      %968 = memref.load %arg2[%c180] : memref<196xf32, #tpu.memory_space<smem>>
      %969 = vector.broadcast %967 : f32 to vector<1x256xf32>
      %970 = arith.mulf %969, %966 : vector<1x256xf32>
      %971 = arith.addf %960, %970 : vector<1x256xf32>
      %972 = vector.broadcast %968 : f32 to vector<1x256xf32>
      %973 = arith.mulf %972, %966 : vector<1x256xf32>
      %974 = arith.addf %963, %973 : vector<1x256xf32>
      %c1_266 = arith.constant 1 : index
      %c70_267 = arith.constant 70 : index
      %975 = vector.load %arg9[%c1_266, %c70_267] : memref<2x358xf32, #tpu.memory_space<vmem>>, vector<1x256xf32>
      %cst_268 = arith.constant 0.000000e+00 : f32
      %976 = vector.broadcast %cst_268 : f32 to vector<1x256xf32>
      %977 = arith.select %77, %975, %976 : vector<1x256xi1>, vector<1x256xf32>
      %c83_269 = arith.constant 83 : index
      %978 = memref.load %arg2[%c83_269] : memref<196xf32, #tpu.memory_space<smem>>
      %c181 = arith.constant 181 : index
      %979 = memref.load %arg2[%c181] : memref<196xf32, #tpu.memory_space<smem>>
      %980 = vector.broadcast %978 : f32 to vector<1x256xf32>
      %981 = arith.mulf %980, %977 : vector<1x256xf32>
      %982 = arith.addf %971, %981 : vector<1x256xf32>
      %983 = vector.broadcast %979 : f32 to vector<1x256xf32>
      %984 = arith.mulf %983, %977 : vector<1x256xf32>
      %985 = arith.addf %974, %984 : vector<1x256xf32>
      %c1_270 = arith.constant 1 : index
      %c80_271 = arith.constant 80 : index
      %986 = vector.load %arg9[%c1_270, %c80_271] : memref<2x358xf32, #tpu.memory_space<vmem>>, vector<1x256xf32>
      %cst_272 = arith.constant 0.000000e+00 : f32
      %987 = vector.broadcast %cst_272 : f32 to vector<1x256xf32>
      %988 = arith.select %52, %986, %987 : vector<1x256xi1>, vector<1x256xf32>
      %c84_273 = arith.constant 84 : index
      %989 = memref.load %arg2[%c84_273] : memref<196xf32, #tpu.memory_space<smem>>
      %c182 = arith.constant 182 : index
      %990 = memref.load %arg2[%c182] : memref<196xf32, #tpu.memory_space<smem>>
      %991 = vector.broadcast %989 : f32 to vector<1x256xf32>
      %992 = arith.mulf %991, %988 : vector<1x256xf32>
      %993 = arith.addf %982, %992 : vector<1x256xf32>
      %994 = vector.broadcast %990 : f32 to vector<1x256xf32>
      %995 = arith.mulf %994, %988 : vector<1x256xf32>
      %996 = arith.addf %985, %995 : vector<1x256xf32>
      %c1_274 = arith.constant 1 : index
      %c81_275 = arith.constant 81 : index
      %997 = vector.load %arg9[%c1_274, %c81_275] : memref<2x358xf32, #tpu.memory_space<vmem>>, vector<1x256xf32>
      %cst_276 = arith.constant 0.000000e+00 : f32
      %998 = vector.broadcast %cst_276 : f32 to vector<1x256xf32>
      %999 = arith.select %57, %997, %998 : vector<1x256xi1>, vector<1x256xf32>
      %c85_277 = arith.constant 85 : index
      %1000 = memref.load %arg2[%c85_277] : memref<196xf32, #tpu.memory_space<smem>>
      %c183 = arith.constant 183 : index
      %1001 = memref.load %arg2[%c183] : memref<196xf32, #tpu.memory_space<smem>>
      %1002 = vector.broadcast %1000 : f32 to vector<1x256xf32>
      %1003 = arith.mulf %1002, %999 : vector<1x256xf32>
      %1004 = arith.addf %993, %1003 : vector<1x256xf32>
      %1005 = vector.broadcast %1001 : f32 to vector<1x256xf32>
      %1006 = arith.mulf %1005, %999 : vector<1x256xf32>
      %1007 = arith.addf %996, %1006 : vector<1x256xf32>
      %c1_278 = arith.constant 1 : index
      %c82_279 = arith.constant 82 : index
      %1008 = vector.load %arg9[%c1_278, %c82_279] : memref<2x358xf32, #tpu.memory_space<vmem>>, vector<1x256xf32>
      %cst_280 = arith.constant 0.000000e+00 : f32
      %1009 = vector.broadcast %cst_280 : f32 to vector<1x256xf32>
      %1010 = arith.select %62, %1008, %1009 : vector<1x256xi1>, vector<1x256xf32>
      %c86_281 = arith.constant 86 : index
      %1011 = memref.load %arg2[%c86_281] : memref<196xf32, #tpu.memory_space<smem>>
      %c184 = arith.constant 184 : index
      %1012 = memref.load %arg2[%c184] : memref<196xf32, #tpu.memory_space<smem>>
      %1013 = vector.broadcast %1011 : f32 to vector<1x256xf32>
      %1014 = arith.mulf %1013, %1010 : vector<1x256xf32>
      %1015 = arith.addf %1004, %1014 : vector<1x256xf32>
      %1016 = vector.broadcast %1012 : f32 to vector<1x256xf32>
      %1017 = arith.mulf %1016, %1010 : vector<1x256xf32>
      %1018 = arith.addf %1007, %1017 : vector<1x256xf32>
      %c1_282 = arith.constant 1 : index
      %c83_283 = arith.constant 83 : index
      %1019 = vector.load %arg9[%c1_282, %c83_283] : memref<2x358xf32, #tpu.memory_space<vmem>>, vector<1x256xf32>
      %c87 = arith.constant 87 : index
      %1020 = memref.load %arg2[%c87] : memref<196xf32, #tpu.memory_space<smem>>
      %c185 = arith.constant 185 : index
      %1021 = memref.load %arg2[%c185] : memref<196xf32, #tpu.memory_space<smem>>
      %1022 = vector.broadcast %1020 : f32 to vector<1x256xf32>
      %1023 = arith.mulf %1022, %1019 : vector<1x256xf32>
      %1024 = arith.addf %1015, %1023 : vector<1x256xf32>
      %1025 = vector.broadcast %1021 : f32 to vector<1x256xf32>
      %1026 = arith.mulf %1025, %1019 : vector<1x256xf32>
      %1027 = arith.addf %1018, %1026 : vector<1x256xf32>
      %c1_284 = arith.constant 1 : index
      %c84_285 = arith.constant 84 : index
      %1028 = vector.load %arg9[%c1_284, %c84_285] : memref<2x358xf32, #tpu.memory_space<vmem>>, vector<1x256xf32>
      %cst_286 = arith.constant 0.000000e+00 : f32
      %1029 = vector.broadcast %cst_286 : f32 to vector<1x256xf32>
      %1030 = arith.select %67, %1028, %1029 : vector<1x256xi1>, vector<1x256xf32>
      %c88 = arith.constant 88 : index
      %1031 = memref.load %arg2[%c88] : memref<196xf32, #tpu.memory_space<smem>>
      %c186 = arith.constant 186 : index
      %1032 = memref.load %arg2[%c186] : memref<196xf32, #tpu.memory_space<smem>>
      %1033 = vector.broadcast %1031 : f32 to vector<1x256xf32>
      %1034 = arith.mulf %1033, %1030 : vector<1x256xf32>
      %1035 = arith.addf %1024, %1034 : vector<1x256xf32>
      %1036 = vector.broadcast %1032 : f32 to vector<1x256xf32>
      %1037 = arith.mulf %1036, %1030 : vector<1x256xf32>
      %1038 = arith.addf %1027, %1037 : vector<1x256xf32>
      %c1_287 = arith.constant 1 : index
      %c85_288 = arith.constant 85 : index
      %1039 = vector.load %arg9[%c1_287, %c85_288] : memref<2x358xf32, #tpu.memory_space<vmem>>, vector<1x256xf32>
      %cst_289 = arith.constant 0.000000e+00 : f32
      %1040 = vector.broadcast %cst_289 : f32 to vector<1x256xf32>
      %1041 = arith.select %72, %1039, %1040 : vector<1x256xi1>, vector<1x256xf32>
      %c89 = arith.constant 89 : index
      %1042 = memref.load %arg2[%c89] : memref<196xf32, #tpu.memory_space<smem>>
      %c187 = arith.constant 187 : index
      %1043 = memref.load %arg2[%c187] : memref<196xf32, #tpu.memory_space<smem>>
      %1044 = vector.broadcast %1042 : f32 to vector<1x256xf32>
      %1045 = arith.mulf %1044, %1041 : vector<1x256xf32>
      %1046 = arith.addf %1035, %1045 : vector<1x256xf32>
      %1047 = vector.broadcast %1043 : f32 to vector<1x256xf32>
      %1048 = arith.mulf %1047, %1041 : vector<1x256xf32>
      %1049 = arith.addf %1038, %1048 : vector<1x256xf32>
      %c1_290 = arith.constant 1 : index
      %c86_291 = arith.constant 86 : index
      %1050 = vector.load %arg9[%c1_290, %c86_291] : memref<2x358xf32, #tpu.memory_space<vmem>>, vector<1x256xf32>
      %cst_292 = arith.constant 0.000000e+00 : f32
      %1051 = vector.broadcast %cst_292 : f32 to vector<1x256xf32>
      %1052 = arith.select %77, %1050, %1051 : vector<1x256xi1>, vector<1x256xf32>
      %c90 = arith.constant 90 : index
      %1053 = memref.load %arg2[%c90] : memref<196xf32, #tpu.memory_space<smem>>
      %c188 = arith.constant 188 : index
      %1054 = memref.load %arg2[%c188] : memref<196xf32, #tpu.memory_space<smem>>
      %1055 = vector.broadcast %1053 : f32 to vector<1x256xf32>
      %1056 = arith.mulf %1055, %1052 : vector<1x256xf32>
      %1057 = arith.addf %1046, %1056 : vector<1x256xf32>
      %1058 = vector.broadcast %1054 : f32 to vector<1x256xf32>
      %1059 = arith.mulf %1058, %1052 : vector<1x256xf32>
      %1060 = arith.addf %1049, %1059 : vector<1x256xf32>
      %c1_293 = arith.constant 1 : index
      %c96_294 = arith.constant 96 : index
      %1061 = vector.load %arg9[%c1_293, %c96_294] : memref<2x358xf32, #tpu.memory_space<vmem>>, vector<1x256xf32>
      %cst_295 = arith.constant 0.000000e+00 : f32
      %1062 = vector.broadcast %cst_295 : f32 to vector<1x256xf32>
      %1063 = arith.select %52, %1061, %1062 : vector<1x256xi1>, vector<1x256xf32>
      %c91 = arith.constant 91 : index
      %1064 = memref.load %arg2[%c91] : memref<196xf32, #tpu.memory_space<smem>>
      %c189 = arith.constant 189 : index
      %1065 = memref.load %arg2[%c189] : memref<196xf32, #tpu.memory_space<smem>>
      %1066 = vector.broadcast %1064 : f32 to vector<1x256xf32>
      %1067 = arith.mulf %1066, %1063 : vector<1x256xf32>
      %1068 = arith.addf %1057, %1067 : vector<1x256xf32>
      %1069 = vector.broadcast %1065 : f32 to vector<1x256xf32>
      %1070 = arith.mulf %1069, %1063 : vector<1x256xf32>
      %1071 = arith.addf %1060, %1070 : vector<1x256xf32>
      %c1_296 = arith.constant 1 : index
      %c97_297 = arith.constant 97 : index
      %1072 = vector.load %arg9[%c1_296, %c97_297] : memref<2x358xf32, #tpu.memory_space<vmem>>, vector<1x256xf32>
      %cst_298 = arith.constant 0.000000e+00 : f32
      %1073 = vector.broadcast %cst_298 : f32 to vector<1x256xf32>
      %1074 = arith.select %57, %1072, %1073 : vector<1x256xi1>, vector<1x256xf32>
      %c92 = arith.constant 92 : index
      %1075 = memref.load %arg2[%c92] : memref<196xf32, #tpu.memory_space<smem>>
      %c190 = arith.constant 190 : index
      %1076 = memref.load %arg2[%c190] : memref<196xf32, #tpu.memory_space<smem>>
      %1077 = vector.broadcast %1075 : f32 to vector<1x256xf32>
      %1078 = arith.mulf %1077, %1074 : vector<1x256xf32>
      %1079 = arith.addf %1068, %1078 : vector<1x256xf32>
      %1080 = vector.broadcast %1076 : f32 to vector<1x256xf32>
      %1081 = arith.mulf %1080, %1074 : vector<1x256xf32>
      %1082 = arith.addf %1071, %1081 : vector<1x256xf32>
      %c1_299 = arith.constant 1 : index
      %c98_300 = arith.constant 98 : index
      %1083 = vector.load %arg9[%c1_299, %c98_300] : memref<2x358xf32, #tpu.memory_space<vmem>>, vector<1x256xf32>
      %cst_301 = arith.constant 0.000000e+00 : f32
      %1084 = vector.broadcast %cst_301 : f32 to vector<1x256xf32>
      %1085 = arith.select %62, %1083, %1084 : vector<1x256xi1>, vector<1x256xf32>
      %c93 = arith.constant 93 : index
      %1086 = memref.load %arg2[%c93] : memref<196xf32, #tpu.memory_space<smem>>
      %c191 = arith.constant 191 : index
      %1087 = memref.load %arg2[%c191] : memref<196xf32, #tpu.memory_space<smem>>
      %1088 = vector.broadcast %1086 : f32 to vector<1x256xf32>
      %1089 = arith.mulf %1088, %1085 : vector<1x256xf32>
      %1090 = arith.addf %1079, %1089 : vector<1x256xf32>
      %1091 = vector.broadcast %1087 : f32 to vector<1x256xf32>
      %1092 = arith.mulf %1091, %1085 : vector<1x256xf32>
      %1093 = arith.addf %1082, %1092 : vector<1x256xf32>
      %c1_302 = arith.constant 1 : index
      %c99_303 = arith.constant 99 : index
      %1094 = vector.load %arg9[%c1_302, %c99_303] : memref<2x358xf32, #tpu.memory_space<vmem>>, vector<1x256xf32>
      %c94 = arith.constant 94 : index
      %1095 = memref.load %arg2[%c94] : memref<196xf32, #tpu.memory_space<smem>>
      %c192 = arith.constant 192 : index
      %1096 = memref.load %arg2[%c192] : memref<196xf32, #tpu.memory_space<smem>>
      %1097 = vector.broadcast %1095 : f32 to vector<1x256xf32>
      %1098 = arith.mulf %1097, %1094 : vector<1x256xf32>
      %1099 = arith.addf %1090, %1098 : vector<1x256xf32>
      %1100 = vector.broadcast %1096 : f32 to vector<1x256xf32>
      %1101 = arith.mulf %1100, %1094 : vector<1x256xf32>
      %1102 = arith.addf %1093, %1101 : vector<1x256xf32>
      %c1_304 = arith.constant 1 : index
      %c100_305 = arith.constant 100 : index
      %1103 = vector.load %arg9[%c1_304, %c100_305] : memref<2x358xf32, #tpu.memory_space<vmem>>, vector<1x256xf32>
      %cst_306 = arith.constant 0.000000e+00 : f32
      %1104 = vector.broadcast %cst_306 : f32 to vector<1x256xf32>
      %1105 = arith.select %67, %1103, %1104 : vector<1x256xi1>, vector<1x256xf32>
      %c95 = arith.constant 95 : index
      %1106 = memref.load %arg2[%c95] : memref<196xf32, #tpu.memory_space<smem>>
      %c193 = arith.constant 193 : index
      %1107 = memref.load %arg2[%c193] : memref<196xf32, #tpu.memory_space<smem>>
      %1108 = vector.broadcast %1106 : f32 to vector<1x256xf32>
      %1109 = arith.mulf %1108, %1105 : vector<1x256xf32>
      %1110 = arith.addf %1099, %1109 : vector<1x256xf32>
      %1111 = vector.broadcast %1107 : f32 to vector<1x256xf32>
      %1112 = arith.mulf %1111, %1105 : vector<1x256xf32>
      %1113 = arith.addf %1102, %1112 : vector<1x256xf32>
      %c1_307 = arith.constant 1 : index
      %c101_308 = arith.constant 101 : index
      %1114 = vector.load %arg9[%c1_307, %c101_308] : memref<2x358xf32, #tpu.memory_space<vmem>>, vector<1x256xf32>
      %cst_309 = arith.constant 0.000000e+00 : f32
      %1115 = vector.broadcast %cst_309 : f32 to vector<1x256xf32>
      %1116 = arith.select %72, %1114, %1115 : vector<1x256xi1>, vector<1x256xf32>
      %c96_310 = arith.constant 96 : index
      %1117 = memref.load %arg2[%c96_310] : memref<196xf32, #tpu.memory_space<smem>>
      %c194 = arith.constant 194 : index
      %1118 = memref.load %arg2[%c194] : memref<196xf32, #tpu.memory_space<smem>>
      %1119 = vector.broadcast %1117 : f32 to vector<1x256xf32>
      %1120 = arith.mulf %1119, %1116 : vector<1x256xf32>
      %1121 = arith.addf %1110, %1120 : vector<1x256xf32>
      %1122 = vector.broadcast %1118 : f32 to vector<1x256xf32>
      %1123 = arith.mulf %1122, %1116 : vector<1x256xf32>
      %1124 = arith.addf %1113, %1123 : vector<1x256xf32>
      %c1_311 = arith.constant 1 : index
      %c102_312 = arith.constant 102 : index
      %1125 = vector.load %arg9[%c1_311, %c102_312] : memref<2x358xf32, #tpu.memory_space<vmem>>, vector<1x256xf32>
      %cst_313 = arith.constant 0.000000e+00 : f32
      %1126 = vector.broadcast %cst_313 : f32 to vector<1x256xf32>
      %1127 = arith.select %77, %1125, %1126 : vector<1x256xi1>, vector<1x256xf32>
      %c97_314 = arith.constant 97 : index
      %1128 = memref.load %arg2[%c97_314] : memref<196xf32, #tpu.memory_space<smem>>
      %c195 = arith.constant 195 : index
      %1129 = memref.load %arg2[%c195] : memref<196xf32, #tpu.memory_space<smem>>
      %1130 = vector.broadcast %1128 : f32 to vector<1x256xf32>
      %1131 = arith.mulf %1130, %1127 : vector<1x256xf32>
      %1132 = arith.addf %1121, %1131 : vector<1x256xf32>
      %1133 = vector.broadcast %1129 : f32 to vector<1x256xf32>
      %1134 = arith.mulf %1133, %1127 : vector<1x256xf32>
      %1135 = arith.addf %1124, %1134 : vector<1x256xf32>
      %1136 = arith.maximumf %1132, %1135 : vector<1x256xf32>
      %1137 = arith.subf %1132, %1136 : vector<1x256xf32>
      %1138 = math.exp %1137 : vector<1x256xf32>
      %1139 = arith.subf %1135, %1136 : vector<1x256xf32>
      %1140 = math.exp %1139 : vector<1x256xf32>
      %1141 = arith.addf %1138, %1140 : vector<1x256xf32>
      %1142 = tpu.reciprocal %1141 {approx = true} : vector<1x256xf32> -> vector<1x256xf32>
      %1143 = arith.mulf %1141, %1142 : vector<1x256xf32>
      %cst_315 = arith.constant 2.000000e+00 : f32
      %1144 = vector.broadcast %cst_315 : f32 to vector<1x256xf32>
      %1145 = arith.subf %1144, %1143 : vector<1x256xf32>
      %1146 = arith.mulf %1142, %1145 : vector<1x256xf32>
      %1147 = arith.mulf %1138, %1146 : vector<1x256xf32>
      %c0_316 = arith.constant 0 : index
      %c0_317 = arith.constant 0 : index
      %c0_318 = arith.constant 0 : index
      %1148 = vector.load %arg6[%c0_316, %c0_317, %c0_318] : memref<1x2x256xf32, #tpu.memory_space<vmem>>, vector<1x1x256xf32>
      %1149 = vector.shape_cast %1148 : vector<1x1x256xf32> to vector<1x256xf32>
      %1150 = vector.shape_cast %1147 : vector<1x256xf32> to vector<1x1x256xf32>
      tpu.vector_store %arg6[%c0_316, %c0_317, %c0_318], %1150 {strides = array<i32>} : memref<1x2x256xf32, #tpu.memory_space<vmem>>, vector<1x1x256xf32>,
      %1151 = arith.mulf %1140, %1146 : vector<1x256xf32>
      %c0_319 = arith.constant 0 : index
      %c1_320 = arith.constant 1 : index
      %c0_321 = arith.constant 0 : index
      %1152 = vector.load %arg6[%c0_319, %c1_320, %c0_321] : memref<1x2x256xf32, #tpu.memory_space<vmem>>, vector<1x1x256xf32>
      %1153 = vector.shape_cast %1152 : vector<1x1x256xf32> to vector<1x256xf32>
      %1154 = vector.shape_cast %1151 : vector<1x256xf32> to vector<1x1x256xf32>
      tpu.vector_store %arg6[%c0_319, %c1_320, %c0_321], %1154 {strides = array<i32>} : memref<1x2x256xf32, #tpu.memory_space<vmem>>, vector<1x1x256xf32>,
    } else {
    }
    return
  }
  func.func @transform_0(%arg0: i32, %arg1: i32) -> i32 {
    %c0_i32 = arith.constant 0 : i32
    %c0_i32_0 = arith.constant 0 : i32
    return %c0_i32 : i32
  }
  func.func @transform_1(%arg0: i32, %arg1: i32) -> i32 {
    %c0_i32 = arith.constant 0 : i32
    %c0_i32_0 = arith.constant 0 : i32
    return %c0_i32 : i32
  }
  func.func @transform_2(%arg0: i32, %arg1: i32) -> (i32, i32, i32) {
    %c0_i32 = arith.constant 0 : i32
    %c0_i32_0 = arith.constant 0 : i32
    return %arg0, %arg1, %c0_i32 : i32, i32, i32
  }
  func.func @transform_3(%arg0: i32, %arg1: i32) -> (i32, i32, i32) {
    %c0_i32 = arith.constant 0 : i32
    %c0_i32_0 = arith.constant 0 : i32
    return %arg0, %arg1, %c0_i32 : i32, i32, i32
  }
  func.func @transform_4(%arg0: i32, %arg1: i32) -> (i32, i32, i32) {
    %c0_i32 = arith.constant 0 : i32
    %c0_i32_0 = arith.constant 0 : i32
    %c0_i32_1 = arith.constant 0 : i32
    return %arg0, %c0_i32, %c0_i32_0 : i32, i32, i32
  }
}

</mosaic_0001>

<llo_original>
// kernel: tpu_custom_call.1
$region0: #{tpu_custom_call.1}
  #allocation0 [shape = 'u32[]', space=smem, size = 0x4, offset = 0x4, fixed_abs, tag = 'smem constant byte address 0x4 - core index']
  #allocation1 [shape = 'u32[72,128]{1,0:T(1,128)}', space=vmem, size = 0x9000, scoped, tag = 'internal scratch']
  #allocation2 [shape = 'f32[1,256]{1,0:T(1,128)}', space=vmem, size = 0x400, scoped, tag = 'scratch operand']
  #allocation3 [shape = 'f32[1,256]{1,0:T(1,128)}', space=vmem, size = 0x400, scoped, tag = 'scratch operand']
  #allocation4 [shape = 'f32[2,358]{1,0:T(2,128)}', space=vmem, size = 0xc00, scoped, tag = 'scratch operand']
  %s0 = inlined_call_operand.hbm [shape: f32[196], index: 0, kind: input, shape index: {}]
  %s1 = inlined_call_operand.hbm [shape: f32[2], index: 1, kind: input, shape index: {}]
  %s2 = inlined_call_operand.hbm [shape: f32[2,4,256], index: 2, kind: input, shape index: {}]
  %s3 = inlined_call_operand.hbm [shape: f32[2,4,256], index: 3, kind: input, shape index: {}]
  %s4 = inlined_call_operand.hbm [shape: f32[2,2,256], index: 4, kind: output, shape index: {}]
  %s5 = sld [smem:[#allocation0]]
  $region77: #{tpu_custom_call.1} parent=0
    _
  %s7 = ssub.s32 1, %s5
  %s8 = scalar_select 0, %s7, %s5
  $region1: #{tpu_custom_call.1} parent=0
    #allocation5 [shape = 'u8[1024]{0}', space=smem, size = 0x400, scoped, tag = 'input window, operand 0, single buffered']
    #allocation6 [shape = 's32[2]{0}', space=sflag, size = 0x8, scoped, tag = 'scoped memory for tpu_custom_call.1']
    #allocation7 [shape = 's32[2]{0}', space=sflag, size = 0x8, scoped, tag = 'scoped memory for tpu_custom_call.1']
    #allocation8 [shape = 's32[2]{0}', space=sflag, size = 0x8, scoped, tag = 'scoped memory for tpu_custom_call.1']
    #allocation9 [shape = 'u8[512]{0}', space=smem, size = 0x200, scoped, tag = 'input window, operand 1, single buffered']
    #allocation10 [shape = 's32[1]{0}', space=sflag, size = 0x4, scoped, tag = 'scoped memory for tpu_custom_call.1']
    #allocation11 [shape = 'u8[8192]{0}', space=vmem, size = 0x2000, scoped, tag = 'input window, operand 2']
    #allocation12 [shape = 'u8[8192]{0}', space=vmem, size = 0x2000, scoped, tag = 'input window, operand 3']
    #allocation13 [shape = 's32[2]{0}', space=sflag, size = 0x8, scoped, tag = 'scoped memory for tpu_custom_call.1']
    #allocation14 [shape = 'u8[4096]{0}', space=vmem, size = 0x1000, scoped, tag = 'output window, operand 0']
    %9 = vsyncpa [#allocation8], 0
    %10 = vsyncpa [#allocation10], 0
    %11 = vsyncpa [#allocation6], 0
    %s12 = scalar_lea.sflag [#allocation6], 1
    %13 = vsyncpa %s12, 0
    %14 = vsyncpa [#allocation13], 0
    %s15 = scalar_lea.sflag [#allocation13], 1
    %16 = vsyncpa %s15, 0
    %17 = vsyncpa [#allocation7], 0
    %s18 = scalar_lea.sflag [#allocation7], 1
    %19 = vsyncpa %s18, 0
    loop: start=0, step=1, limit=4
    $region2: #{tpu_custom_call.1} parent=1 // loop_pre_header
      _
    $region3: #{tpu_custom_call.1} parent=1 // loop_header
      %s21 = sphi 0, %s25
      %p22 = scmp.ge.s32.totalorder %s21, 4
      %s28 = sphi 0, %s40
      %s29 = sphi 0, %s36
      %s30 = sphi 0, %s28
      %s31 = sphi 0, %s29
      %s32 = sphi 0, %s30
      %s33 = sphi 0, %s31
      %s41 = sphi 0, %s41
      %s43 = sphi 0, %s41
      %s44 = sphi 0, %s43
      %s58 = sphi 0, %s44
      %s62 = sphi 0, %s62
      %s64 = sphi 0, %s62
      %s65 = sphi 0, %s64
      %s79 = sphi 0, %s65
      %s87 = sphi 0, %s89
      %s90 = sphi 0, %s87
      %s91 = sphi 0, %s90
      %s107 = sphi 0, %s91
      %s115 = sphi 0, %s117
      %s118 = sphi 0, %s115
      %s119 = sphi 0, %s118
      %s135 = sphi 0, %s119
      %s141 = sphi 0, %s143
      %s144 = sphi 0, %s141
      %s145 = sphi 0, %s144
      %s161 = sphi 0, %s145
    $region4: #{tpu_custom_call.1} parent=1 // loop_header_branch
      %24 = sbr.rel (%p22) target = $region8
    $region5: #{tpu_custom_call.1} parent=1 // loop_body
      %s26 = ssub.s32 %s21, 1
      %s27 = ssub.s32 %s21, 2
      %s34 = sadd.s32 1, %s29
      %p35 = scmp.ge.s32.totalorder %s34, 1
      %s36 = scalar_select %p35, 0, %s34
      %s37 = sadd.s32 1, %s28
      %s38 = scalar_select %p35, %s37, %s28
      %p39 = scmp.ge.s32.totalorder %s38, 2
      %s40 = scalar_select %p39, 0, %s38
      %s42 = sadd.s32 %s41, 1
      %p45 = scmp.eq.s32.totalorder %s21, 1
      %p46 = scmp.ne.s32.totalorder %s41, %s43
      %p47 = scmp.eq.s32.totalorder %s21, 0
      %p48 = por %p46, %p47
      %p49 = scmp.ne.s32.totalorder %s41, %s43
      %p50 = scmp.eq.s32.totalorder %s26, 1
      %p51 = por %p49, %p50
      %p52 = scmp.ne.s32.totalorder %s43, %s44
      %p53 = scmp.eq.s32.totalorder %s26, 0
      %p54 = por %p52, %p53
      %p55 = scmp.ne.s32.totalorder %s43, %s44
      %p56 = scmp.eq.s32.totalorder %s27, 1
      %p57 = por %p55, %p56
      %p59 = scmp.ne.s32.totalorder %s44, %s58
      %p60 = scmp.eq.s32.totalorder %s27, 0
      %p61 = por %p59, %p60
      %s63 = sadd.s32 %s62, 1
      %p66 = scmp.eq.s32.totalorder %s21, 1
      %p67 = scmp.ne.s32.totalorder %s62, %s64
      %p68 = scmp.eq.s32.totalorder %s21, 0
      %p69 = por %p67, %p68
      %p70 = scmp.ne.s32.totalorder %s62, %s64
      %p71 = scmp.eq.s32.totalorder %s26, 1
      %p72 = por %p70, %p71
      %p73 = scmp.ne.s32.totalorder %s64, %s65
      %p74 = scmp.eq.s32.totalorder %s26, 0
      %p75 = por %p73, %p74
      %p76 = scmp.ne.s32.totalorder %s64, %s65
      %p77 = scmp.eq.s32.totalorder %s27, 1
      %p78 = por %p76, %p77
      %p80 = scmp.ne.s32.totalorder %s65, %s79
      %p81 = scmp.eq.s32.totalorder %s27, 0
      %p82 = por %p80, %p81
      %s83 = ssub.s32 %s28, %s40
      %s84 = ssub.s32 %s29, %s36
      %s85 = sor.u32 %s83, %s84
      %p86 = scmp.eq.s32.totalorder %s85, 0
      %s88 = sadd.s32 %s87, 1
      %s89 = scalar_select %p86, %s87, %s88
      %p92 = pneg %p86
      %p93 = scmp.eq.s32.totalorder %s21, 1
      %p94 = por %p92, %p93
      %p95 = scmp.ne.s32.totalorder %s87, %s90
      %p96 = scmp.eq.s32.totalorder %s21, 0
      %p97 = por %p95, %p96
      %p98 = scmp.ne.s32.totalorder %s87, %s90
      %p99 = scmp.eq.s32.totalorder %s26, 1
      %p100 = por %p98, %p99
      %p101 = scmp.ne.s32.totalorder %s90, %s91
      %p102 = scmp.eq.s32.totalorder %s26, 0
      %p103 = por %p101, %p102
      %p104 = scmp.ne.s32.totalorder %s90, %s91
      %p105 = scmp.eq.s32.totalorder %s27, 1
      %p106 = por %p104, %p105
      %p108 = scmp.ne.s32.totalorder %s91, %s107
      %p109 = scmp.eq.s32.totalorder %s27, 0
      %p110 = por %p108, %p109
      %s111 = ssub.s32 %s28, %s40
      %s112 = ssub.s32 %s29, %s36
      %s113 = sor.u32 %s111, %s112
      %p114 = scmp.eq.s32.totalorder %s113, 0
      %s116 = sadd.s32 %s115, 1
      %s117 = scalar_select %p114, %s115, %s116
      %p120 = pneg %p114
      %p121 = scmp.eq.s32.totalorder %s21, 1
      %p122 = por %p120, %p121
      %p123 = scmp.ne.s32.totalorder %s115, %s118
      %p124 = scmp.eq.s32.totalorder %s21, 0
      %p125 = por %p123, %p124
      %p126 = scmp.ne.s32.totalorder %s115, %s118
      %p127 = scmp.eq.s32.totalorder %s26, 1
      %p128 = por %p126, %p127
      %p129 = scmp.ne.s32.totalorder %s118, %s119
      %p130 = scmp.eq.s32.totalorder %s26, 0
      %p131 = por %p129, %p130
      %p132 = scmp.ne.s32.totalorder %s118, %s119
      %p133 = scmp.eq.s32.totalorder %s27, 1
      %p134 = por %p132, %p133
      %p136 = scmp.ne.s32.totalorder %s119, %s135
      %p137 = scmp.eq.s32.totalorder %s27, 0
      %p138 = por %p136, %p137
      %s139 = ssub.s32 %s28, %s40
      %p140 = scmp.eq.s32.totalorder %s139, 0
      %s142 = sadd.s32 %s141, 1
      %s143 = scalar_select %p140, %s141, %s142
      %p146 = pneg %p140
      %p147 = scmp.eq.s32.totalorder %s21, 1
      %p148 = por %p146, %p147
      %p149 = scmp.ne.s32.totalorder %s141, %s144
      %p150 = scmp.eq.s32.totalorder %s21, 0
      %p151 = por %p149, %p150
      %p152 = scmp.ne.s32.totalorder %s141, %s144
      %p153 = scmp.eq.s32.totalorder %s26, 1
      %p154 = por %p152, %p153
      %p155 = scmp.ne.s32.totalorder %s144, %s145
      %p156 = scmp.eq.s32.totalorder %s26, 0
      %p157 = por %p155, %p156
      %p158 = scmp.ne.s32.totalorder %s144, %s145
      %p159 = scmp.eq.s32.totalorder %s27, 1
      %p160 = por %p158, %p159
      %p162 = scmp.ne.s32.totalorder %s145, %s161
      %p163 = scmp.eq.s32.totalorder %s27, 0
      %p164 = por %p162, %p163
      %p165 = scmp.le.s32.totalorder 1, %s21
      %p166 = scmp.lt.s32.totalorder %s21, 3
      %p167 = pnand %p165, %p166
      %p168 = pneg %p167
      // Predicated region
      $region9: #{tpu_custom_call.1} parent=5 // pred_check
        _
      $region10: #{tpu_custom_call.1} parent=5 // pred_check_branch
        %170 = sbr.rel (%p167) target = $region12
      $region11: #{tpu_custom_call.1} parent=5 // pred_region
        %s171 = ssub.s32 %s21, 1
        // Predicated region
        $region13: #{tpu_custom_call.1} parent=11 // pred_check
          %p172 = pneg %p54
        $region14: #{tpu_custom_call.1} parent=11 // pred_check_branch
          %174 = sbr.rel (%p172) target = $region16
        $region15: #{tpu_custom_call.1} parent=11 // pred_region
          %176 = vsyncadd [#allocation8], 0
          %s178 = sshll.u32 %s0, 4
          %s179 = int_to_ptr.hbm [resolvable:$true] %s178
          %181 = dma.hbm_to_smem %s179, 32, [#allocation5], [#allocation8]
        $region16: #{tpu_custom_call.1} parent=11 // pred_fallthru
          _
        // Predicated region
        $region17: #{tpu_custom_call.1} parent=11 // pred_check
          %p182 = pneg %p75
        $region18: #{tpu_custom_call.1} parent=11 // pred_check_branch
          %184 = sbr.rel (%p182) target = $region20
        $region19: #{tpu_custom_call.1} parent=11 // pred_region
          %186 = vsyncadd [#allocation10], 0
          %s188 = sshll.u32 %s1, 4
          %s189 = int_to_ptr.hbm [resolvable:$true] %s188
          %191 = dma.hbm_to_smem %s189, 16, [#allocation9], [#allocation10]
        $region20: #{tpu_custom_call.1} parent=11 // pred_fallthru
          _
      $region12: #{tpu_custom_call.1} parent=5 // pred_fallthru
        _
      %p192 = scmp.lt.s32.totalorder %s21, 2
      // Predicated region
      $region21: #{tpu_custom_call.1} parent=5 // pred_check
        %p193 = pneg %p192
      $region22: #{tpu_custom_call.1} parent=5 // pred_check_branch
        %195 = sbr.rel (%p193) target = $region24
      $region23: #{tpu_custom_call.1} parent=5 // pred_region
        // Predicated region
        $region25: #{tpu_custom_call.1} parent=23 // pred_check
          %p196 = pneg %p97
        $region26: #{tpu_custom_call.1} parent=23 // pred_check_branch
          %198 = sbr.rel (%p196) target = $region28
        $region27: #{tpu_custom_call.1} parent=23 // pred_region
          %s199 = sand.u32 %s87, 1
          %s200 = scalar_lea.sflag [#allocation6], %s199
          %s201 = sand.u32 %s87, 1
          %s202 = smul.addr %s201, 8
          %s203 = scalar_lea.vmem [#allocation11], %s202
          %205 = vsyncadd %s200, 0
          %s206 = smul.addr %s29, 2
          %s207 = smul.addr %s28, 2
          %s208 = sadd.s32 %s206, %s207
          %s209 = smul.addr %s208, 4
          %s210 = scalar_lea.hbm %s2, %s209
          %s212 = sshll.u32 %s210, 4
          %s213 = int_to_ptr.hbm [resolvable:$true] %s212
          %s214 = sshll.u32 %s203, 4
          %s215 = int_to_ptr.vmem [resolvable:$true] %s214
          %217 = dma.hbm_to_vmem [thread:$0]  %s213, 128, %s215, %s200
        $region28: #{tpu_custom_call.1} parent=23 // pred_fallthru
          _
        // Predicated region
        $region29: #{tpu_custom_call.1} parent=23 // pred_check
          %p218 = pneg %p125
        $region30: #{tpu_custom_call.1} parent=23 // pred_check_branch
          %220 = sbr.rel (%p218) target = $region32
        $region31: #{tpu_custom_call.1} parent=23 // pred_region
          %s221 = sand.u32 %s115, 1
          %s222 = scalar_lea.sflag [#allocation13], %s221
          %s223 = sand.u32 %s115, 1
          %s224 = smul.addr %s223, 8
          %s225 = scalar_lea.vmem [#allocation12], %s224
          %227 = vsyncadd %s222, 0
          %s228 = smul.addr %s29, 2
          %s229 = smul.addr %s28, 2
          %s230 = sadd.s32 %s228, %s229
          %s231 = smul.addr %s230, 4
          %s232 = scalar_lea.hbm %s3, %s231
          %s234 = sshll.u32 %s232, 4
          %s235 = int_to_ptr.hbm [resolvable:$true] %s234
          %s236 = sshll.u32 %s225, 4
          %s237 = int_to_ptr.vmem [resolvable:$true] %s236
          %239 = dma.hbm_to_vmem [thread:$0]  %s235, 128, %s237, %s222
        $region32: #{tpu_custom_call.1} parent=23 // pred_fallthru
          _
      $region24: #{tpu_custom_call.1} parent=5 // pred_fallthru
        _
      %p240 = scmp.le.s32.totalorder 1, %s21
      %p241 = scmp.lt.s32.totalorder %s21, 3
      %p242 = pnand %p240, %p241
      %p243 = pneg %p242
      // Predicated region
      $region33: #{tpu_custom_call.1} parent=5 // pred_check
        _
      $region34: #{tpu_custom_call.1} parent=5 // pred_check_branch
        %245 = sbr.rel (%p242) target = $region36
      $region35: #{tpu_custom_call.1} parent=5 // pred_region
        %s246 = ssub.s32 %s21, 1
        // Predicated region
        $region37: #{tpu_custom_call.1} parent=35 // pred_check
          %p247 = pneg %p54
        $region38: #{tpu_custom_call.1} parent=35 // pred_check_branch
          %249 = sbr.rel (%p247) target = $region40
        $region39: #{tpu_custom_call.1} parent=35 // pred_region
          %251 = dma.done [#allocation8], 32
        $region40: #{tpu_custom_call.1} parent=35 // pred_fallthru
          _
        // Predicated region
        $region41: #{tpu_custom_call.1} parent=35 // pred_check
          %p252 = pneg %p75
        $region42: #{tpu_custom_call.1} parent=35 // pred_check_branch
          %254 = sbr.rel (%p252) target = $region44
        $region43: #{tpu_custom_call.1} parent=35 // pred_region
          %256 = dma.done [#allocation10], 16
        $region44: #{tpu_custom_call.1} parent=35 // pred_fallthru
          _
        %s257 = sand.u32 %s90, 1
        %s258 = scalar_lea.sflag [#allocation6], %s257
        %s259 = sand.u32 %s90, 1
        %s260 = smul.addr %s259, 8
        %s261 = scalar_lea.vmem [#allocation11], %s260
        // Predicated region
        $region45: #{tpu_custom_call.1} parent=35 // pred_check
          %p262 = pneg %p103
        $region46: #{tpu_custom_call.1} parent=35 // pred_check_branch
          %264 = sbr.rel (%p262) target = $region48
        $region47: #{tpu_custom_call.1} parent=35 // pred_region
          %266 = dma.done %s258, 128
        $region48: #{tpu_custom_call.1} parent=35 // pred_fallthru
          _
        %s267 = sand.u32 %s118, 1
        %s268 = scalar_lea.sflag [#allocation13], %s267
        %s269 = sand.u32 %s118, 1
        %s270 = smul.addr %s269, 8
        %s271 = scalar_lea.vmem [#allocation12], %s270
        // Predicated region
        $region49: #{tpu_custom_call.1} parent=35 // pred_check
          %p272 = pneg %p131
        $region50: #{tpu_custom_call.1} parent=35 // pred_check_branch
          %274 = sbr.rel (%p272) target = $region52
        $region51: #{tpu_custom_call.1} parent=35 // pred_region
          %276 = dma.done %s268, 128
        $region52: #{tpu_custom_call.1} parent=35 // pred_fallthru
          _
        %277 = sfence
        %p278 = pneg %p54
        %p279 = pneg %p51
        %p280 = pneg %p75
        %p281 = pneg %p72
        %s282 = sand.u32 %s90, 1
        %s283 = scalar_lea.sflag [#allocation6], %s282
        %s284 = sand.u32 %s90, 1
        %s285 = smul.addr %s284, 8
        %s286 = scalar_lea.vmem [#allocation11], %s285
        %p287 = pneg %p103
        %p288 = pneg %p100
        %s289 = sand.u32 %s118, 1
        %s290 = scalar_lea.sflag [#allocation13], %s289
        %s291 = sand.u32 %s118, 1
        %s292 = smul.addr %s291, 8
        %s293 = scalar_lea.vmem [#allocation12], %s292
        %p294 = pneg %p131
        %p295 = pneg %p128
        %p296 = pneg %p157
        %p297 = pneg %p154
        %s298 = sand.u32 %s144, 1
        %s299 = scalar_lea.sflag [#allocation7], %s298
        %s300 = sand.u32 %s144, 1
        %s301 = smul.addr %s300, 4
        %s302 = scalar_lea.vmem [#allocation14], %s301
        %v303 = vld [vmem:[%s261] sm:$0xff]
        %v304 = vld [vmem:[%s271] sm:$0xff]
        %306 = vst [vmem:[#allocation1] ss:$2 sm:$0xff] %v303
        %v307 = vld.sshfl [vmem:[#allocation1] sm:$0xff pattern:$0x75316420]
        %v308 = vld.sshfl [vmem:[#allocation1 + $0x8] sm:$0xff pattern:$0x75316420]
        %vm311 = vcmask 1043456
        %v312 = vsel %vm311, %v307, 0.0
        %v313 = vrot.slane %v312, 4
        %v314 = vadd.f32 %v312, %v313
        %v315 = vrot.slane %v314, 2
        %v316 = vadd.f32 %v314, %v315
        %v317 = vrot.slane %v316, 1
        %v318 = vadd.f32 %v316, %v317
        %v319 = vsel %vm311, %v308, 0.0
        %v320 = vrot.slane %v319, 4
        %v321 = vadd.f32 %v319, %v320
        %v322 = vrot.slane %v321, 2
        %v323 = vadd.f32 %v321, %v322
        %v324 = vrot.slane %v323, 1
        %v325 = vadd.f32 %v323, %v324
        %327 = vst [vmem:[#allocation1] ss:$2 sm:$0xff] %v304
        %v328 = vld.sshfl [vmem:[#allocation1] sm:$0xff pattern:$0x75316420]
        %v329 = vld.sshfl [vmem:[#allocation1 + $0x8] sm:$0xff pattern:$0x75316420]
        %v332 = vsel %vm311, %v328, 0.0
        %v333 = vrot.slane %v332, 4
        %v334 = vadd.f32 %v332, %v333
        %v335 = vrot.slane %v334, 2
        %v336 = vadd.f32 %v334, %v335
        %v337 = vrot.slane %v336, 1
        %v338 = vadd.f32 %v336, %v337
        %v339 = vsel %vm311, %v329, 0.0
        %v340 = vrot.slane %v339, 4
        %v341 = vadd.f32 %v339, %v340
        %v342 = vrot.slane %v341, 2
        %v343 = vadd.f32 %v341, %v342
        %v344 = vrot.slane %v343, 1
        %v345 = vadd.f32 %v343, %v344
        %v346 = vadd.f32 %v318, %v338
        %v347 = vadd.f32 %v325, %v345
        %348 = vst [vmem:[#allocation1] ss:$2 sm:$0xff] %v303
        %v349 = vld.sshfl [vmem:[#allocation1] sm:$0xff pattern:$0x75316420]
        %v350 = vld.sshfl [vmem:[#allocation1 + $0x8] sm:$0xff pattern:$0x75316420]
        %v353 = vsel %vm311, %v349, -inf
        %v354 = vrot.slane %v353, 4
        %v355 = vmax.f32 %v353, %v354
        %v356 = vrot.slane %v355, 2
        %v357 = vmax.f32 %v355, %v356
        %v358 = vrot.slane %v357, 1
        %v359 = vmax.f32 %v357, %v358
        %v360 = vsel %vm311, %v350, -inf
        %v361 = vrot.slane %v360, 4
        %v362 = vmax.f32 %v360, %v361
        %v363 = vrot.slane %v362, 2
        %v364 = vmax.f32 %v362, %v363
        %v365 = vrot.slane %v364, 1
        %v366 = vmax.f32 %v364, %v365
        %367 = vst [vmem:[#allocation1] ss:$2 sm:$0xff] %v304
        %v368 = vld.sshfl [vmem:[#allocation1] sm:$0xff pattern:$0x75316420]
        %v369 = vld.sshfl [vmem:[#allocation1 + $0x8] sm:$0xff pattern:$0x75316420]
        %v372 = vsel %vm311, %v368, -inf
        %v373 = vrot.slane %v372, 4
        %v374 = vmax.f32 %v372, %v373
        %v375 = vrot.slane %v374, 2
        %v376 = vmax.f32 %v374, %v375
        %v377 = vrot.slane %v376, 1
        %v378 = vmax.f32 %v376, %v377
        %v379 = vsel %vm311, %v369, -inf
        %v380 = vrot.slane %v379, 4
        %v381 = vmax.f32 %v379, %v380
        %v382 = vrot.slane %v381, 2
        %v383 = vmax.f32 %v381, %v382
        %v384 = vrot.slane %v383, 1
        %v385 = vmax.f32 %v383, %v384
        %v386 = vmax.f32 %v359, %v378
        %v387 = vmax.f32 %v366, %v385
        %p388 = scmp.eq.s32.totalorder %s31, 0
        // Predicated region
        $region53: #{tpu_custom_call.1} parent=35 // pred_check
          %p389 = pneg %p388
        $region54: #{tpu_custom_call.1} parent=35 // pred_check_branch
          %391 = sbr.rel (%p389) target = $region56
        $region55: #{tpu_custom_call.1} parent=35 // pred_region
          %v394 = vrot.slane %v347, 7
          %vm395 = vcmask 1040384
          %v396 = vsel %vm395, %v346, %v394
          %v398 = vlaneseq
          %vm399 = vcmp.ge.s32.totalorder %v398, 0
          %vm400 = vcmp.lt.s32.totalorder %v398, 256
          %vm401 = vmand %vm399, %vm400
          %402 = vst.msk [vmem:[#allocation2] sm:$0x3] %vm401, %v396
          %v405 = vrot.slane %v387, 7
          %v406 = vsel %vm395, %v386, %v405
          %408 = vst.msk [vmem:[#allocation3] sm:$0x3] %vm401, %v406
        $region56: #{tpu_custom_call.1} parent=35 // pred_fallthru
          _
        %p409 = scmp.gt.s32.totalorder %s31, 0
        // Predicated region
        $region57: #{tpu_custom_call.1} parent=35 // pred_check
          %p410 = pneg %p409
        $region58: #{tpu_custom_call.1} parent=35 // pred_check_branch
          %412 = sbr.rel (%p410) target = $region60
        $region59: #{tpu_custom_call.1} parent=35 // pred_region
          %v413 = vld [vmem:[#allocation2] sm:$0x3]
          %v416 = vrot.slane %v347, 7
          %vm417 = vcmask 1040384
          %v418 = vsel %vm417, %v346, %v416
          %v420 = vadd.f32 %v413, %v418
          %v421 = vlaneseq
          %vm422 = vcmp.ge.s32.totalorder %v421, 0
          %vm423 = vcmp.lt.s32.totalorder %v421, 256
          %vm424 = vmand %vm422, %vm423
          %425 = vst.msk [vmem:[#allocation2] sm:$0x3] %vm424, %v420
          %v426 = vld [vmem:[#allocation3] sm:$0x3]
          %v429 = vrot.slane %v387, 7
          %v430 = vsel %vm417, %v386, %v429
          %v432 = vmax.f32 %v426, %v430
          %433 = vst.msk [vmem:[#allocation3] sm:$0x3] %vm424, %v432
        $region60: #{tpu_custom_call.1} parent=35 // pred_fallthru
          _
        // Predicated region
        $region61: #{tpu_custom_call.1} parent=35 // pred_check
          %p434 = pneg %p388
        $region62: #{tpu_custom_call.1} parent=35 // pred_check_branch
          %436 = sbr.rel (%p434) target = $region64
        $region63: #{tpu_custom_call.1} parent=35 // pred_region
          %vm437 = vcmask 1041408
          %vm438 = vcmask 1043458
          %vm439 = vmor %vm438, %vm437
          %vm440 = vcmask 832516
          %vm441 = vmor %vm440, %vm439
          %442 = vst.msk [vmem:[#allocation4] sm:$0x3f] %vm441, 0.0
          %v443 = vld [vmem:[#allocation2] sm:$0x3]
          %v444 = vmul.f32 %v443, 0.125
          %446 = vrot.lane.b32.xlu0 %v444, 51
          %v447 = vpop.permute.xlu0 %446
          %v448 = vrot.slane %v447, 7
          %vm449 = vcmask 416768
          %v450 = vsel %vm449, %v448, %v447
          %v452 = vlaneseq
          %vm453 = vcmp.ge.s32.totalorder %v452, 51
          %vm454 = vcmp.lt.s32.totalorder %v452, 307
          %vm455 = vmand %vm453, %vm454
          %456 = vst.msk [vmem:[#allocation4] ss:$2 sm:$0x7] %vm455, %v450
          %v457 = vld [vmem:[#allocation3] sm:$0x3]
          %459 = vrot.lane.b32.xlu0 %v457, 51
          %v460 = vpop.permute.xlu0 %459
          %v461 = vrot.slane %v460, 7
          %v462 = vsel %vm449, %v461, %v460
          %s464 = scalar_lea.vmem [#allocation4], 1
          %465 = vst.msk [vmem:[%s464] ss:$2 sm:$0x7] %vm455, %v462
          %v466 = vlaneseq
          %v467 = vand.u32 %v466, 127
          %v468 = vadd.s32 %v467, 128
          %vm469 = vcmp.lt.s32.totalorder %v467, 0
          %v470 = vsub.s32 0, %v467
          %v471 = vsel %vm469, %v470, %v467
          %v472 = vshrl.u32 %v471, 4
          %v473 = vand.u32 %v471, 15
          %v474 = vsub.s32 0, %v473
          %v475 = vsel %vm469, %v474, %v473
          %vm476 = vcmp.lt.s32.totalorder %v468, 0
          %v477 = vsub.s32 0, %v468
          %v478 = vsel %vm476, %v477, %v468
          %v479 = vshrl.u32 %v478, 4
          %v480 = vand.u32 %v478, 15
          %v481 = vsub.s32 0, %v480
          %v482 = vsel %vm476, %v481, %v480
          %vm483 = vcmp.ne.s32.totalorder %v475, 0
          %vm484 = vcmp.ne.s32.totalorder %v482, 0
          %vm485 = vcmp.lt.s32.totalorder %v475, 0
          %vm486 = vcmp.lt.s32.totalorder %v482, 0
          %vm487 = vmand %vm485, %vm483
          %vm488 = vmand %vm486, %vm484
          %v489 = vadd.s32 %v475, 16
          %v490 = vadd.s32 %v482, 16
          %v491 = vsel %vm487, %v489, %v475
          %v492 = vsel %vm488, %v490, %v482
          %vm493 = vcmp.ge.s32.totalorder %v491, 3
          %vm494 = vcmp.ge.s32.totalorder %v492, 3
          %vm495 = vcmp.lt.s32.totalorder %v491, 19
          %vm496 = vcmp.lt.s32.totalorder %v492, 19
          %vm497 = vmand %vm493, %vm495
          %vm498 = vmand %vm494, %vm496
          %vm499 = vcmp.ge.s32.totalorder %v491, 2
          %vm500 = vcmp.ge.s32.totalorder %v492, 2
          %vm501 = vcmp.lt.s32.totalorder %v491, 18
          %vm502 = vcmp.lt.s32.totalorder %v492, 18
          %vm503 = vmand %vm499, %vm501
          %vm504 = vmand %vm500, %vm502
          %vm505 = vcmp.ge.s32.totalorder %v491, 1
          %vm506 = vcmp.ge.s32.totalorder %v492, 1
          %vm507 = vcmp.lt.s32.totalorder %v491, 17
          %vm508 = vcmp.lt.s32.totalorder %v492, 17
          %vm509 = vmand %vm505, %vm507
          %vm510 = vmand %vm506, %vm508
          %vm511 = vcmp.ge.s32.totalorder %v491, 4294967295
          %vm512 = vcmp.ge.s32.totalorder %v492, 4294967295
          %vm513 = vcmp.lt.s32.totalorder %v491, 15
          %vm514 = vcmp.lt.s32.totalorder %v492, 15
          %vm515 = vmand %vm511, %vm513
          %vm516 = vmand %vm512, %vm514
          %vm517 = vcmp.ge.s32.totalorder %v491, 4294967294
          %vm518 = vcmp.ge.s32.totalorder %v492, 4294967294
          %vm519 = vcmp.lt.s32.totalorder %v491, 14
          %vm520 = vcmp.lt.s32.totalorder %v492, 14
          %vm521 = vmand %vm517, %vm519
          %vm522 = vmand %vm518, %vm520
          %vm523 = vcmp.ge.s32.totalorder %v491, 4294967293
          %vm524 = vcmp.ge.s32.totalorder %v492, 4294967293
          %vm525 = vcmp.lt.s32.totalorder %v491, 13
          %vm526 = vcmp.lt.s32.totalorder %v492, 13
          %vm527 = vmand %vm523, %vm525
          %vm528 = vmand %vm524, %vm526
          %s529 = sld [smem:[#allocation9]]
          %v530 = vstv %s529
          %v531 = vadd.f32 %v530, 0.0
          %s532 = sld [smem:[#allocation9 + $0x1]]
          %v533 = vstv %s532
          %v534 = vadd.f32 %v533, 0.0
          %v535 = vld [vmem:[#allocation4] ss:$2 sm:$0x3]
          %v537 = vperm.slane %v535, 0
          %v538 = vperm.slane %v535, 1
          %v541 = vsel %vm497, %v537, 0.0
          %v542 = vsel %vm498, %v538, 0.0
          %s543 = sld [smem:[#allocation5]]
          %s544 = sld [smem:[#allocation5 + $0x62]]
          %v545 = vstv %s543
          %v546 = vmul.f32 %v545, %v541
          %v547 = vmul.f32 %v545, %v542
          %v548 = vadd.f32 %v531, %v546
          %v549 = vadd.f32 %v531, %v547
          %v550 = vstv %s544
          %v551 = vmul.f32 %v550, %v541
          %v552 = vmul.f32 %v550, %v542
          %v553 = vadd.f32 %v534, %v551
          %v554 = vadd.f32 %v534, %v552
          %v555 = vld [vmem:[#allocation4] ss:$2 sm:$0x7]
          %v557 = vperm.slane %v555, 0
          %v558 = vperm.slane %v555, 1
          %v559 = vperm.slane %v555, 2
          %560 = vrot.lane.b32.xlu0 %v557, 127
          %v561 = vpop.permute.xlu0 %560
          %562 = vrot.lane.b32.xlu0 %v558, 127
          %v563 = vpop.permute.xlu0 %562
          %564 = vrot.lane.b32.xlu0 %v559, 127
          %v565 = vpop.permute.xlu0 %564
          %vm566 = vcmask 1039360
          %v567 = vsel %vm566, %v561, %v563
          %v568 = vsel %vm566, %v563, %v565
          %v571 = vsel %vm503, %v567, 0.0
          %v572 = vsel %vm504, %v568, 0.0
          %s573 = sld [smem:[#allocation5 + $0x1]]
          %s574 = sld [smem:[#allocation5 + $0x63]]
          %v575 = vstv %s573
          %v576 = vmul.f32 %v575, %v571
          %v577 = vmul.f32 %v575, %v572
          %v578 = vadd.f32 %v548, %v576
          %v579 = vadd.f32 %v549, %v577
          %v580 = vstv %s574
          %v581 = vmul.f32 %v580, %v571
          %v582 = vmul.f32 %v580, %v572
          %v583 = vadd.f32 %v553, %v581
          %v584 = vadd.f32 %v554, %v582
          %585 = vrot.lane.b32.xlu0 %v557, 126
          %v586 = vpop.permute.xlu0 %585
          %587 = vrot.lane.b32.xlu0 %v558, 126
          %v588 = vpop.permute.xlu0 %587
          %589 = vrot.lane.b32.xlu0 %v559, 126
          %v590 = vpop.permute.xlu0 %589
          %vm591 = vcmask 1031168
          %v592 = vsel %vm591, %v586, %v588
          %v593 = vsel %vm591, %v588, %v590
          %v596 = vsel %vm509, %v592, 0.0
          %v597 = vsel %vm510, %v593, 0.0
          %s598 = sld [smem:[#allocation5 + $0x2]]
          %s599 = sld [smem:[#allocation5 + $0x64]]
          %v600 = vstv %s598
          %v601 = vmul.f32 %v600, %v596
          %v602 = vmul.f32 %v600, %v597
          %v603 = vadd.f32 %v578, %v601
          %v604 = vadd.f32 %v579, %v602
          %v605 = vstv %s599
          %v606 = vmul.f32 %v605, %v596
          %v607 = vmul.f32 %v605, %v597
          %v608 = vadd.f32 %v583, %v606
          %v609 = vadd.f32 %v584, %v607
          %s610 = sld [smem:[#allocation5 + $0x3]]
          %s611 = sld [smem:[#allocation5 + $0x65]]
          %v612 = vstv %s610
          %v613 = vmul.f32 %v612, %v555
          %v615 = vperm.slane %v613, 0
          %v616 = vperm.slane %v613, 1
          %v617 = vperm.slane %v613, 2
          %618 = vrot.lane.b32.xlu0 %v615, 125
          %v619 = vpop.permute.xlu0 %618
          %620 = vrot.lane.b32.xlu0 %v616, 125
          %v621 = vpop.permute.xlu0 %620
          %622 = vrot.lane.b32.xlu0 %v617, 125
          %v623 = vpop.permute.xlu0 %622
          %vm624 = vcmask 1022976
          %v625 = vsel %vm624, %v619, %v621
          %v626 = vsel %vm624, %v621, %v623
          %v629 = vadd.f32 %v603, %v625
          %v630 = vadd.f32 %v604, %v626
          %v631 = vstv %s611
          %v632 = vmul.f32 %v631, %v555
          %v634 = vperm.slane %v632, 0
          %v635 = vperm.slane %v632, 1
          %v636 = vperm.slane %v632, 2
          %637 = vrot.lane.b32.xlu0 %v634, 125
          %v638 = vpop.permute.xlu0 %637
          %639 = vrot.lane.b32.xlu0 %v635, 125
          %v640 = vpop.permute.xlu0 %639
          %641 = vrot.lane.b32.xlu0 %v636, 125
          %v642 = vpop.permute.xlu0 %641
          %v643 = vsel %vm624, %v638, %v640
          %v644 = vsel %vm624, %v640, %v642
          %v647 = vadd.f32 %v608, %v643
          %v648 = vadd.f32 %v609, %v644
          %649 = vrot.lane.b32.xlu0 %v557, 124
          %v650 = vpop.permute.xlu0 %649
          %651 = vrot.lane.b32.xlu0 %v558, 124
          %v652 = vpop.permute.xlu0 %651
          %653 = vrot.lane.b32.xlu0 %v559, 124
          %v654 = vpop.permute.xlu0 %653
          %vm655 = vcmask 1014784
          %v656 = vsel %vm655, %v650, %v652
          %v657 = vsel %vm655, %v652, %v654
          %v660 = vsel %vm515, %v656, 0.0
          %v661 = vsel %vm516, %v657, 0.0
          %s662 = sld [smem:[#allocation5 + $0x4]]
          %s663 = sld [smem:[#allocation5 + $0x66]]
          %v664 = vstv %s662
          %v665 = vmul.f32 %v664, %v660
          %v666 = vmul.f32 %v664, %v661
          %v667 = vadd.f32 %v629, %v665
          %v668 = vadd.f32 %v630, %v666
          %v669 = vstv %s663
          %v670 = vmul.f32 %v669, %v660
          %v671 = vmul.f32 %v669, %v661
          %v672 = vadd.f32 %v647, %v670
          %v673 = vadd.f32 %v648, %v671
          %674 = vrot.lane.b32.xlu0 %v557, 123
          %v675 = vpop.permute.xlu0 %674
          %676 = vrot.lane.b32.xlu0 %v558, 123
          %v677 = vpop.permute.xlu0 %676
          %678 = vrot.lane.b32.xlu0 %v559, 123
          %v679 = vpop.permute.xlu0 %678
          %vm680 = vcmask 1006592
          %v681 = vsel %vm680, %v675, %v677
          %v682 = vsel %vm680, %v677, %v679
          %v685 = vsel %vm521, %v681, 0.0
          %v686 = vsel %vm522, %v682, 0.0
          %s687 = sld [smem:[#allocation5 + $0x5]]
          %s688 = sld [smem:[#allocation5 + $0x67]]
          %v689 = vstv %s687
          %v690 = vmul.f32 %v689, %v685
          %v691 = vmul.f32 %v689, %v686
          %v692 = vadd.f32 %v667, %v690
          %v693 = vadd.f32 %v668, %v691
          %v694 = vstv %s688
          %v695 = vmul.f32 %v694, %v685
          %v696 = vmul.f32 %v694, %v686
          %v697 = vadd.f32 %v672, %v695
          %v698 = vadd.f32 %v673, %v696
          %699 = vrot.lane.b32.xlu0 %v557, 122
          %v700 = vpop.permute.xlu0 %699
          %701 = vrot.lane.b32.xlu0 %v558, 122
          %v702 = vpop.permute.xlu0 %701
          %703 = vrot.lane.b32.xlu0 %v559, 122
          %v704 = vpop.permute.xlu0 %703
          %vm705 = vcmask 998400
          %v706 = vsel %vm705, %v700, %v702
          %v707 = vsel %vm705, %v702, %v704
          %v710 = vsel %vm527, %v706, 0.0
          %v711 = vsel %vm528, %v707, 0.0
          %s712 = sld [smem:[#allocation5 + $0x6]]
          %s713 = sld [smem:[#allocation5 + $0x68]]
          %v714 = vstv %s712
          %v715 = vmul.f32 %v714, %v710
          %v716 = vmul.f32 %v714, %v711
          %v717 = vadd.f32 %v692, %v715
          %v718 = vadd.f32 %v693, %v716
          %v719 = vstv %s713
          %v720 = vmul.f32 %v719, %v710
          %v721 = vmul.f32 %v719, %v711
          %v722 = vadd.f32 %v697, %v720
          %v723 = vadd.f32 %v698, %v721
          %724 = vrot.lane.b32.xlu0 %v557, 112
          %v725 = vpop.permute.xlu0 %724
          %726 = vrot.lane.b32.xlu0 %v558, 112
          %v727 = vpop.permute.xlu0 %726
          %728 = vrot.lane.b32.xlu0 %v559, 112
          %v729 = vpop.permute.xlu0 %728
          %vm730 = vcmask 916480
          %v731 = vsel %vm730, %v725, %v727
          %v732 = vsel %vm730, %v727, %v729
          %v735 = vsel %vm497, %v731, 0.0
          %v736 = vsel %vm498, %v732, 0.0
          %s737 = sld [smem:[#allocation5 + $0x7]]
          %s738 = sld [smem:[#allocation5 + $0x69]]
          %v739 = vstv %s737
          %v740 = vmul.f32 %v739, %v735
          %v741 = vmul.f32 %v739, %v736
          %v742 = vadd.f32 %v717, %v740
          %v743 = vadd.f32 %v718, %v741
          %v744 = vstv %s738
          %v745 = vmul.f32 %v744, %v735
          %v746 = vmul.f32 %v744, %v736
          %v747 = vadd.f32 %v722, %v745
          %v748 = vadd.f32 %v723, %v746
          %749 = vrot.lane.b32.xlu0 %v557, 111
          %v750 = vpop.permute.xlu0 %749
          %751 = vrot.lane.b32.xlu0 %v558, 111
          %v752 = vpop.permute.xlu0 %751
          %753 = vrot.lane.b32.xlu0 %v559, 111
          %v754 = vpop.permute.xlu0 %753
          %vm755 = vcmask 908288
          %v756 = vsel %vm755, %v750, %v752
          %v757 = vsel %vm755, %v752, %v754
          %v760 = vsel %vm503, %v756, 0.0
          %v761 = vsel %vm504, %v757, 0.0
          %s762 = sld [smem:[#allocation5 + $0x8]]
          %s763 = sld [smem:[#allocation5 + $0x6a]]
          %v764 = vstv %s762
          %v765 = vmul.f32 %v764, %v760
          %v766 = vmul.f32 %v764, %v761
          %v767 = vadd.f32 %v742, %v765
          %v768 = vadd.f32 %v743, %v766
          %v769 = vstv %s763
          %v770 = vmul.f32 %v769, %v760
          %v771 = vmul.f32 %v769, %v761
          %v772 = vadd.f32 %v747, %v770
          %v773 = vadd.f32 %v748, %v771
          %774 = vrot.lane.b32.xlu0 %v557, 110
          %v775 = vpop.permute.xlu0 %774
          %776 = vrot.lane.b32.xlu0 %v558, 110
          %v777 = vpop.permute.xlu0 %776
          %778 = vrot.lane.b32.xlu0 %v559, 110
          %v779 = vpop.permute.xlu0 %778
          %vm780 = vcmask 900096
          %v781 = vsel %vm780, %v775, %v777
          %v782 = vsel %vm780, %v777, %v779
          %v785 = vsel %vm509, %v781, 0.0
          %v786 = vsel %vm510, %v782, 0.0
          %s787 = sld [smem:[#allocation5 + $0x9]]
          %s788 = sld [smem:[#allocation5 + $0x6b]]
          %v789 = vstv %s787
          %v790 = vmul.f32 %v789, %v785
          %v791 = vmul.f32 %v789, %v786
          %v792 = vadd.f32 %v767, %v790
          %v793 = vadd.f32 %v768, %v791
          %v794 = vstv %s788
          %v795 = vmul.f32 %v794, %v785
          %v796 = vmul.f32 %v794, %v786
          %v797 = vadd.f32 %v772, %v795
          %v798 = vadd.f32 %v773, %v796
          %s799 = sld [smem:[#allocation5 + $0xa]]
          %s800 = sld [smem:[#allocation5 + $0x6c]]
          %v801 = vstv %s799
          %v802 = vmul.f32 %v801, %v555
          %v804 = vperm.slane %v802, 0
          %v805 = vperm.slane %v802, 1
          %v806 = vperm.slane %v802, 2
          %807 = vrot.lane.b32.xlu0 %v804, 109
          %v808 = vpop.permute.xlu0 %807
          %809 = vrot.lane.b32.xlu0 %v805, 109
          %v810 = vpop.permute.xlu0 %809
          %811 = vrot.lane.b32.xlu0 %v806, 109
          %v812 = vpop.permute.xlu0 %811
          %vm813 = vcmask 891904
          %v814 = vsel %vm813, %v808, %v810
          %v815 = vsel %vm813, %v810, %v812
          %v818 = vadd.f32 %v792, %v814
          %v819 = vadd.f32 %v793, %v815
          %v820 = vstv %s800
          %v821 = vmul.f32 %v820, %v555
          %v823 = vperm.slane %v821, 0
          %v824 = vperm.slane %v821, 1
          %v825 = vperm.slane %v821, 2
          %826 = vrot.lane.b32.xlu0 %v823, 109
          %v827 = vpop.permute.xlu0 %826
          %828 = vrot.lane.b32.xlu0 %v824, 109
          %v829 = vpop.permute.xlu0 %828
          %830 = vrot.lane.b32.xlu0 %v825, 109
          %v831 = vpop.permute.xlu0 %830
          %v832 = vsel %vm813, %v827, %v829
          %v833 = vsel %vm813, %v829, %v831
          %v836 = vadd.f32 %v797, %v832
          %v837 = vadd.f32 %v798, %v833
          %838 = vrot.lane.b32.xlu0 %v557, 108
          %v839 = vpop.permute.xlu0 %838
          %840 = vrot.lane.b32.xlu0 %v558, 108
          %v841 = vpop.permute.xlu0 %840
          %842 = vrot.lane.b32.xlu0 %v559, 108
          %v843 = vpop.permute.xlu0 %842
          %vm844 = vcmask 883712
          %v845 = vsel %vm844, %v839, %v841
          %v846 = vsel %vm844, %v841, %v843
          %v849 = vsel %vm515, %v845, 0.0
          %v850 = vsel %vm516, %v846, 0.0
          %s851 = sld [smem:[#allocation5 + $0xb]]
          %s852 = sld [smem:[#allocation5 + $0x6d]]
          %v853 = vstv %s851
          %v854 = vmul.f32 %v853, %v849
          %v855 = vmul.f32 %v853, %v850
          %v856 = vadd.f32 %v818, %v854
          %v857 = vadd.f32 %v819, %v855
          %v858 = vstv %s852
          %v859 = vmul.f32 %v858, %v849
          %v860 = vmul.f32 %v858, %v850
          %v861 = vadd.f32 %v836, %v859
          %v862 = vadd.f32 %v837, %v860
          %863 = vrot.lane.b32.xlu0 %v557, 107
          %v864 = vpop.permute.xlu0 %863
          %865 = vrot.lane.b32.xlu0 %v558, 107
          %v866 = vpop.permute.xlu0 %865
          %867 = vrot.lane.b32.xlu0 %v559, 107
          %v868 = vpop.permute.xlu0 %867
          %vm869 = vcmask 875520
          %v870 = vsel %vm869, %v864, %v866
          %v871 = vsel %vm869, %v866, %v868
          %v874 = vsel %vm521, %v870, 0.0
          %v875 = vsel %vm522, %v871, 0.0
          %s876 = sld [smem:[#allocation5 + $0xc]]
          %s877 = sld [smem:[#allocation5 + $0x6e]]
          %v878 = vstv %s876
          %v879 = vmul.f32 %v878, %v874
          %v880 = vmul.f32 %v878, %v875
          %v881 = vadd.f32 %v856, %v879
          %v882 = vadd.f32 %v857, %v880
          %v883 = vstv %s877
          %v884 = vmul.f32 %v883, %v874
          %v885 = vmul.f32 %v883, %v875
          %v886 = vadd.f32 %v861, %v884
          %v887 = vadd.f32 %v862, %v885
          %888 = vrot.lane.b32.xlu0 %v557, 106
          %v889 = vpop.permute.xlu0 %888
          %890 = vrot.lane.b32.xlu0 %v558, 106
          %v891 = vpop.permute.xlu0 %890
          %892 = vrot.lane.b32.xlu0 %v559, 106
          %v893 = vpop.permute.xlu0 %892
          %vm894 = vcmask 867328
          %v895 = vsel %vm894, %v889, %v891
          %v896 = vsel %vm894, %v891, %v893
          %v899 = vsel %vm527, %v895, 0.0
          %v900 = vsel %vm528, %v896, 0.0
          %s901 = sld [smem:[#allocation5 + $0xd]]
          %s902 = sld [smem:[#allocation5 + $0x6f]]
          %v903 = vstv %s901
          %v904 = vmul.f32 %v903, %v899
          %v905 = vmul.f32 %v903, %v900
          %v906 = vadd.f32 %v881, %v904
          %v907 = vadd.f32 %v882, %v905
          %v908 = vstv %s902
          %v909 = vmul.f32 %v908, %v899
          %v910 = vmul.f32 %v908, %v900
          %v911 = vadd.f32 %v886, %v909
          %v912 = vadd.f32 %v887, %v910
          %913 = vrot.lane.b32.xlu0 %v557, 96
          %v914 = vpop.permute.xlu0 %913
          %915 = vrot.lane.b32.xlu0 %v558, 96
          %v916 = vpop.permute.xlu0 %915
          %917 = vrot.lane.b32.xlu0 %v559, 96
          %v918 = vpop.permute.xlu0 %917
          %vm919 = vcmask 785408
          %v920 = vsel %vm919, %v914, %v916
          %v921 = vsel %vm919, %v916, %v918
          %v924 = vsel %vm497, %v920, 0.0
          %v925 = vsel %vm498, %v921, 0.0
          %s926 = sld [smem:[#allocation5 + $0xe]]
          %s927 = sld [smem:[#allocation5 + $0x70]]
          %v928 = vstv %s926
          %v929 = vmul.f32 %v928, %v924
          %v930 = vmul.f32 %v928, %v925
          %v931 = vadd.f32 %v906, %v929
          %v932 = vadd.f32 %v907, %v930
          %v933 = vstv %s927
          %v934 = vmul.f32 %v933, %v924
          %v935 = vmul.f32 %v933, %v925
          %v936 = vadd.f32 %v911, %v934
          %v937 = vadd.f32 %v912, %v935
          %938 = vrot.lane.b32.xlu0 %v557, 95
          %v939 = vpop.permute.xlu0 %938
          %940 = vrot.lane.b32.xlu0 %v558, 95
          %v941 = vpop.permute.xlu0 %940
          %942 = vrot.lane.b32.xlu0 %v559, 95
          %v943 = vpop.permute.xlu0 %942
          %vm944 = vcmask 777216
          %v945 = vsel %vm944, %v939, %v941
          %v946 = vsel %vm944, %v941, %v943
          %v949 = vsel %vm503, %v945, 0.0
          %v950 = vsel %vm504, %v946, 0.0
          %s951 = sld [smem:[#allocation5 + $0xf]]
          %s952 = sld [smem:[#allocation5 + $0x71]]
          %v953 = vstv %s951
          %v954 = vmul.f32 %v953, %v949
          %v955 = vmul.f32 %v953, %v950
          %v956 = vadd.f32 %v931, %v954
          %v957 = vadd.f32 %v932, %v955
          %v958 = vstv %s952
          %v959 = vmul.f32 %v958, %v949
          %v960 = vmul.f32 %v958, %v950
          %v961 = vadd.f32 %v936, %v959
          %v962 = vadd.f32 %v937, %v960
          %963 = vrot.lane.b32.xlu0 %v557, 94
          %v964 = vpop.permute.xlu0 %963
          %965 = vrot.lane.b32.xlu0 %v558, 94
          %v966 = vpop.permute.xlu0 %965
          %967 = vrot.lane.b32.xlu0 %v559, 94
          %v968 = vpop.permute.xlu0 %967
          %vm969 = vcmask 769024
          %v970 = vsel %vm969, %v964, %v966
          %v971 = vsel %vm969, %v966, %v968
          %v974 = vsel %vm509, %v970, 0.0
          %v975 = vsel %vm510, %v971, 0.0
          %s976 = sld [smem:[#allocation5 + $0x10]]
          %s977 = sld [smem:[#allocation5 + $0x72]]
          %v978 = vstv %s976
          %v979 = vmul.f32 %v978, %v974
          %v980 = vmul.f32 %v978, %v975
          %v981 = vadd.f32 %v956, %v979
          %v982 = vadd.f32 %v957, %v980
          %v983 = vstv %s977
          %v984 = vmul.f32 %v983, %v974
          %v985 = vmul.f32 %v983, %v975
          %v986 = vadd.f32 %v961, %v984
          %v987 = vadd.f32 %v962, %v985
          %s988 = sld [smem:[#allocation5 + $0x11]]
          %s989 = sld [smem:[#allocation5 + $0x73]]
          %v990 = vstv %s988
          %v991 = vmul.f32 %v990, %v555
          %v993 = vperm.slane %v991, 0
          %v994 = vperm.slane %v991, 1
          %v995 = vperm.slane %v991, 2
          %996 = vrot.lane.b32.xlu0 %v993, 93
          %v997 = vpop.permute.xlu0 %996
          %998 = vrot.lane.b32.xlu0 %v994, 93
          %v999 = vpop.permute.xlu0 %998
          %1000 = vrot.lane.b32.xlu0 %v995, 93
          %v1001 = vpop.permute.xlu0 %1000
          %vm1002 = vcmask 760832
          %v1003 = vsel %vm1002, %v997, %v999
          %v1004 = vsel %vm1002, %v999, %v1001
          %v1007 = vadd.f32 %v981, %v1003
          %v1008 = vadd.f32 %v982, %v1004
          %v1009 = vstv %s989
          %v1010 = vmul.f32 %v1009, %v555
          %v1012 = vperm.slane %v1010, 0
          %v1013 = vperm.slane %v1010, 1
          %v1014 = vperm.slane %v1010, 2
          %1015 = vrot.lane.b32.xlu0 %v1012, 93
          %v1016 = vpop.permute.xlu0 %1015
          %1017 = vrot.lane.b32.xlu0 %v1013, 93
          %v1018 = vpop.permute.xlu0 %1017
          %1019 = vrot.lane.b32.xlu0 %v1014, 93
          %v1020 = vpop.permute.xlu0 %1019
          %v1021 = vsel %vm1002, %v1016, %v1018
          %v1022 = vsel %vm1002, %v1018, %v1020
          %v1025 = vadd.f32 %v986, %v1021
          %v1026 = vadd.f32 %v987, %v1022
          %1027 = vrot.lane.b32.xlu0 %v557, 92
          %v1028 = vpop.permute.xlu0 %1027
          %1029 = vrot.lane.b32.xlu0 %v558, 92
          %v1030 = vpop.permute.xlu0 %1029
          %1031 = vrot.lane.b32.xlu0 %v559, 92
          %v1032 = vpop.permute.xlu0 %1031
          %vm1033 = vcmask 752640
          %v1034 = vsel %vm1033, %v1028, %v1030
          %v1035 = vsel %vm1033, %v1030, %v1032
          %v1038 = vsel %vm515, %v1034, 0.0
          %v1039 = vsel %vm516, %v1035, 0.0
          %s1040 = sld [smem:[#allocation5 + $0x12]]
          %s1041 = sld [smem:[#allocation5 + $0x74]]
          %v1042 = vstv %s1040
          %v1043 = vmul.f32 %v1042, %v1038
          %v1044 = vmul.f32 %v1042, %v1039
          %v1045 = vadd.f32 %v1007, %v1043
          %v1046 = vadd.f32 %v1008, %v1044
          %v1047 = vstv %s1041
          %v1048 = vmul.f32 %v1047, %v1038
          %v1049 = vmul.f32 %v1047, %v1039
          %v1050 = vadd.f32 %v1025, %v1048
          %v1051 = vadd.f32 %v1026, %v1049
          %1052 = vrot.lane.b32.xlu0 %v557, 91
          %v1053 = vpop.permute.xlu0 %1052
          %1054 = vrot.lane.b32.xlu0 %v558, 91
          %v1055 = vpop.permute.xlu0 %1054
          %1056 = vrot.lane.b32.xlu0 %v559, 91
          %v1057 = vpop.permute.xlu0 %1056
          %vm1058 = vcmask 744448
          %v1059 = vsel %vm1058, %v1053, %v1055
          %v1060 = vsel %vm1058, %v1055, %v1057
          %v1063 = vsel %vm521, %v1059, 0.0
          %v1064 = vsel %vm522, %v1060, 0.0
          %s1065 = sld [smem:[#allocation5 + $0x13]]
          %s1066 = sld [smem:[#allocation5 + $0x75]]
          %v1067 = vstv %s1065
          %v1068 = vmul.f32 %v1067, %v1063
          %v1069 = vmul.f32 %v1067, %v1064
          %v1070 = vadd.f32 %v1045, %v1068
          %v1071 = vadd.f32 %v1046, %v1069
          %v1072 = vstv %s1066
          %v1073 = vmul.f32 %v1072, %v1063
          %v1074 = vmul.f32 %v1072, %v1064
          %v1075 = vadd.f32 %v1050, %v1073
          %v1076 = vadd.f32 %v1051, %v1074
          %1077 = vrot.lane.b32.xlu0 %v557, 90
          %v1078 = vpop.permute.xlu0 %1077
          %1079 = vrot.lane.b32.xlu0 %v558, 90
          %v1080 = vpop.permute.xlu0 %1079
          %1081 = vrot.lane.b32.xlu0 %v559, 90
          %v1082 = vpop.permute.xlu0 %1081
          %vm1083 = vcmask 736256
          %v1084 = vsel %vm1083, %v1078, %v1080
          %v1085 = vsel %vm1083, %v1080, %v1082
          %v1088 = vsel %vm527, %v1084, 0.0
          %v1089 = vsel %vm528, %v1085, 0.0
          %s1090 = sld [smem:[#allocation5 + $0x14]]
          %s1091 = sld [smem:[#allocation5 + $0x76]]
          %v1092 = vstv %s1090
          %v1093 = vmul.f32 %v1092, %v1088
          %v1094 = vmul.f32 %v1092, %v1089
          %v1095 = vadd.f32 %v1070, %v1093
          %v1096 = vadd.f32 %v1071, %v1094
          %v1097 = vstv %s1091
          %v1098 = vmul.f32 %v1097, %v1088
          %v1099 = vmul.f32 %v1097, %v1089
          %v1100 = vadd.f32 %v1075, %v1098
          %v1101 = vadd.f32 %v1076, %v1099
          %1102 = vrot.lane.b32.xlu0 %v557, 80
          %v1103 = vpop.permute.xlu0 %1102
          %1104 = vrot.lane.b32.xlu0 %v558, 80
          %v1105 = vpop.permute.xlu0 %1104
          %1106 = vrot.lane.b32.xlu0 %v559, 80
          %v1107 = vpop.permute.xlu0 %1106
          %vm1108 = vcmask 654336
          %v1109 = vsel %vm1108, %v1103, %v1105
          %v1110 = vsel %vm1108, %v1105, %v1107
          %v1113 = vsel %vm497, %v1109, 0.0
          %v1114 = vsel %vm498, %v1110, 0.0
          %s1115 = sld [smem:[#allocation5 + $0x15]]
          %s1116 = sld [smem:[#allocation5 + $0x77]]
          %v1117 = vstv %s1115
          %v1118 = vmul.f32 %v1117, %v1113
          %v1119 = vmul.f32 %v1117, %v1114
          %v1120 = vadd.f32 %v1095, %v1118
          %v1121 = vadd.f32 %v1096, %v1119
          %v1122 = vstv %s1116
          %v1123 = vmul.f32 %v1122, %v1113
          %v1124 = vmul.f32 %v1122, %v1114
          %v1125 = vadd.f32 %v1100, %v1123
          %v1126 = vadd.f32 %v1101, %v1124
          %1127 = vrot.lane.b32.xlu0 %v557, 79
          %v1128 = vpop.permute.xlu0 %1127
          %1129 = vrot.lane.b32.xlu0 %v558, 79
          %v1130 = vpop.permute.xlu0 %1129
          %1131 = vrot.lane.b32.xlu0 %v559, 79
          %v1132 = vpop.permute.xlu0 %1131
          %vm1133 = vcmask 646144
          %v1134 = vsel %vm1133, %v1128, %v1130
          %v1135 = vsel %vm1133, %v1130, %v1132
          %v1138 = vsel %vm503, %v1134, 0.0
          %v1139 = vsel %vm504, %v1135, 0.0
          %s1140 = sld [smem:[#allocation5 + $0x16]]
          %s1141 = sld [smem:[#allocation5 + $0x78]]
          %v1142 = vstv %s1140
          %v1143 = vmul.f32 %v1142, %v1138
          %v1144 = vmul.f32 %v1142, %v1139
          %v1145 = vadd.f32 %v1120, %v1143
          %v1146 = vadd.f32 %v1121, %v1144
          %v1147 = vstv %s1141
          %v1148 = vmul.f32 %v1147, %v1138
          %v1149 = vmul.f32 %v1147, %v1139
          %v1150 = vadd.f32 %v1125, %v1148
          %v1151 = vadd.f32 %v1126, %v1149
          %1152 = vrot.lane.b32.xlu0 %v557, 78
          %v1153 = vpop.permute.xlu0 %1152
          %1154 = vrot.lane.b32.xlu0 %v558, 78
          %v1155 = vpop.permute.xlu0 %1154
          %1156 = vrot.lane.b32.xlu0 %v559, 78
          %v1157 = vpop.permute.xlu0 %1156
          %vm1158 = vcmask 637952
          %v1159 = vsel %vm1158, %v1153, %v1155
          %v1160 = vsel %vm1158, %v1155, %v1157
          %v1163 = vsel %vm509, %v1159, 0.0
          %v1164 = vsel %vm510, %v1160, 0.0
          %s1165 = sld [smem:[#allocation5 + $0x17]]
          %s1166 = sld [smem:[#allocation5 + $0x79]]
          %v1167 = vstv %s1165
          %v1168 = vmul.f32 %v1167, %v1163
          %v1169 = vmul.f32 %v1167, %v1164
          %v1170 = vadd.f32 %v1145, %v1168
          %v1171 = vadd.f32 %v1146, %v1169
          %v1172 = vstv %s1166
          %v1173 = vmul.f32 %v1172, %v1163
          %v1174 = vmul.f32 %v1172, %v1164
          %v1175 = vadd.f32 %v1150, %v1173
          %v1176 = vadd.f32 %v1151, %v1174
          %s1177 = sld [smem:[#allocation5 + $0x18]]
          %s1178 = sld [smem:[#allocation5 + $0x7a]]
          %v1179 = vstv %s1177
          %v1180 = vmul.f32 %v1179, %v555
          %v1182 = vperm.slane %v1180, 0
          %v1183 = vperm.slane %v1180, 1
          %v1184 = vperm.slane %v1180, 2
          %1185 = vrot.lane.b32.xlu0 %v1182, 77
          %v1186 = vpop.permute.xlu0 %1185
          %1187 = vrot.lane.b32.xlu0 %v1183, 77
          %v1188 = vpop.permute.xlu0 %1187
          %1189 = vrot.lane.b32.xlu0 %v1184, 77
          %v1190 = vpop.permute.xlu0 %1189
          %vm1191 = vcmask 629760
          %v1192 = vsel %vm1191, %v1186, %v1188
          %v1193 = vsel %vm1191, %v1188, %v1190
          %v1196 = vadd.f32 %v1170, %v1192
          %v1197 = vadd.f32 %v1171, %v1193
          %v1198 = vstv %s1178
          %v1199 = vmul.f32 %v1198, %v555
          %v1201 = vperm.slane %v1199, 0
          %v1202 = vperm.slane %v1199, 1
          %v1203 = vperm.slane %v1199, 2
          %1204 = vrot.lane.b32.xlu0 %v1201, 77
          %v1205 = vpop.permute.xlu0 %1204
          %1206 = vrot.lane.b32.xlu0 %v1202, 77
          %v1207 = vpop.permute.xlu0 %1206
          %1208 = vrot.lane.b32.xlu0 %v1203, 77
          %v1209 = vpop.permute.xlu0 %1208
          %v1210 = vsel %vm1191, %v1205, %v1207
          %v1211 = vsel %vm1191, %v1207, %v1209
          %v1214 = vadd.f32 %v1175, %v1210
          %v1215 = vadd.f32 %v1176, %v1211
          %1216 = vrot.lane.b32.xlu0 %v557, 76
          %v1217 = vpop.permute.xlu0 %1216
          %1218 = vrot.lane.b32.xlu0 %v558, 76
          %v1219 = vpop.permute.xlu0 %1218
          %1220 = vrot.lane.b32.xlu0 %v559, 76
          %v1221 = vpop.permute.xlu0 %1220
          %vm1222 = vcmask 621568
          %v1223 = vsel %vm1222, %v1217, %v1219
          %v1224 = vsel %vm1222, %v1219, %v1221
          %v1227 = vsel %vm515, %v1223, 0.0
          %v1228 = vsel %vm516, %v1224, 0.0
          %s1229 = sld [smem:[#allocation5 + $0x19]]
          %s1230 = sld [smem:[#allocation5 + $0x7b]]
          %v1231 = vstv %s1229
          %v1232 = vmul.f32 %v1231, %v1227
          %v1233 = vmul.f32 %v1231, %v1228
          %v1234 = vadd.f32 %v1196, %v1232
          %v1235 = vadd.f32 %v1197, %v1233
          %v1236 = vstv %s1230
          %v1237 = vmul.f32 %v1236, %v1227
          %v1238 = vmul.f32 %v1236, %v1228
          %v1239 = vadd.f32 %v1214, %v1237
          %v1240 = vadd.f32 %v1215, %v1238
          %1241 = vrot.lane.b32.xlu0 %v557, 75
          %v1242 = vpop.permute.xlu0 %1241
          %1243 = vrot.lane.b32.xlu0 %v558, 75
          %v1244 = vpop.permute.xlu0 %1243
          %1245 = vrot.lane.b32.xlu0 %v559, 75
          %v1246 = vpop.permute.xlu0 %1245
          %vm1247 = vcmask 613376
          %v1248 = vsel %vm1247, %v1242, %v1244
          %v1249 = vsel %vm1247, %v1244, %v1246
          %v1252 = vsel %vm521, %v1248, 0.0
          %v1253 = vsel %vm522, %v1249, 0.0
          %s1254 = sld [smem:[#allocation5 + $0x1a]]
          %s1255 = sld [smem:[#allocation5 + $0x7c]]
          %v1256 = vstv %s1254
          %v1257 = vmul.f32 %v1256, %v1252
          %v1258 = vmul.f32 %v1256, %v1253
          %v1259 = vadd.f32 %v1234, %v1257
          %v1260 = vadd.f32 %v1235, %v1258
          %v1261 = vstv %s1255
          %v1262 = vmul.f32 %v1261, %v1252
          %v1263 = vmul.f32 %v1261, %v1253
          %v1264 = vadd.f32 %v1239, %v1262
          %v1265 = vadd.f32 %v1240, %v1263
          %1266 = vrot.lane.b32.xlu0 %v557, 74
          %v1267 = vpop.permute.xlu0 %1266
          %1268 = vrot.lane.b32.xlu0 %v558, 74
          %v1269 = vpop.permute.xlu0 %1268
          %1270 = vrot.lane.b32.xlu0 %v559, 74
          %v1271 = vpop.permute.xlu0 %1270
          %vm1272 = vcmask 605184
          %v1273 = vsel %vm1272, %v1267, %v1269
          %v1274 = vsel %vm1272, %v1269, %v1271
          %v1277 = vsel %vm527, %v1273, 0.0
          %v1278 = vsel %vm528, %v1274, 0.0
          %s1279 = sld [smem:[#allocation5 + $0x1b]]
          %s1280 = sld [smem:[#allocation5 + $0x7d]]
          %v1281 = vstv %s1279
          %v1282 = vmul.f32 %v1281, %v1277
          %v1283 = vmul.f32 %v1281, %v1278
          %v1284 = vadd.f32 %v1259, %v1282
          %v1285 = vadd.f32 %v1260, %v1283
          %v1286 = vstv %s1280
          %v1287 = vmul.f32 %v1286, %v1277
          %v1288 = vmul.f32 %v1286, %v1278
          %v1289 = vadd.f32 %v1264, %v1287
          %v1290 = vadd.f32 %v1265, %v1288
          %1291 = vrot.lane.b32.xlu0 %v557, 64
          %v1292 = vpop.permute.xlu0 %1291
          %1293 = vrot.lane.b32.xlu0 %v558, 64
          %v1294 = vpop.permute.xlu0 %1293
          %1295 = vrot.lane.b32.xlu0 %v559, 64
          %v1296 = vpop.permute.xlu0 %1295
          %vm1297 = vcmask 523264
          %v1298 = vsel %vm1297, %v1292, %v1294
          %v1299 = vsel %vm1297, %v1294, %v1296
          %v1302 = vsel %vm497, %v1298, 0.0
          %v1303 = vsel %vm498, %v1299, 0.0
          %s1304 = sld [smem:[#allocation5 + $0x1c]]
          %s1305 = sld [smem:[#allocation5 + $0x7e]]
          %v1306 = vstv %s1304
          %v1307 = vmul.f32 %v1306, %v1302
          %v1308 = vmul.f32 %v1306, %v1303
          %v1309 = vadd.f32 %v1284, %v1307
          %v1310 = vadd.f32 %v1285, %v1308
          %v1311 = vstv %s1305
          %v1312 = vmul.f32 %v1311, %v1302
          %v1313 = vmul.f32 %v1311, %v1303
          %v1314 = vadd.f32 %v1289, %v1312
          %v1315 = vadd.f32 %v1290, %v1313
          %1316 = vrot.lane.b32.xlu0 %v557, 63
          %v1317 = vpop.permute.xlu0 %1316
          %1318 = vrot.lane.b32.xlu0 %v558, 63
          %v1319 = vpop.permute.xlu0 %1318
          %1320 = vrot.lane.b32.xlu0 %v559, 63
          %v1321 = vpop.permute.xlu0 %1320
          %vm1322 = vcmask 515072
          %v1323 = vsel %vm1322, %v1317, %v1319
          %v1324 = vsel %vm1322, %v1319, %v1321
          %v1327 = vsel %vm503, %v1323, 0.0
          %v1328 = vsel %vm504, %v1324, 0.0
          %s1329 = sld [smem:[#allocation5 + $0x1d]]
          %s1330 = sld [smem:[#allocation5 + $0x7f]]
          %v1331 = vstv %s1329
          %v1332 = vmul.f32 %v1331, %v1327
          %v1333 = vmul.f32 %v1331, %v1328
          %v1334 = vadd.f32 %v1309, %v1332
          %v1335 = vadd.f32 %v1310, %v1333
          %v1336 = vstv %s1330
          %v1337 = vmul.f32 %v1336, %v1327
          %v1338 = vmul.f32 %v1336, %v1328
          %v1339 = vadd.f32 %v1314, %v1337
          %v1340 = vadd.f32 %v1315, %v1338
          %1341 = vrot.lane.b32.xlu0 %v557, 62
          %v1342 = vpop.permute.xlu0 %1341
          %1343 = vrot.lane.b32.xlu0 %v558, 62
          %v1344 = vpop.permute.xlu0 %1343
          %1345 = vrot.lane.b32.xlu0 %v559, 62
          %v1346 = vpop.permute.xlu0 %1345
          %vm1347 = vcmask 506880
          %v1348 = vsel %vm1347, %v1342, %v1344
          %v1349 = vsel %vm1347, %v1344, %v1346
          %v1352 = vsel %vm509, %v1348, 0.0
          %v1353 = vsel %vm510, %v1349, 0.0
          %s1354 = sld [smem:[#allocation5 + $0x1e]]
          %s1355 = sld [smem:[#allocation5 + $0x80]]
          %v1356 = vstv %s1354
          %v1357 = vmul.f32 %v1356, %v1352
          %v1358 = vmul.f32 %v1356, %v1353
          %v1359 = vadd.f32 %v1334, %v1357
          %v1360 = vadd.f32 %v1335, %v1358
          %v1361 = vstv %s1355
          %v1362 = vmul.f32 %v1361, %v1352
          %v1363 = vmul.f32 %v1361, %v1353
          %v1364 = vadd.f32 %v1339, %v1362
          %v1365 = vadd.f32 %v1340, %v1363
          %s1366 = sld [smem:[#allocation5 + $0x1f]]
          %s1367 = sld [smem:[#allocation5 + $0x81]]
          %v1368 = vstv %s1366
          %v1369 = vmul.f32 %v1368, %v555
          %v1371 = vperm.slane %v1369, 0
          %v1372 = vperm.slane %v1369, 1
          %v1373 = vperm.slane %v1369, 2
          %1374 = vrot.lane.b32.xlu0 %v1371, 61
          %v1375 = vpop.permute.xlu0 %1374
          %1376 = vrot.lane.b32.xlu0 %v1372, 61
          %v1377 = vpop.permute.xlu0 %1376
          %1378 = vrot.lane.b32.xlu0 %v1373, 61
          %v1379 = vpop.permute.xlu0 %1378
          %vm1380 = vcmask 498688
          %v1381 = vsel %vm1380, %v1375, %v1377
          %v1382 = vsel %vm1380, %v1377, %v1379
          %v1385 = vadd.f32 %v1359, %v1381
          %v1386 = vadd.f32 %v1360, %v1382
          %v1387 = vstv %s1367
          %v1388 = vmul.f32 %v1387, %v555
          %v1390 = vperm.slane %v1388, 0
          %v1391 = vperm.slane %v1388, 1
          %v1392 = vperm.slane %v1388, 2
          %1393 = vrot.lane.b32.xlu0 %v1390, 61
          %v1394 = vpop.permute.xlu0 %1393
          %1395 = vrot.lane.b32.xlu0 %v1391, 61
          %v1396 = vpop.permute.xlu0 %1395
          %1397 = vrot.lane.b32.xlu0 %v1392, 61
          %v1398 = vpop.permute.xlu0 %1397
          %v1399 = vsel %vm1380, %v1394, %v1396
          %v1400 = vsel %vm1380, %v1396, %v1398
          %v1403 = vadd.f32 %v1364, %v1399
          %v1404 = vadd.f32 %v1365, %v1400
          %1405 = vrot.lane.b32.xlu0 %v557, 60
          %v1406 = vpop.permute.xlu0 %1405
          %1407 = vrot.lane.b32.xlu0 %v558, 60
          %v1408 = vpop.permute.xlu0 %1407
          %1409 = vrot.lane.b32.xlu0 %v559, 60
          %v1410 = vpop.permute.xlu0 %1409
          %vm1411 = vcmask 490496
          %v1412 = vsel %vm1411, %v1406, %v1408
          %v1413 = vsel %vm1411, %v1408, %v1410
          %v1416 = vsel %vm515, %v1412, 0.0
          %v1417 = vsel %vm516, %v1413, 0.0
          %s1418 = sld [smem:[#allocation5 + $0x20]]
          %s1419 = sld [smem:[#allocation5 + $0x82]]
          %v1420 = vstv %s1418
          %v1421 = vmul.f32 %v1420, %v1416
          %v1422 = vmul.f32 %v1420, %v1417
          %v1423 = vadd.f32 %v1385, %v1421
          %v1424 = vadd.f32 %v1386, %v1422
          %v1425 = vstv %s1419
          %v1426 = vmul.f32 %v1425, %v1416
          %v1427 = vmul.f32 %v1425, %v1417
          %v1428 = vadd.f32 %v1403, %v1426
          %v1429 = vadd.f32 %v1404, %v1427
          %1430 = vrot.lane.b32.xlu0 %v557, 59
          %v1431 = vpop.permute.xlu0 %1430
          %1432 = vrot.lane.b32.xlu0 %v558, 59
          %v1433 = vpop.permute.xlu0 %1432
          %1434 = vrot.lane.b32.xlu0 %v559, 59
          %v1435 = vpop.permute.xlu0 %1434
          %vm1436 = vcmask 482304
          %v1437 = vsel %vm1436, %v1431, %v1433
          %v1438 = vsel %vm1436, %v1433, %v1435
          %v1441 = vsel %vm521, %v1437, 0.0
          %v1442 = vsel %vm522, %v1438, 0.0
          %s1443 = sld [smem:[#allocation5 + $0x21]]
          %s1444 = sld [smem:[#allocation5 + $0x83]]
          %v1445 = vstv %s1443
          %v1446 = vmul.f32 %v1445, %v1441
          %v1447 = vmul.f32 %v1445, %v1442
          %v1448 = vadd.f32 %v1423, %v1446
          %v1449 = vadd.f32 %v1424, %v1447
          %v1450 = vstv %s1444
          %v1451 = vmul.f32 %v1450, %v1441
          %v1452 = vmul.f32 %v1450, %v1442
          %v1453 = vadd.f32 %v1428, %v1451
          %v1454 = vadd.f32 %v1429, %v1452
          %1455 = vrot.lane.b32.xlu0 %v557, 58
          %v1456 = vpop.permute.xlu0 %1455
          %1457 = vrot.lane.b32.xlu0 %v558, 58
          %v1458 = vpop.permute.xlu0 %1457
          %1459 = vrot.lane.b32.xlu0 %v559, 58
          %v1460 = vpop.permute.xlu0 %1459
          %vm1461 = vcmask 474112
          %v1462 = vsel %vm1461, %v1456, %v1458
          %v1463 = vsel %vm1461, %v1458, %v1460
          %v1466 = vsel %vm527, %v1462, 0.0
          %v1467 = vsel %vm528, %v1463, 0.0
          %s1468 = sld [smem:[#allocation5 + $0x22]]
          %s1469 = sld [smem:[#allocation5 + $0x84]]
          %v1470 = vstv %s1468
          %v1471 = vmul.f32 %v1470, %v1466
          %v1472 = vmul.f32 %v1470, %v1467
          %v1473 = vadd.f32 %v1448, %v1471
          %v1474 = vadd.f32 %v1449, %v1472
          %v1475 = vstv %s1469
          %v1476 = vmul.f32 %v1475, %v1466
          %v1477 = vmul.f32 %v1475, %v1467
          %v1478 = vadd.f32 %v1453, %v1476
          %v1479 = vadd.f32 %v1454, %v1477
          %1480 = vrot.lane.b32.xlu0 %v557, 48
          %v1481 = vpop.permute.xlu0 %1480
          %1482 = vrot.lane.b32.xlu0 %v558, 48
          %v1483 = vpop.permute.xlu0 %1482
          %1484 = vrot.lane.b32.xlu0 %v559, 48
          %v1485 = vpop.permute.xlu0 %1484
          %vm1486 = vcmask 392192
          %v1487 = vsel %vm1486, %v1481, %v1483
          %v1488 = vsel %vm1486, %v1483, %v1485
          %v1491 = vsel %vm497, %v1487, 0.0
          %v1492 = vsel %vm498, %v1488, 0.0
          %s1493 = sld [smem:[#allocation5 + $0x23]]
          %s1494 = sld [smem:[#allocation5 + $0x85]]
          %v1495 = vstv %s1493
          %v1496 = vmul.f32 %v1495, %v1491
          %v1497 = vmul.f32 %v1495, %v1492
          %v1498 = vadd.f32 %v1473, %v1496
          %v1499 = vadd.f32 %v1474, %v1497
          %v1500 = vstv %s1494
          %v1501 = vmul.f32 %v1500, %v1491
          %v1502 = vmul.f32 %v1500, %v1492
          %v1503 = vadd.f32 %v1478, %v1501
          %v1504 = vadd.f32 %v1479, %v1502
          %1505 = vrot.lane.b32.xlu0 %v557, 47
          %v1506 = vpop.permute.xlu0 %1505
          %1507 = vrot.lane.b32.xlu0 %v558, 47
          %v1508 = vpop.permute.xlu0 %1507
          %1509 = vrot.lane.b32.xlu0 %v559, 47
          %v1510 = vpop.permute.xlu0 %1509
          %vm1511 = vcmask 384000
          %v1512 = vsel %vm1511, %v1506, %v1508
          %v1513 = vsel %vm1511, %v1508, %v1510
          %v1516 = vsel %vm503, %v1512, 0.0
          %v1517 = vsel %vm504, %v1513, 0.0
          %s1518 = sld [smem:[#allocation5 + $0x24]]
          %s1519 = sld [smem:[#allocation5 + $0x86]]
          %v1520 = vstv %s1518
          %v1521 = vmul.f32 %v1520, %v1516
          %v1522 = vmul.f32 %v1520, %v1517
          %v1523 = vadd.f32 %v1498, %v1521
          %v1524 = vadd.f32 %v1499, %v1522
          %v1525 = vstv %s1519
          %v1526 = vmul.f32 %v1525, %v1516
          %v1527 = vmul.f32 %v1525, %v1517
          %v1528 = vadd.f32 %v1503, %v1526
          %v1529 = vadd.f32 %v1504, %v1527
          %1530 = vrot.lane.b32.xlu0 %v557, 46
          %v1531 = vpop.permute.xlu0 %1530
          %1532 = vrot.lane.b32.xlu0 %v558, 46
          %v1533 = vpop.permute.xlu0 %1532
          %1534 = vrot.lane.b32.xlu0 %v559, 46
          %v1535 = vpop.permute.xlu0 %1534
          %vm1536 = vcmask 375808
          %v1537 = vsel %vm1536, %v1531, %v1533
          %v1538 = vsel %vm1536, %v1533, %v1535
          %v1541 = vsel %vm509, %v1537, 0.0
          %v1542 = vsel %vm510, %v1538, 0.0
          %s1543 = sld [smem:[#allocation5 + $0x25]]
          %s1544 = sld [smem:[#allocation5 + $0x87]]
          %v1545 = vstv %s1543
          %v1546 = vmul.f32 %v1545, %v1541
          %v1547 = vmul.f32 %v1545, %v1542
          %v1548 = vadd.f32 %v1523, %v1546
          %v1549 = vadd.f32 %v1524, %v1547
          %v1550 = vstv %s1544
          %v1551 = vmul.f32 %v1550, %v1541
          %v1552 = vmul.f32 %v1550, %v1542
          %v1553 = vadd.f32 %v1528, %v1551
          %v1554 = vadd.f32 %v1529, %v1552
          %s1555 = sld [smem:[#allocation5 + $0x26]]
          %s1556 = sld [smem:[#allocation5 + $0x88]]
          %v1557 = vstv %s1555
          %v1558 = vmul.f32 %v1557, %v555
          %v1560 = vperm.slane %v1558, 0
          %v1561 = vperm.slane %v1558, 1
          %v1562 = vperm.slane %v1558, 2
          %1563 = vrot.lane.b32.xlu0 %v1560, 45
          %v1564 = vpop.permute.xlu0 %1563
          %1565 = vrot.lane.b32.xlu0 %v1561, 45
          %v1566 = vpop.permute.xlu0 %1565
          %1567 = vrot.lane.b32.xlu0 %v1562, 45
          %v1568 = vpop.permute.xlu0 %1567
          %vm1569 = vcmask 367616
          %v1570 = vsel %vm1569, %v1564, %v1566
          %v1571 = vsel %vm1569, %v1566, %v1568
          %v1574 = vadd.f32 %v1548, %v1570
          %v1575 = vadd.f32 %v1549, %v1571
          %v1576 = vstv %s1556
          %v1577 = vmul.f32 %v1576, %v555
          %v1579 = vperm.slane %v1577, 0
          %v1580 = vperm.slane %v1577, 1
          %v1581 = vperm.slane %v1577, 2
          %1582 = vrot.lane.b32.xlu0 %v1579, 45
          %v1583 = vpop.permute.xlu0 %1582
          %1584 = vrot.lane.b32.xlu0 %v1580, 45
          %v1585 = vpop.permute.xlu0 %1584
          %1586 = vrot.lane.b32.xlu0 %v1581, 45
          %v1587 = vpop.permute.xlu0 %1586
          %v1588 = vsel %vm1569, %v1583, %v1585
          %v1589 = vsel %vm1569, %v1585, %v1587
          %v1592 = vadd.f32 %v1553, %v1588
          %v1593 = vadd.f32 %v1554, %v1589
          %1594 = vrot.lane.b32.xlu0 %v557, 44
          %v1595 = vpop.permute.xlu0 %1594
          %1596 = vrot.lane.b32.xlu0 %v558, 44
          %v1597 = vpop.permute.xlu0 %1596
          %1598 = vrot.lane.b32.xlu0 %v559, 44
          %v1599 = vpop.permute.xlu0 %1598
          %vm1600 = vcmask 359424
          %v1601 = vsel %vm1600, %v1595, %v1597
          %v1602 = vsel %vm1600, %v1597, %v1599
          %v1605 = vsel %vm515, %v1601, 0.0
          %v1606 = vsel %vm516, %v1602, 0.0
          %s1607 = sld [smem:[#allocation5 + $0x27]]
          %s1608 = sld [smem:[#allocation5 + $0x89]]
          %v1609 = vstv %s1607
          %v1610 = vmul.f32 %v1609, %v1605
          %v1611 = vmul.f32 %v1609, %v1606
          %v1612 = vadd.f32 %v1574, %v1610
          %v1613 = vadd.f32 %v1575, %v1611
          %v1614 = vstv %s1608
          %v1615 = vmul.f32 %v1614, %v1605
          %v1616 = vmul.f32 %v1614, %v1606
          %v1617 = vadd.f32 %v1592, %v1615
          %v1618 = vadd.f32 %v1593, %v1616
          %1619 = vrot.lane.b32.xlu0 %v557, 43
          %v1620 = vpop.permute.xlu0 %1619
          %1621 = vrot.lane.b32.xlu0 %v558, 43
          %v1622 = vpop.permute.xlu0 %1621
          %1623 = vrot.lane.b32.xlu0 %v559, 43
          %v1624 = vpop.permute.xlu0 %1623
          %vm1625 = vcmask 351232
          %v1626 = vsel %vm1625, %v1620, %v1622
          %v1627 = vsel %vm1625, %v1622, %v1624
          %v1630 = vsel %vm521, %v1626, 0.0
          %v1631 = vsel %vm522, %v1627, 0.0
          %s1632 = sld [smem:[#allocation5 + $0x28]]
          %s1633 = sld [smem:[#allocation5 + $0x8a]]
          %v1634 = vstv %s1632
          %v1635 = vmul.f32 %v1634, %v1630
          %v1636 = vmul.f32 %v1634, %v1631
          %v1637 = vadd.f32 %v1612, %v1635
          %v1638 = vadd.f32 %v1613, %v1636
          %v1639 = vstv %s1633
          %v1640 = vmul.f32 %v1639, %v1630
          %v1641 = vmul.f32 %v1639, %v1631
          %v1642 = vadd.f32 %v1617, %v1640
          %v1643 = vadd.f32 %v1618, %v1641
          %1644 = vrot.lane.b32.xlu0 %v557, 42
          %v1645 = vpop.permute.xlu0 %1644
          %1646 = vrot.lane.b32.xlu0 %v558, 42
          %v1647 = vpop.permute.xlu0 %1646
          %1648 = vrot.lane.b32.xlu0 %v559, 42
          %v1649 = vpop.permute.xlu0 %1648
          %vm1650 = vcmask 343040
          %v1651 = vsel %vm1650, %v1645, %v1647
          %v1652 = vsel %vm1650, %v1647, %v1649
          %v1655 = vsel %vm527, %v1651, 0.0
          %v1656 = vsel %vm528, %v1652, 0.0
          %s1657 = sld [smem:[#allocation5 + $0x29]]
          %s1658 = sld [smem:[#allocation5 + $0x8b]]
          %v1659 = vstv %s1657
          %v1660 = vmul.f32 %v1659, %v1655
          %v1661 = vmul.f32 %v1659, %v1656
          %v1662 = vadd.f32 %v1637, %v1660
          %v1663 = vadd.f32 %v1638, %v1661
          %v1664 = vstv %s1658
          %v1665 = vmul.f32 %v1664, %v1655
          %v1666 = vmul.f32 %v1664, %v1656
          %v1667 = vadd.f32 %v1642, %v1665
          %v1668 = vadd.f32 %v1643, %v1666
          %1669 = vrot.lane.b32.xlu0 %v557, 32
          %v1670 = vpop.permute.xlu0 %1669
          %1671 = vrot.lane.b32.xlu0 %v558, 32
          %v1672 = vpop.permute.xlu0 %1671
          %1673 = vrot.lane.b32.xlu0 %v559, 32
          %v1674 = vpop.permute.xlu0 %1673
          %vm1675 = vcmask 261120
          %v1676 = vsel %vm1675, %v1670, %v1672
          %v1677 = vsel %vm1675, %v1672, %v1674
          %v1680 = vsel %vm497, %v1676, 0.0
          %v1681 = vsel %vm498, %v1677, 0.0
          %s1682 = sld [smem:[#allocation5 + $0x2a]]
          %s1683 = sld [smem:[#allocation5 + $0x8c]]
          %v1684 = vstv %s1682
          %v1685 = vmul.f32 %v1684, %v1680
          %v1686 = vmul.f32 %v1684, %v1681
          %v1687 = vadd.f32 %v1662, %v1685
          %v1688 = vadd.f32 %v1663, %v1686
          %v1689 = vstv %s1683
          %v1690 = vmul.f32 %v1689, %v1680
          %v1691 = vmul.f32 %v1689, %v1681
          %v1692 = vadd.f32 %v1667, %v1690
          %v1693 = vadd.f32 %v1668, %v1691
          %1694 = vrot.lane.b32.xlu0 %v557, 31
          %v1695 = vpop.permute.xlu0 %1694
          %1696 = vrot.lane.b32.xlu0 %v558, 31
          %v1697 = vpop.permute.xlu0 %1696
          %1698 = vrot.lane.b32.xlu0 %v559, 31
          %v1699 = vpop.permute.xlu0 %1698
          %vm1700 = vcmask 252928
          %v1701 = vsel %vm1700, %v1695, %v1697
          %v1702 = vsel %vm1700, %v1697, %v1699
          %v1705 = vsel %vm503, %v1701, 0.0
          %v1706 = vsel %vm504, %v1702, 0.0
          %s1707 = sld [smem:[#allocation5 + $0x2b]]
          %s1708 = sld [smem:[#allocation5 + $0x8d]]
          %v1709 = vstv %s1707
          %v1710 = vmul.f32 %v1709, %v1705
          %v1711 = vmul.f32 %v1709, %v1706
          %v1712 = vadd.f32 %v1687, %v1710
          %v1713 = vadd.f32 %v1688, %v1711
          %v1714 = vstv %s1708
          %v1715 = vmul.f32 %v1714, %v1705
          %v1716 = vmul.f32 %v1714, %v1706
          %v1717 = vadd.f32 %v1692, %v1715
          %v1718 = vadd.f32 %v1693, %v1716
          %1719 = vrot.lane.b32.xlu0 %v557, 30
          %v1720 = vpop.permute.xlu0 %1719
          %1721 = vrot.lane.b32.xlu0 %v558, 30
          %v1722 = vpop.permute.xlu0 %1721
          %1723 = vrot.lane.b32.xlu0 %v559, 30
          %v1724 = vpop.permute.xlu0 %1723
          %vm1725 = vcmask 244736
          %v1726 = vsel %vm1725, %v1720, %v1722
          %v1727 = vsel %vm1725, %v1722, %v1724
          %v1730 = vsel %vm509, %v1726, 0.0
          %v1731 = vsel %vm510, %v1727, 0.0
          %s1732 = sld [smem:[#allocation5 + $0x2c]]
          %s1733 = sld [smem:[#allocation5 + $0x8e]]
          %v1734 = vstv %s1732
          %v1735 = vmul.f32 %v1734, %v1730
          %v1736 = vmul.f32 %v1734, %v1731
          %v1737 = vadd.f32 %v1712, %v1735
          %v1738 = vadd.f32 %v1713, %v1736
          %v1739 = vstv %s1733
          %v1740 = vmul.f32 %v1739, %v1730
          %v1741 = vmul.f32 %v1739, %v1731
          %v1742 = vadd.f32 %v1717, %v1740
          %v1743 = vadd.f32 %v1718, %v1741
          %s1744 = sld [smem:[#allocation5 + $0x2d]]
          %s1745 = sld [smem:[#allocation5 + $0x8f]]
          %v1746 = vstv %s1744
          %v1747 = vmul.f32 %v1746, %v555
          %v1749 = vperm.slane %v1747, 0
          %v1750 = vperm.slane %v1747, 1
          %v1751 = vperm.slane %v1747, 2
          %1752 = vrot.lane.b32.xlu0 %v1749, 29
          %v1753 = vpop.permute.xlu0 %1752
          %1754 = vrot.lane.b32.xlu0 %v1750, 29
          %v1755 = vpop.permute.xlu0 %1754
          %1756 = vrot.lane.b32.xlu0 %v1751, 29
          %v1757 = vpop.permute.xlu0 %1756
          %vm1758 = vcmask 236544
          %v1759 = vsel %vm1758, %v1753, %v1755
          %v1760 = vsel %vm1758, %v1755, %v1757
          %v1763 = vadd.f32 %v1737, %v1759
          %v1764 = vadd.f32 %v1738, %v1760
          %v1765 = vstv %s1745
          %v1766 = vmul.f32 %v1765, %v555
          %v1768 = vperm.slane %v1766, 0
          %v1769 = vperm.slane %v1766, 1
          %v1770 = vperm.slane %v1766, 2
          %1771 = vrot.lane.b32.xlu0 %v1768, 29
          %v1772 = vpop.permute.xlu0 %1771
          %1773 = vrot.lane.b32.xlu0 %v1769, 29
          %v1774 = vpop.permute.xlu0 %1773
          %1775 = vrot.lane.b32.xlu0 %v1770, 29
          %v1776 = vpop.permute.xlu0 %1775
          %v1777 = vsel %vm1758, %v1772, %v1774
          %v1778 = vsel %vm1758, %v1774, %v1776
          %v1781 = vadd.f32 %v1742, %v1777
          %v1782 = vadd.f32 %v1743, %v1778
          %1783 = vrot.lane.b32.xlu0 %v557, 28
          %v1784 = vpop.permute.xlu0 %1783
          %1785 = vrot.lane.b32.xlu0 %v558, 28
          %v1786 = vpop.permute.xlu0 %1785
          %1787 = vrot.lane.b32.xlu0 %v559, 28
          %v1788 = vpop.permute.xlu0 %1787
          %vm1789 = vcmask 228352
          %v1790 = vsel %vm1789, %v1784, %v1786
          %v1791 = vsel %vm1789, %v1786, %v1788
          %v1794 = vsel %vm515, %v1790, 0.0
          %v1795 = vsel %vm516, %v1791, 0.0
          %s1796 = sld [smem:[#allocation5 + $0x2e]]
          %s1797 = sld [smem:[#allocation5 + $0x90]]
          %v1798 = vstv %s1796
          %v1799 = vmul.f32 %v1798, %v1794
          %v1800 = vmul.f32 %v1798, %v1795
          %v1801 = vadd.f32 %v1763, %v1799
          %v1802 = vadd.f32 %v1764, %v1800
          %v1803 = vstv %s1797
          %v1804 = vmul.f32 %v1803, %v1794
          %v1805 = vmul.f32 %v1803, %v1795
          %v1806 = vadd.f32 %v1781, %v1804
          %v1807 = vadd.f32 %v1782, %v1805
          %1808 = vrot.lane.b32.xlu0 %v557, 27
          %v1809 = vpop.permute.xlu0 %1808
          %1810 = vrot.lane.b32.xlu0 %v558, 27
          %v1811 = vpop.permute.xlu0 %1810
          %1812 = vrot.lane.b32.xlu0 %v559, 27
          %v1813 = vpop.permute.xlu0 %1812
          %vm1814 = vcmask 220160
          %v1815 = vsel %vm1814, %v1809, %v1811
          %v1816 = vsel %vm1814, %v1811, %v1813
          %v1819 = vsel %vm521, %v1815, 0.0
          %v1820 = vsel %vm522, %v1816, 0.0
          %s1821 = sld [smem:[#allocation5 + $0x2f]]
          %s1822 = sld [smem:[#allocation5 + $0x91]]
          %v1823 = vstv %s1821
          %v1824 = vmul.f32 %v1823, %v1819
          %v1825 = vmul.f32 %v1823, %v1820
          %v1826 = vadd.f32 %v1801, %v1824
          %v1827 = vadd.f32 %v1802, %v1825
          %v1828 = vstv %s1822
          %v1829 = vmul.f32 %v1828, %v1819
          %v1830 = vmul.f32 %v1828, %v1820
          %v1831 = vadd.f32 %v1806, %v1829
          %v1832 = vadd.f32 %v1807, %v1830
          %1833 = vrot.lane.b32.xlu0 %v557, 26
          %v1834 = vpop.permute.xlu0 %1833
          %1835 = vrot.lane.b32.xlu0 %v558, 26
          %v1836 = vpop.permute.xlu0 %1835
          %1837 = vrot.lane.b32.xlu0 %v559, 26
          %v1838 = vpop.permute.xlu0 %1837
          %vm1839 = vcmask 211968
          %v1840 = vsel %vm1839, %v1834, %v1836
          %v1841 = vsel %vm1839, %v1836, %v1838
          %v1844 = vsel %vm527, %v1840, 0.0
          %v1845 = vsel %vm528, %v1841, 0.0
          %s1846 = sld [smem:[#allocation5 + $0x30]]
          %s1847 = sld [smem:[#allocation5 + $0x92]]
          %v1848 = vstv %s1846
          %v1849 = vmul.f32 %v1848, %v1844
          %v1850 = vmul.f32 %v1848, %v1845
          %v1851 = vadd.f32 %v1826, %v1849
          %v1852 = vadd.f32 %v1827, %v1850
          %v1853 = vstv %s1847
          %v1854 = vmul.f32 %v1853, %v1844
          %v1855 = vmul.f32 %v1853, %v1845
          %v1856 = vadd.f32 %v1831, %v1854
          %v1857 = vadd.f32 %v1832, %v1855
          %v1858 = vld [vmem:[%s464] ss:$2 sm:$0x3]
          %v1860 = vperm.slane %v1858, 0
          %v1861 = vperm.slane %v1858, 1
          %v1864 = vsel %vm497, %v1860, 0.0
          %v1865 = vsel %vm498, %v1861, 0.0
          %s1866 = sld [smem:[#allocation5 + $0x31]]
          %s1867 = sld [smem:[#allocation5 + $0x93]]
          %v1868 = vstv %s1866
          %v1869 = vmul.f32 %v1868, %v1864
          %v1870 = vmul.f32 %v1868, %v1865
          %v1871 = vadd.f32 %v1851, %v1869
          %v1872 = vadd.f32 %v1852, %v1870
          %v1873 = vstv %s1867
          %v1874 = vmul.f32 %v1873, %v1864
          %v1875 = vmul.f32 %v1873, %v1865
          %v1876 = vadd.f32 %v1856, %v1874
          %v1877 = vadd.f32 %v1857, %v1875
          %v1878 = vld [vmem:[%s464] ss:$2 sm:$0x7]
          %v1880 = vperm.slane %v1878, 0
          %v1881 = vperm.slane %v1878, 1
          %v1882 = vperm.slane %v1878, 2
          %1883 = vrot.lane.b32.xlu0 %v1880, 127
          %v1884 = vpop.permute.xlu0 %1883
          %1885 = vrot.lane.b32.xlu0 %v1881, 127
          %v1886 = vpop.permute.xlu0 %1885
          %1887 = vrot.lane.b32.xlu0 %v1882, 127
          %v1888 = vpop.permute.xlu0 %1887
          %v1889 = vsel %vm566, %v1884, %v1886
          %v1890 = vsel %vm566, %v1886, %v1888
          %v1893 = vsel %vm503, %v1889, 0.0
          %v1894 = vsel %vm504, %v1890, 0.0
          %s1895 = sld [smem:[#allocation5 + $0x32]]
          %s1896 = sld [smem:[#allocation5 + $0x94]]
          %v1897 = vstv %s1895
          %v1898 = vmul.f32 %v1897, %v1893
          %v1899 = vmul.f32 %v1897, %v1894
          %v1900 = vadd.f32 %v1871, %v1898
          %v1901 = vadd.f32 %v1872, %v1899
          %v1902 = vstv %s1896
          %v1903 = vmul.f32 %v1902, %v1893
          %v1904 = vmul.f32 %v1902, %v1894
          %v1905 = vadd.f32 %v1876, %v1903
          %v1906 = vadd.f32 %v1877, %v1904
          %1907 = vrot.lane.b32.xlu0 %v1880, 126
          %v1908 = vpop.permute.xlu0 %1907
          %1909 = vrot.lane.b32.xlu0 %v1881, 126
          %v1910 = vpop.permute.xlu0 %1909
          %1911 = vrot.lane.b32.xlu0 %v1882, 126
          %v1912 = vpop.permute.xlu0 %1911
          %v1913 = vsel %vm591, %v1908, %v1910
          %v1914 = vsel %vm591, %v1910, %v1912
          %v1917 = vsel %vm509, %v1913, 0.0
          %v1918 = vsel %vm510, %v1914, 0.0
          %s1919 = sld [smem:[#allocation5 + $0x33]]
          %s1920 = sld [smem:[#allocation5 + $0x95]]
          %v1921 = vstv %s1919
          %v1922 = vmul.f32 %v1921, %v1917
          %v1923 = vmul.f32 %v1921, %v1918
          %v1924 = vadd.f32 %v1900, %v1922
          %v1925 = vadd.f32 %v1901, %v1923
          %v1926 = vstv %s1920
          %v1927 = vmul.f32 %v1926, %v1917
          %v1928 = vmul.f32 %v1926, %v1918
          %v1929 = vadd.f32 %v1905, %v1927
          %v1930 = vadd.f32 %v1906, %v1928
          %s1931 = sld [smem:[#allocation5 + $0x34]]
          %s1932 = sld [smem:[#allocation5 + $0x96]]
          %v1933 = vstv %s1931
          %v1934 = vmul.f32 %v1933, %v1878
          %v1936 = vperm.slane %v1934, 0
          %v1937 = vperm.slane %v1934, 1
          %v1938 = vperm.slane %v1934, 2
          %1939 = vrot.lane.b32.xlu0 %v1936, 125
          %v1940 = vpop.permute.xlu0 %1939
          %1941 = vrot.lane.b32.xlu0 %v1937, 125
          %v1942 = vpop.permute.xlu0 %1941
          %1943 = vrot.lane.b32.xlu0 %v1938, 125
          %v1944 = vpop.permute.xlu0 %1943
          %v1945 = vsel %vm624, %v1940, %v1942
          %v1946 = vsel %vm624, %v1942, %v1944
          %v1949 = vadd.f32 %v1924, %v1945
          %v1950 = vadd.f32 %v1925, %v1946
          %v1951 = vstv %s1932
          %v1952 = vmul.f32 %v1951, %v1878
          %v1954 = vperm.slane %v1952, 0
          %v1955 = vperm.slane %v1952, 1
          %v1956 = vperm.slane %v1952, 2
          %1957 = vrot.lane.b32.xlu0 %v1954, 125
          %v1958 = vpop.permute.xlu0 %1957
          %1959 = vrot.lane.b32.xlu0 %v1955, 125
          %v1960 = vpop.permute.xlu0 %1959
          %1961 = vrot.lane.b32.xlu0 %v1956, 125
          %v1962 = vpop.permute.xlu0 %1961
          %v1963 = vsel %vm624, %v1958, %v1960
          %v1964 = vsel %vm624, %v1960, %v1962
          %v1967 = vadd.f32 %v1929, %v1963
          %v1968 = vadd.f32 %v1930, %v1964
          %1969 = vrot.lane.b32.xlu0 %v1880, 124
          %v1970 = vpop.permute.xlu0 %1969
          %1971 = vrot.lane.b32.xlu0 %v1881, 124
          %v1972 = vpop.permute.xlu0 %1971
          %1973 = vrot.lane.b32.xlu0 %v1882, 124
          %v1974 = vpop.permute.xlu0 %1973
          %v1975 = vsel %vm655, %v1970, %v1972
          %v1976 = vsel %vm655, %v1972, %v1974
          %v1979 = vsel %vm515, %v1975, 0.0
          %v1980 = vsel %vm516, %v1976, 0.0
          %s1981 = sld [smem:[#allocation5 + $0x35]]
          %s1982 = sld [smem:[#allocation5 + $0x97]]
          %v1983 = vstv %s1981
          %v1984 = vmul.f32 %v1983, %v1979
          %v1985 = vmul.f32 %v1983, %v1980
          %v1986 = vadd.f32 %v1949, %v1984
          %v1987 = vadd.f32 %v1950, %v1985
          %v1988 = vstv %s1982
          %v1989 = vmul.f32 %v1988, %v1979
          %v1990 = vmul.f32 %v1988, %v1980
          %v1991 = vadd.f32 %v1967, %v1989
          %v1992 = vadd.f32 %v1968, %v1990
          %1993 = vrot.lane.b32.xlu0 %v1880, 123
          %v1994 = vpop.permute.xlu0 %1993
          %1995 = vrot.lane.b32.xlu0 %v1881, 123
          %v1996 = vpop.permute.xlu0 %1995
          %1997 = vrot.lane.b32.xlu0 %v1882, 123
          %v1998 = vpop.permute.xlu0 %1997
          %v1999 = vsel %vm680, %v1994, %v1996
          %v2000 = vsel %vm680, %v1996, %v1998
          %v2003 = vsel %vm521, %v1999, 0.0
          %v2004 = vsel %vm522, %v2000, 0.0
          %s2005 = sld [smem:[#allocation5 + $0x36]]
          %s2006 = sld [smem:[#allocation5 + $0x98]]
          %v2007 = vstv %s2005
          %v2008 = vmul.f32 %v2007, %v2003
          %v2009 = vmul.f32 %v2007, %v2004
          %v2010 = vadd.f32 %v1986, %v2008
          %v2011 = vadd.f32 %v1987, %v2009
          %v2012 = vstv %s2006
          %v2013 = vmul.f32 %v2012, %v2003
          %v2014 = vmul.f32 %v2012, %v2004
          %v2015 = vadd.f32 %v1991, %v2013
          %v2016 = vadd.f32 %v1992, %v2014
          %2017 = vrot.lane.b32.xlu0 %v1880, 122
          %v2018 = vpop.permute.xlu0 %2017
          %2019 = vrot.lane.b32.xlu0 %v1881, 122
          %v2020 = vpop.permute.xlu0 %2019
          %2021 = vrot.lane.b32.xlu0 %v1882, 122
          %v2022 = vpop.permute.xlu0 %2021
          %v2023 = vsel %vm705, %v2018, %v2020
          %v2024 = vsel %vm705, %v2020, %v2022
          %v2027 = vsel %vm527, %v2023, 0.0
          %v2028 = vsel %vm528, %v2024, 0.0
          %s2029 = sld [smem:[#allocation5 + $0x37]]
          %s2030 = sld [smem:[#allocation5 + $0x99]]
          %v2031 = vstv %s2029
          %v2032 = vmul.f32 %v2031, %v2027
          %v2033 = vmul.f32 %v2031, %v2028
          %v2034 = vadd.f32 %v2010, %v2032
          %v2035 = vadd.f32 %v2011, %v2033
          %v2036 = vstv %s2030
          %v2037 = vmul.f32 %v2036, %v2027
          %v2038 = vmul.f32 %v2036, %v2028
          %v2039 = vadd.f32 %v2015, %v2037
          %v2040 = vadd.f32 %v2016, %v2038
          %2041 = vrot.lane.b32.xlu0 %v1880, 112
          %v2042 = vpop.permute.xlu0 %2041
          %2043 = vrot.lane.b32.xlu0 %v1881, 112
          %v2044 = vpop.permute.xlu0 %2043
          %2045 = vrot.lane.b32.xlu0 %v1882, 112
          %v2046 = vpop.permute.xlu0 %2045
          %v2047 = vsel %vm730, %v2042, %v2044
          %v2048 = vsel %vm730, %v2044, %v2046
          %v2051 = vsel %vm497, %v2047, 0.0
          %v2052 = vsel %vm498, %v2048, 0.0
          %s2053 = sld [smem:[#allocation5 + $0x38]]
          %s2054 = sld [smem:[#allocation5 + $0x9a]]
          %v2055 = vstv %s2053
          %v2056 = vmul.f32 %v2055, %v2051
          %v2057 = vmul.f32 %v2055, %v2052
          %v2058 = vadd.f32 %v2034, %v2056
          %v2059 = vadd.f32 %v2035, %v2057
          %v2060 = vstv %s2054
          %v2061 = vmul.f32 %v2060, %v2051
          %v2062 = vmul.f32 %v2060, %v2052
          %v2063 = vadd.f32 %v2039, %v2061
          %v2064 = vadd.f32 %v2040, %v2062
          %2065 = vrot.lane.b32.xlu0 %v1880, 111
          %v2066 = vpop.permute.xlu0 %2065
          %2067 = vrot.lane.b32.xlu0 %v1881, 111
          %v2068 = vpop.permute.xlu0 %2067
          %2069 = vrot.lane.b32.xlu0 %v1882, 111
          %v2070 = vpop.permute.xlu0 %2069
          %v2071 = vsel %vm755, %v2066, %v2068
          %v2072 = vsel %vm755, %v2068, %v2070
          %v2075 = vsel %vm503, %v2071, 0.0
          %v2076 = vsel %vm504, %v2072, 0.0
          %s2077 = sld [smem:[#allocation5 + $0x39]]
          %s2078 = sld [smem:[#allocation5 + $0x9b]]
          %v2079 = vstv %s2077
          %v2080 = vmul.f32 %v2079, %v2075
          %v2081 = vmul.f32 %v2079, %v2076
          %v2082 = vadd.f32 %v2058, %v2080
          %v2083 = vadd.f32 %v2059, %v2081
          %v2084 = vstv %s2078
          %v2085 = vmul.f32 %v2084, %v2075
          %v2086 = vmul.f32 %v2084, %v2076
          %v2087 = vadd.f32 %v2063, %v2085
          %v2088 = vadd.f32 %v2064, %v2086
          %2089 = vrot.lane.b32.xlu0 %v1880, 110
          %v2090 = vpop.permute.xlu0 %2089
          %2091 = vrot.lane.b32.xlu0 %v1881, 110
          %v2092 = vpop.permute.xlu0 %2091
          %2093 = vrot.lane.b32.xlu0 %v1882, 110
          %v2094 = vpop.permute.xlu0 %2093
          %v2095 = vsel %vm780, %v2090, %v2092
          %v2096 = vsel %vm780, %v2092, %v2094
          %v2099 = vsel %vm509, %v2095, 0.0
          %v2100 = vsel %vm510, %v2096, 0.0
          %s2101 = sld [smem:[#allocation5 + $0x3a]]
          %s2102 = sld [smem:[#allocation5 + $0x9c]]
          %v2103 = vstv %s2101
          %v2104 = vmul.f32 %v2103, %v2099
          %v2105 = vmul.f32 %v2103, %v2100
          %v2106 = vadd.f32 %v2082, %v2104
          %v2107 = vadd.f32 %v2083, %v2105
          %v2108 = vstv %s2102
          %v2109 = vmul.f32 %v2108, %v2099
          %v2110 = vmul.f32 %v2108, %v2100
          %v2111 = vadd.f32 %v2087, %v2109
          %v2112 = vadd.f32 %v2088, %v2110
          %s2113 = sld [smem:[#allocation5 + $0x3b]]
          %s2114 = sld [smem:[#allocation5 + $0x9d]]
          %v2115 = vstv %s2113
          %v2116 = vmul.f32 %v2115, %v1878
          %v2118 = vperm.slane %v2116, 0
          %v2119 = vperm.slane %v2116, 1
          %v2120 = vperm.slane %v2116, 2
          %2121 = vrot.lane.b32.xlu0 %v2118, 109
          %v2122 = vpop.permute.xlu0 %2121
          %2123 = vrot.lane.b32.xlu0 %v2119, 109
          %v2124 = vpop.permute.xlu0 %2123
          %2125 = vrot.lane.b32.xlu0 %v2120, 109
          %v2126 = vpop.permute.xlu0 %2125
          %v2127 = vsel %vm813, %v2122, %v2124
          %v2128 = vsel %vm813, %v2124, %v2126
          %v2131 = vadd.f32 %v2106, %v2127
          %v2132 = vadd.f32 %v2107, %v2128
          %v2133 = vstv %s2114
          %v2134 = vmul.f32 %v2133, %v1878
          %v2136 = vperm.slane %v2134, 0
          %v2137 = vperm.slane %v2134, 1
          %v2138 = vperm.slane %v2134, 2
          %2139 = vrot.lane.b32.xlu0 %v2136, 109
          %v2140 = vpop.permute.xlu0 %2139
          %2141 = vrot.lane.b32.xlu0 %v2137, 109
          %v2142 = vpop.permute.xlu0 %2141
          %2143 = vrot.lane.b32.xlu0 %v2138, 109
          %v2144 = vpop.permute.xlu0 %2143
          %v2145 = vsel %vm813, %v2140, %v2142
          %v2146 = vsel %vm813, %v2142, %v2144
          %v2149 = vadd.f32 %v2111, %v2145
          %v2150 = vadd.f32 %v2112, %v2146
          %2151 = vrot.lane.b32.xlu0 %v1880, 108
          %v2152 = vpop.permute.xlu0 %2151
          %2153 = vrot.lane.b32.xlu0 %v1881, 108
          %v2154 = vpop.permute.xlu0 %2153
          %2155 = vrot.lane.b32.xlu0 %v1882, 108
          %v2156 = vpop.permute.xlu0 %2155
          %v2157 = vsel %vm844, %v2152, %v2154
          %v2158 = vsel %vm844, %v2154, %v2156
          %v2161 = vsel %vm515, %v2157, 0.0
          %v2162 = vsel %vm516, %v2158, 0.0
          %s2163 = sld [smem:[#allocation5 + $0x3c]]
          %s2164 = sld [smem:[#allocation5 + $0x9e]]
          %v2165 = vstv %s2163
          %v2166 = vmul.f32 %v2165, %v2161
          %v2167 = vmul.f32 %v2165, %v2162
          %v2168 = vadd.f32 %v2131, %v2166
          %v2169 = vadd.f32 %v2132, %v2167
          %v2170 = vstv %s2164
          %v2171 = vmul.f32 %v2170, %v2161
          %v2172 = vmul.f32 %v2170, %v2162
          %v2173 = vadd.f32 %v2149, %v2171
          %v2174 = vadd.f32 %v2150, %v2172
          %2175 = vrot.lane.b32.xlu0 %v1880, 107
          %v2176 = vpop.permute.xlu0 %2175
          %2177 = vrot.lane.b32.xlu0 %v1881, 107
          %v2178 = vpop.permute.xlu0 %2177
          %2179 = vrot.lane.b32.xlu0 %v1882, 107
          %v2180 = vpop.permute.xlu0 %2179
          %v2181 = vsel %vm869, %v2176, %v2178
          %v2182 = vsel %vm869, %v2178, %v2180
          %v2185 = vsel %vm521, %v2181, 0.0
          %v2186 = vsel %vm522, %v2182, 0.0
          %s2187 = sld [smem:[#allocation5 + $0x3d]]
          %s2188 = sld [smem:[#allocation5 + $0x9f]]
          %v2189 = vstv %s2187
          %v2190 = vmul.f32 %v2189, %v2185
          %v2191 = vmul.f32 %v2189, %v2186
          %v2192 = vadd.f32 %v2168, %v2190
          %v2193 = vadd.f32 %v2169, %v2191
          %v2194 = vstv %s2188
          %v2195 = vmul.f32 %v2194, %v2185
          %v2196 = vmul.f32 %v2194, %v2186
          %v2197 = vadd.f32 %v2173, %v2195
          %v2198 = vadd.f32 %v2174, %v2196
          %2199 = vrot.lane.b32.xlu0 %v1880, 106
          %v2200 = vpop.permute.xlu0 %2199
          %2201 = vrot.lane.b32.xlu0 %v1881, 106
          %v2202 = vpop.permute.xlu0 %2201
          %2203 = vrot.lane.b32.xlu0 %v1882, 106
          %v2204 = vpop.permute.xlu0 %2203
          %v2205 = vsel %vm894, %v2200, %v2202
          %v2206 = vsel %vm894, %v2202, %v2204
          %v2209 = vsel %vm527, %v2205, 0.0
          %v2210 = vsel %vm528, %v2206, 0.0
          %s2211 = sld [smem:[#allocation5 + $0x3e]]
          %s2212 = sld [smem:[#allocation5 + $0xa0]]
          %v2213 = vstv %s2211
          %v2214 = vmul.f32 %v2213, %v2209
          %v2215 = vmul.f32 %v2213, %v2210
          %v2216 = vadd.f32 %v2192, %v2214
          %v2217 = vadd.f32 %v2193, %v2215
          %v2218 = vstv %s2212
          %v2219 = vmul.f32 %v2218, %v2209
          %v2220 = vmul.f32 %v2218, %v2210
          %v2221 = vadd.f32 %v2197, %v2219
          %v2222 = vadd.f32 %v2198, %v2220
          %2223 = vrot.lane.b32.xlu0 %v1880, 96
          %v2224 = vpop.permute.xlu0 %2223
          %2225 = vrot.lane.b32.xlu0 %v1881, 96
          %v2226 = vpop.permute.xlu0 %2225
          %2227 = vrot.lane.b32.xlu0 %v1882, 96
          %v2228 = vpop.permute.xlu0 %2227
          %v2229 = vsel %vm919, %v2224, %v2226
          %v2230 = vsel %vm919, %v2226, %v2228
          %v2233 = vsel %vm497, %v2229, 0.0
          %v2234 = vsel %vm498, %v2230, 0.0
          %s2235 = sld [smem:[#allocation5 + $0x3f]]
          %s2236 = sld [smem:[#allocation5 + $0xa1]]
          %v2237 = vstv %s2235
          %v2238 = vmul.f32 %v2237, %v2233
          %v2239 = vmul.f32 %v2237, %v2234
          %v2240 = vadd.f32 %v2216, %v2238
          %v2241 = vadd.f32 %v2217, %v2239
          %v2242 = vstv %s2236
          %v2243 = vmul.f32 %v2242, %v2233
          %v2244 = vmul.f32 %v2242, %v2234
          %v2245 = vadd.f32 %v2221, %v2243
          %v2246 = vadd.f32 %v2222, %v2244
          %2247 = vrot.lane.b32.xlu0 %v1880, 95
          %v2248 = vpop.permute.xlu0 %2247
          %2249 = vrot.lane.b32.xlu0 %v1881, 95
          %v2250 = vpop.permute.xlu0 %2249
          %2251 = vrot.lane.b32.xlu0 %v1882, 95
          %v2252 = vpop.permute.xlu0 %2251
          %v2253 = vsel %vm944, %v2248, %v2250
          %v2254 = vsel %vm944, %v2250, %v2252
          %v2257 = vsel %vm503, %v2253, 0.0
          %v2258 = vsel %vm504, %v2254, 0.0
          %s2259 = sld [smem:[#allocation5 + $0x40]]
          %s2260 = sld [smem:[#allocation5 + $0xa2]]
          %v2261 = vstv %s2259
          %v2262 = vmul.f32 %v2261, %v2257
          %v2263 = vmul.f32 %v2261, %v2258
          %v2264 = vadd.f32 %v2240, %v2262
          %v2265 = vadd.f32 %v2241, %v2263
          %v2266 = vstv %s2260
          %v2267 = vmul.f32 %v2266, %v2257
          %v2268 = vmul.f32 %v2266, %v2258
          %v2269 = vadd.f32 %v2245, %v2267
          %v2270 = vadd.f32 %v2246, %v2268
          %2271 = vrot.lane.b32.xlu0 %v1880, 94
          %v2272 = vpop.permute.xlu0 %2271
          %2273 = vrot.lane.b32.xlu0 %v1881, 94
          %v2274 = vpop.permute.xlu0 %2273
          %2275 = vrot.lane.b32.xlu0 %v1882, 94
          %v2276 = vpop.permute.xlu0 %2275
          %v2277 = vsel %vm969, %v2272, %v2274
          %v2278 = vsel %vm969, %v2274, %v2276
          %v2281 = vsel %vm509, %v2277, 0.0
          %v2282 = vsel %vm510, %v2278, 0.0
          %s2283 = sld [smem:[#allocation5 + $0x41]]
          %s2284 = sld [smem:[#allocation5 + $0xa3]]
          %v2285 = vstv %s2283
          %v2286 = vmul.f32 %v2285, %v2281
          %v2287 = vmul.f32 %v2285, %v2282
          %v2288 = vadd.f32 %v2264, %v2286
          %v2289 = vadd.f32 %v2265, %v2287
          %v2290 = vstv %s2284
          %v2291 = vmul.f32 %v2290, %v2281
          %v2292 = vmul.f32 %v2290, %v2282
          %v2293 = vadd.f32 %v2269, %v2291
          %v2294 = vadd.f32 %v2270, %v2292
          %s2295 = sld [smem:[#allocation5 + $0x42]]
          %s2296 = sld [smem:[#allocation5 + $0xa4]]
          %v2297 = vstv %s2295
          %v2298 = vmul.f32 %v2297, %v1878
          %v2300 = vperm.slane %v2298, 0
          %v2301 = vperm.slane %v2298, 1
          %v2302 = vperm.slane %v2298, 2
          %2303 = vrot.lane.b32.xlu0 %v2300, 93
          %v2304 = vpop.permute.xlu0 %2303
          %2305 = vrot.lane.b32.xlu0 %v2301, 93
          %v2306 = vpop.permute.xlu0 %2305
          %2307 = vrot.lane.b32.xlu0 %v2302, 93
          %v2308 = vpop.permute.xlu0 %2307
          %v2309 = vsel %vm1002, %v2304, %v2306
          %v2310 = vsel %vm1002, %v2306, %v2308
          %v2313 = vadd.f32 %v2288, %v2309
          %v2314 = vadd.f32 %v2289, %v2310
          %v2315 = vstv %s2296
          %v2316 = vmul.f32 %v2315, %v1878
          %v2318 = vperm.slane %v2316, 0
          %v2319 = vperm.slane %v2316, 1
          %v2320 = vperm.slane %v2316, 2
          %2321 = vrot.lane.b32.xlu0 %v2318, 93
          %v2322 = vpop.permute.xlu0 %2321
          %2323 = vrot.lane.b32.xlu0 %v2319, 93
          %v2324 = vpop.permute.xlu0 %2323
          %2325 = vrot.lane.b32.xlu0 %v2320, 93
          %v2326 = vpop.permute.xlu0 %2325
          %v2327 = vsel %vm1002, %v2322, %v2324
          %v2328 = vsel %vm1002, %v2324, %v2326
          %v2331 = vadd.f32 %v2293, %v2327
          %v2332 = vadd.f32 %v2294, %v2328
          %2333 = vrot.lane.b32.xlu0 %v1880, 92
          %v2334 = vpop.permute.xlu0 %2333
          %2335 = vrot.lane.b32.xlu0 %v1881, 92
          %v2336 = vpop.permute.xlu0 %2335
          %2337 = vrot.lane.b32.xlu0 %v1882, 92
          %v2338 = vpop.permute.xlu0 %2337
          %v2339 = vsel %vm1033, %v2334, %v2336
          %v2340 = vsel %vm1033, %v2336, %v2338
          %v2343 = vsel %vm515, %v2339, 0.0
          %v2344 = vsel %vm516, %v2340, 0.0
          %s2345 = sld [smem:[#allocation5 + $0x43]]
          %s2346 = sld [smem:[#allocation5 + $0xa5]]
          %v2347 = vstv %s2345
          %v2348 = vmul.f32 %v2347, %v2343
          %v2349 = vmul.f32 %v2347, %v2344
          %v2350 = vadd.f32 %v2313, %v2348
          %v2351 = vadd.f32 %v2314, %v2349
          %v2352 = vstv %s2346
          %v2353 = vmul.f32 %v2352, %v2343
          %v2354 = vmul.f32 %v2352, %v2344
          %v2355 = vadd.f32 %v2331, %v2353
          %v2356 = vadd.f32 %v2332, %v2354
          %2357 = vrot.lane.b32.xlu0 %v1880, 91
          %v2358 = vpop.permute.xlu0 %2357
          %2359 = vrot.lane.b32.xlu0 %v1881, 91
          %v2360 = vpop.permute.xlu0 %2359
          %2361 = vrot.lane.b32.xlu0 %v1882, 91
          %v2362 = vpop.permute.xlu0 %2361
          %v2363 = vsel %vm1058, %v2358, %v2360
          %v2364 = vsel %vm1058, %v2360, %v2362
          %v2367 = vsel %vm521, %v2363, 0.0
          %v2368 = vsel %vm522, %v2364, 0.0
          %s2369 = sld [smem:[#allocation5 + $0x44]]
          %s2370 = sld [smem:[#allocation5 + $0xa6]]
          %v2371 = vstv %s2369
          %v2372 = vmul.f32 %v2371, %v2367
          %v2373 = vmul.f32 %v2371, %v2368
          %v2374 = vadd.f32 %v2350, %v2372
          %v2375 = vadd.f32 %v2351, %v2373
          %v2376 = vstv %s2370
          %v2377 = vmul.f32 %v2376, %v2367
          %v2378 = vmul.f32 %v2376, %v2368
          %v2379 = vadd.f32 %v2355, %v2377
          %v2380 = vadd.f32 %v2356, %v2378
          %2381 = vrot.lane.b32.xlu0 %v1880, 90
          %v2382 = vpop.permute.xlu0 %2381
          %2383 = vrot.lane.b32.xlu0 %v1881, 90
          %v2384 = vpop.permute.xlu0 %2383
          %2385 = vrot.lane.b32.xlu0 %v1882, 90
          %v2386 = vpop.permute.xlu0 %2385
          %v2387 = vsel %vm1083, %v2382, %v2384
          %v2388 = vsel %vm1083, %v2384, %v2386
          %v2391 = vsel %vm527, %v2387, 0.0
          %v2392 = vsel %vm528, %v2388, 0.0
          %s2393 = sld [smem:[#allocation5 + $0x45]]
          %s2394 = sld [smem:[#allocation5 + $0xa7]]
          %v2395 = vstv %s2393
          %v2396 = vmul.f32 %v2395, %v2391
          %v2397 = vmul.f32 %v2395, %v2392
          %v2398 = vadd.f32 %v2374, %v2396
          %v2399 = vadd.f32 %v2375, %v2397
          %v2400 = vstv %s2394
          %v2401 = vmul.f32 %v2400, %v2391
          %v2402 = vmul.f32 %v2400, %v2392
          %v2403 = vadd.f32 %v2379, %v2401
          %v2404 = vadd.f32 %v2380, %v2402
          %2405 = vrot.lane.b32.xlu0 %v1880, 80
          %v2406 = vpop.permute.xlu0 %2405
          %2407 = vrot.lane.b32.xlu0 %v1881, 80
          %v2408 = vpop.permute.xlu0 %2407
          %2409 = vrot.lane.b32.xlu0 %v1882, 80
          %v2410 = vpop.permute.xlu0 %2409
          %v2411 = vsel %vm1108, %v2406, %v2408
          %v2412 = vsel %vm1108, %v2408, %v2410
          %v2415 = vsel %vm497, %v2411, 0.0
          %v2416 = vsel %vm498, %v2412, 0.0
          %s2417 = sld [smem:[#allocation5 + $0x46]]
          %s2418 = sld [smem:[#allocation5 + $0xa8]]
          %v2419 = vstv %s2417
          %v2420 = vmul.f32 %v2419, %v2415
          %v2421 = vmul.f32 %v2419, %v2416
          %v2422 = vadd.f32 %v2398, %v2420
          %v2423 = vadd.f32 %v2399, %v2421
          %v2424 = vstv %s2418
          %v2425 = vmul.f32 %v2424, %v2415
          %v2426 = vmul.f32 %v2424, %v2416
          %v2427 = vadd.f32 %v2403, %v2425
          %v2428 = vadd.f32 %v2404, %v2426
          %2429 = vrot.lane.b32.xlu0 %v1880, 79
          %v2430 = vpop.permute.xlu0 %2429
          %2431 = vrot.lane.b32.xlu0 %v1881, 79
          %v2432 = vpop.permute.xlu0 %2431
          %2433 = vrot.lane.b32.xlu0 %v1882, 79
          %v2434 = vpop.permute.xlu0 %2433
          %v2435 = vsel %vm1133, %v2430, %v2432
          %v2436 = vsel %vm1133, %v2432, %v2434
          %v2439 = vsel %vm503, %v2435, 0.0
          %v2440 = vsel %vm504, %v2436, 0.0
          %s2441 = sld [smem:[#allocation5 + $0x47]]
          %s2442 = sld [smem:[#allocation5 + $0xa9]]
          %v2443 = vstv %s2441
          %v2444 = vmul.f32 %v2443, %v2439
          %v2445 = vmul.f32 %v2443, %v2440
          %v2446 = vadd.f32 %v2422, %v2444
          %v2447 = vadd.f32 %v2423, %v2445
          %v2448 = vstv %s2442
          %v2449 = vmul.f32 %v2448, %v2439
          %v2450 = vmul.f32 %v2448, %v2440
          %v2451 = vadd.f32 %v2427, %v2449
          %v2452 = vadd.f32 %v2428, %v2450
          %2453 = vrot.lane.b32.xlu0 %v1880, 78
          %v2454 = vpop.permute.xlu0 %2453
          %2455 = vrot.lane.b32.xlu0 %v1881, 78
          %v2456 = vpop.permute.xlu0 %2455
          %2457 = vrot.lane.b32.xlu0 %v1882, 78
          %v2458 = vpop.permute.xlu0 %2457
          %v2459 = vsel %vm1158, %v2454, %v2456
          %v2460 = vsel %vm1158, %v2456, %v2458
          %v2463 = vsel %vm509, %v2459, 0.0
          %v2464 = vsel %vm510, %v2460, 0.0
          %s2465 = sld [smem:[#allocation5 + $0x48]]
          %s2466 = sld [smem:[#allocation5 + $0xaa]]
          %v2467 = vstv %s2465
          %v2468 = vmul.f32 %v2467, %v2463
          %v2469 = vmul.f32 %v2467, %v2464
          %v2470 = vadd.f32 %v2446, %v2468
          %v2471 = vadd.f32 %v2447, %v2469
          %v2472 = vstv %s2466
          %v2473 = vmul.f32 %v2472, %v2463
          %v2474 = vmul.f32 %v2472, %v2464
          %v2475 = vadd.f32 %v2451, %v2473
          %v2476 = vadd.f32 %v2452, %v2474
          %s2477 = sld [smem:[#allocation5 + $0x49]]
          %s2478 = sld [smem:[#allocation5 + $0xab]]
          %v2479 = vstv %s2477
          %v2480 = vmul.f32 %v2479, %v1878
          %v2482 = vperm.slane %v2480, 0
          %v2483 = vperm.slane %v2480, 1
          %v2484 = vperm.slane %v2480, 2
          %2485 = vrot.lane.b32.xlu0 %v2482, 77
          %v2486 = vpop.permute.xlu0 %2485
          %2487 = vrot.lane.b32.xlu0 %v2483, 77
          %v2488 = vpop.permute.xlu0 %2487
          %2489 = vrot.lane.b32.xlu0 %v2484, 77
          %v2490 = vpop.permute.xlu0 %2489
          %v2491 = vsel %vm1191, %v2486, %v2488
          %v2492 = vsel %vm1191, %v2488, %v2490
          %v2495 = vadd.f32 %v2470, %v2491
          %v2496 = vadd.f32 %v2471, %v2492
          %v2497 = vstv %s2478
          %v2498 = vmul.f32 %v2497, %v1878
          %v2500 = vperm.slane %v2498, 0
          %v2501 = vperm.slane %v2498, 1
          %v2502 = vperm.slane %v2498, 2
          %2503 = vrot.lane.b32.xlu0 %v2500, 77
          %v2504 = vpop.permute.xlu0 %2503
          %2505 = vrot.lane.b32.xlu0 %v2501, 77
          %v2506 = vpop.permute.xlu0 %2505
          %2507 = vrot.lane.b32.xlu0 %v2502, 77
          %v2508 = vpop.permute.xlu0 %2507
          %v2509 = vsel %vm1191, %v2504, %v2506
          %v2510 = vsel %vm1191, %v2506, %v2508
          %v2513 = vadd.f32 %v2475, %v2509
          %v2514 = vadd.f32 %v2476, %v2510
          %2515 = vrot.lane.b32.xlu0 %v1880, 76
          %v2516 = vpop.permute.xlu0 %2515
          %2517 = vrot.lane.b32.xlu0 %v1881, 76
          %v2518 = vpop.permute.xlu0 %2517
          %2519 = vrot.lane.b32.xlu0 %v1882, 76
          %v2520 = vpop.permute.xlu0 %2519
          %v2521 = vsel %vm1222, %v2516, %v2518
          %v2522 = vsel %vm1222, %v2518, %v2520
          %v2525 = vsel %vm515, %v2521, 0.0
          %v2526 = vsel %vm516, %v2522, 0.0
          %s2527 = sld [smem:[#allocation5 + $0x4a]]
          %s2528 = sld [smem:[#allocation5 + $0xac]]
          %v2529 = vstv %s2527
          %v2530 = vmul.f32 %v2529, %v2525
          %v2531 = vmul.f32 %v2529, %v2526
          %v2532 = vadd.f32 %v2495, %v2530
          %v2533 = vadd.f32 %v2496, %v2531
          %v2534 = vstv %s2528
          %v2535 = vmul.f32 %v2534, %v2525
          %v2536 = vmul.f32 %v2534, %v2526
          %v2537 = vadd.f32 %v2513, %v2535
          %v2538 = vadd.f32 %v2514, %v2536
          %2539 = vrot.lane.b32.xlu0 %v1880, 75
          %v2540 = vpop.permute.xlu0 %2539
          %2541 = vrot.lane.b32.xlu0 %v1881, 75
          %v2542 = vpop.permute.xlu0 %2541
          %2543 = vrot.lane.b32.xlu0 %v1882, 75
          %v2544 = vpop.permute.xlu0 %2543
          %v2545 = vsel %vm1247, %v2540, %v2542
          %v2546 = vsel %vm1247, %v2542, %v2544
          %v2549 = vsel %vm521, %v2545, 0.0
          %v2550 = vsel %vm522, %v2546, 0.0
          %s2551 = sld [smem:[#allocation5 + $0x4b]]
          %s2552 = sld [smem:[#allocation5 + $0xad]]
          %v2553 = vstv %s2551
          %v2554 = vmul.f32 %v2553, %v2549
          %v2555 = vmul.f32 %v2553, %v2550
          %v2556 = vadd.f32 %v2532, %v2554
          %v2557 = vadd.f32 %v2533, %v2555
          %v2558 = vstv %s2552
          %v2559 = vmul.f32 %v2558, %v2549
          %v2560 = vmul.f32 %v2558, %v2550
          %v2561 = vadd.f32 %v2537, %v2559
          %v2562 = vadd.f32 %v2538, %v2560
          %2563 = vrot.lane.b32.xlu0 %v1880, 74
          %v2564 = vpop.permute.xlu0 %2563
          %2565 = vrot.lane.b32.xlu0 %v1881, 74
          %v2566 = vpop.permute.xlu0 %2565
          %2567 = vrot.lane.b32.xlu0 %v1882, 74
          %v2568 = vpop.permute.xlu0 %2567
          %v2569 = vsel %vm1272, %v2564, %v2566
          %v2570 = vsel %vm1272, %v2566, %v2568
          %v2573 = vsel %vm527, %v2569, 0.0
          %v2574 = vsel %vm528, %v2570, 0.0
          %s2575 = sld [smem:[#allocation5 + $0x4c]]
          %s2576 = sld [smem:[#allocation5 + $0xae]]
          %v2577 = vstv %s2575
          %v2578 = vmul.f32 %v2577, %v2573
          %v2579 = vmul.f32 %v2577, %v2574
          %v2580 = vadd.f32 %v2556, %v2578
          %v2581 = vadd.f32 %v2557, %v2579
          %v2582 = vstv %s2576
          %v2583 = vmul.f32 %v2582, %v2573
          %v2584 = vmul.f32 %v2582, %v2574
          %v2585 = vadd.f32 %v2561, %v2583
          %v2586 = vadd.f32 %v2562, %v2584
          %2587 = vrot.lane.b32.xlu0 %v1880, 64
          %v2588 = vpop.permute.xlu0 %2587
          %2589 = vrot.lane.b32.xlu0 %v1881, 64
          %v2590 = vpop.permute.xlu0 %2589
          %2591 = vrot.lane.b32.xlu0 %v1882, 64
          %v2592 = vpop.permute.xlu0 %2591
          %v2593 = vsel %vm1297, %v2588, %v2590
          %v2594 = vsel %vm1297, %v2590, %v2592
          %v2597 = vsel %vm497, %v2593, 0.0
          %v2598 = vsel %vm498, %v2594, 0.0
          %s2599 = sld [smem:[#allocation5 + $0x4d]]
          %s2600 = sld [smem:[#allocation5 + $0xaf]]
          %v2601 = vstv %s2599
          %v2602 = vmul.f32 %v2601, %v2597
          %v2603 = vmul.f32 %v2601, %v2598
          %v2604 = vadd.f32 %v2580, %v2602
          %v2605 = vadd.f32 %v2581, %v2603
          %v2606 = vstv %s2600
          %v2607 = vmul.f32 %v2606, %v2597
          %v2608 = vmul.f32 %v2606, %v2598
          %v2609 = vadd.f32 %v2585, %v2607
          %v2610 = vadd.f32 %v2586, %v2608
          %2611 = vrot.lane.b32.xlu0 %v1880, 63
          %v2612 = vpop.permute.xlu0 %2611
          %2613 = vrot.lane.b32.xlu0 %v1881, 63
          %v2614 = vpop.permute.xlu0 %2613
          %2615 = vrot.lane.b32.xlu0 %v1882, 63
          %v2616 = vpop.permute.xlu0 %2615
          %v2617 = vsel %vm1322, %v2612, %v2614
          %v2618 = vsel %vm1322, %v2614, %v2616
          %v2621 = vsel %vm503, %v2617, 0.0
          %v2622 = vsel %vm504, %v2618, 0.0
          %s2623 = sld [smem:[#allocation5 + $0x4e]]
          %s2624 = sld [smem:[#allocation5 + $0xb0]]
          %v2625 = vstv %s2623
          %v2626 = vmul.f32 %v2625, %v2621
          %v2627 = vmul.f32 %v2625, %v2622
          %v2628 = vadd.f32 %v2604, %v2626
          %v2629 = vadd.f32 %v2605, %v2627
          %v2630 = vstv %s2624
          %v2631 = vmul.f32 %v2630, %v2621
          %v2632 = vmul.f32 %v2630, %v2622
          %v2633 = vadd.f32 %v2609, %v2631
          %v2634 = vadd.f32 %v2610, %v2632
          %2635 = vrot.lane.b32.xlu0 %v1880, 62
          %v2636 = vpop.permute.xlu0 %2635
          %2637 = vrot.lane.b32.xlu0 %v1881, 62
          %v2638 = vpop.permute.xlu0 %2637
          %2639 = vrot.lane.b32.xlu0 %v1882, 62
          %v2640 = vpop.permute.xlu0 %2639
          %v2641 = vsel %vm1347, %v2636, %v2638
          %v2642 = vsel %vm1347, %v2638, %v2640
          %v2645 = vsel %vm509, %v2641, 0.0
          %v2646 = vsel %vm510, %v2642, 0.0
          %s2647 = sld [smem:[#allocation5 + $0x4f]]
          %s2648 = sld [smem:[#allocation5 + $0xb1]]
          %v2649 = vstv %s2647
          %v2650 = vmul.f32 %v2649, %v2645
          %v2651 = vmul.f32 %v2649, %v2646
          %v2652 = vadd.f32 %v2628, %v2650
          %v2653 = vadd.f32 %v2629, %v2651
          %v2654 = vstv %s2648
          %v2655 = vmul.f32 %v2654, %v2645
          %v2656 = vmul.f32 %v2654, %v2646
          %v2657 = vadd.f32 %v2633, %v2655
          %v2658 = vadd.f32 %v2634, %v2656
          %s2659 = sld [smem:[#allocation5 + $0x50]]
          %s2660 = sld [smem:[#allocation5 + $0xb2]]
          %v2661 = vstv %s2659
          %v2662 = vmul.f32 %v2661, %v1878
          %v2664 = vperm.slane %v2662, 0
          %v2665 = vperm.slane %v2662, 1
          %v2666 = vperm.slane %v2662, 2
          %2667 = vrot.lane.b32.xlu0 %v2664, 61
          %v2668 = vpop.permute.xlu0 %2667
          %2669 = vrot.lane.b32.xlu0 %v2665, 61
          %v2670 = vpop.permute.xlu0 %2669
          %2671 = vrot.lane.b32.xlu0 %v2666, 61
          %v2672 = vpop.permute.xlu0 %2671
          %v2673 = vsel %vm1380, %v2668, %v2670
          %v2674 = vsel %vm1380, %v2670, %v2672
          %v2677 = vadd.f32 %v2652, %v2673
          %v2678 = vadd.f32 %v2653, %v2674
          %v2679 = vstv %s2660
          %v2680 = vmul.f32 %v2679, %v1878
          %v2682 = vperm.slane %v2680, 0
          %v2683 = vperm.slane %v2680, 1
          %v2684 = vperm.slane %v2680, 2
          %2685 = vrot.lane.b32.xlu0 %v2682, 61
          %v2686 = vpop.permute.xlu0 %2685
          %2687 = vrot.lane.b32.xlu0 %v2683, 61
          %v2688 = vpop.permute.xlu0 %2687
          %2689 = vrot.lane.b32.xlu0 %v2684, 61
          %v2690 = vpop.permute.xlu0 %2689
          %v2691 = vsel %vm1380, %v2686, %v2688
          %v2692 = vsel %vm1380, %v2688, %v2690
          %v2695 = vadd.f32 %v2657, %v2691
          %v2696 = vadd.f32 %v2658, %v2692
          %2697 = vrot.lane.b32.xlu0 %v1880, 60
          %v2698 = vpop.permute.xlu0 %2697
          %2699 = vrot.lane.b32.xlu0 %v1881, 60
          %v2700 = vpop.permute.xlu0 %2699
          %2701 = vrot.lane.b32.xlu0 %v1882, 60
          %v2702 = vpop.permute.xlu0 %2701
          %v2703 = vsel %vm1411, %v2698, %v2700
          %v2704 = vsel %vm1411, %v2700, %v2702
          %v2707 = vsel %vm515, %v2703, 0.0
          %v2708 = vsel %vm516, %v2704, 0.0
          %s2709 = sld [smem:[#allocation5 + $0x51]]
          %s2710 = sld [smem:[#allocation5 + $0xb3]]
          %v2711 = vstv %s2709
          %v2712 = vmul.f32 %v2711, %v2707
          %v2713 = vmul.f32 %v2711, %v2708
          %v2714 = vadd.f32 %v2677, %v2712
          %v2715 = vadd.f32 %v2678, %v2713
          %v2716 = vstv %s2710
          %v2717 = vmul.f32 %v2716, %v2707
          %v2718 = vmul.f32 %v2716, %v2708
          %v2719 = vadd.f32 %v2695, %v2717
          %v2720 = vadd.f32 %v2696, %v2718
          %2721 = vrot.lane.b32.xlu0 %v1880, 59
          %v2722 = vpop.permute.xlu0 %2721
          %2723 = vrot.lane.b32.xlu0 %v1881, 59
          %v2724 = vpop.permute.xlu0 %2723
          %2725 = vrot.lane.b32.xlu0 %v1882, 59
          %v2726 = vpop.permute.xlu0 %2725
          %v2727 = vsel %vm1436, %v2722, %v2724
          %v2728 = vsel %vm1436, %v2724, %v2726
          %v2731 = vsel %vm521, %v2727, 0.0
          %v2732 = vsel %vm522, %v2728, 0.0
          %s2733 = sld [smem:[#allocation5 + $0x52]]
          %s2734 = sld [smem:[#allocation5 + $0xb4]]
          %v2735 = vstv %s2733
          %v2736 = vmul.f32 %v2735, %v2731
          %v2737 = vmul.f32 %v2735, %v2732
          %v2738 = vadd.f32 %v2714, %v2736
          %v2739 = vadd.f32 %v2715, %v2737
          %v2740 = vstv %s2734
          %v2741 = vmul.f32 %v2740, %v2731
          %v2742 = vmul.f32 %v2740, %v2732
          %v2743 = vadd.f32 %v2719, %v2741
          %v2744 = vadd.f32 %v2720, %v2742
          %2745 = vrot.lane.b32.xlu0 %v1880, 58
          %v2746 = vpop.permute.xlu0 %2745
          %2747 = vrot.lane.b32.xlu0 %v1881, 58
          %v2748 = vpop.permute.xlu0 %2747
          %2749 = vrot.lane.b32.xlu0 %v1882, 58
          %v2750 = vpop.permute.xlu0 %2749
          %v2751 = vsel %vm1461, %v2746, %v2748
          %v2752 = vsel %vm1461, %v2748, %v2750
          %v2755 = vsel %vm527, %v2751, 0.0
          %v2756 = vsel %vm528, %v2752, 0.0
          %s2757 = sld [smem:[#allocation5 + $0x53]]
          %s2758 = sld [smem:[#allocation5 + $0xb5]]
          %v2759 = vstv %s2757
          %v2760 = vmul.f32 %v2759, %v2755
          %v2761 = vmul.f32 %v2759, %v2756
          %v2762 = vadd.f32 %v2738, %v2760
          %v2763 = vadd.f32 %v2739, %v2761
          %v2764 = vstv %s2758
          %v2765 = vmul.f32 %v2764, %v2755
          %v2766 = vmul.f32 %v2764, %v2756
          %v2767 = vadd.f32 %v2743, %v2765
          %v2768 = vadd.f32 %v2744, %v2766
          %2769 = vrot.lane.b32.xlu0 %v1880, 48
          %v2770 = vpop.permute.xlu0 %2769
          %2771 = vrot.lane.b32.xlu0 %v1881, 48
          %v2772 = vpop.permute.xlu0 %2771
          %2773 = vrot.lane.b32.xlu0 %v1882, 48
          %v2774 = vpop.permute.xlu0 %2773
          %v2775 = vsel %vm1486, %v2770, %v2772
          %v2776 = vsel %vm1486, %v2772, %v2774
          %v2779 = vsel %vm497, %v2775, 0.0
          %v2780 = vsel %vm498, %v2776, 0.0
          %s2781 = sld [smem:[#allocation5 + $0x54]]
          %s2782 = sld [smem:[#allocation5 + $0xb6]]
          %v2783 = vstv %s2781
          %v2784 = vmul.f32 %v2783, %v2779
          %v2785 = vmul.f32 %v2783, %v2780
          %v2786 = vadd.f32 %v2762, %v2784
          %v2787 = vadd.f32 %v2763, %v2785
          %v2788 = vstv %s2782
          %v2789 = vmul.f32 %v2788, %v2779
          %v2790 = vmul.f32 %v2788, %v2780
          %v2791 = vadd.f32 %v2767, %v2789
          %v2792 = vadd.f32 %v2768, %v2790
          %2793 = vrot.lane.b32.xlu0 %v1880, 47
          %v2794 = vpop.permute.xlu0 %2793
          %2795 = vrot.lane.b32.xlu0 %v1881, 47
          %v2796 = vpop.permute.xlu0 %2795
          %2797 = vrot.lane.b32.xlu0 %v1882, 47
          %v2798 = vpop.permute.xlu0 %2797
          %v2799 = vsel %vm1511, %v2794, %v2796
          %v2800 = vsel %vm1511, %v2796, %v2798
          %v2803 = vsel %vm503, %v2799, 0.0
          %v2804 = vsel %vm504, %v2800, 0.0
          %s2805 = sld [smem:[#allocation5 + $0x55]]
          %s2806 = sld [smem:[#allocation5 + $0xb7]]
          %v2807 = vstv %s2805
          %v2808 = vmul.f32 %v2807, %v2803
          %v2809 = vmul.f32 %v2807, %v2804
          %v2810 = vadd.f32 %v2786, %v2808
          %v2811 = vadd.f32 %v2787, %v2809
          %v2812 = vstv %s2806
          %v2813 = vmul.f32 %v2812, %v2803
          %v2814 = vmul.f32 %v2812, %v2804
          %v2815 = vadd.f32 %v2791, %v2813
          %v2816 = vadd.f32 %v2792, %v2814
          %2817 = vrot.lane.b32.xlu0 %v1880, 46
          %v2818 = vpop.permute.xlu0 %2817
          %2819 = vrot.lane.b32.xlu0 %v1881, 46
          %v2820 = vpop.permute.xlu0 %2819
          %2821 = vrot.lane.b32.xlu0 %v1882, 46
          %v2822 = vpop.permute.xlu0 %2821
          %v2823 = vsel %vm1536, %v2818, %v2820
          %v2824 = vsel %vm1536, %v2820, %v2822
          %v2827 = vsel %vm509, %v2823, 0.0
          %v2828 = vsel %vm510, %v2824, 0.0
          %s2829 = sld [smem:[#allocation5 + $0x56]]
          %s2830 = sld [smem:[#allocation5 + $0xb8]]
          %v2831 = vstv %s2829
          %v2832 = vmul.f32 %v2831, %v2827
          %v2833 = vmul.f32 %v2831, %v2828
          %v2834 = vadd.f32 %v2810, %v2832
          %v2835 = vadd.f32 %v2811, %v2833
          %v2836 = vstv %s2830
          %v2837 = vmul.f32 %v2836, %v2827
          %v2838 = vmul.f32 %v2836, %v2828
          %v2839 = vadd.f32 %v2815, %v2837
          %v2840 = vadd.f32 %v2816, %v2838
          %s2841 = sld [smem:[#allocation5 + $0x57]]
          %s2842 = sld [smem:[#allocation5 + $0xb9]]
          %v2843 = vstv %s2841
          %v2844 = vmul.f32 %v2843, %v1878
          %v2846 = vperm.slane %v2844, 0
          %v2847 = vperm.slane %v2844, 1
          %v2848 = vperm.slane %v2844, 2
          %2849 = vrot.lane.b32.xlu0 %v2846, 45
          %v2850 = vpop.permute.xlu0 %2849
          %2851 = vrot.lane.b32.xlu0 %v2847, 45
          %v2852 = vpop.permute.xlu0 %2851
          %2853 = vrot.lane.b32.xlu0 %v2848, 45
          %v2854 = vpop.permute.xlu0 %2853
          %v2855 = vsel %vm1569, %v2850, %v2852
          %v2856 = vsel %vm1569, %v2852, %v2854
          %v2859 = vadd.f32 %v2834, %v2855
          %v2860 = vadd.f32 %v2835, %v2856
          %v2861 = vstv %s2842
          %v2862 = vmul.f32 %v2861, %v1878
          %v2864 = vperm.slane %v2862, 0
          %v2865 = vperm.slane %v2862, 1
          %v2866 = vperm.slane %v2862, 2
          %2867 = vrot.lane.b32.xlu0 %v2864, 45
          %v2868 = vpop.permute.xlu0 %2867
          %2869 = vrot.lane.b32.xlu0 %v2865, 45
          %v2870 = vpop.permute.xlu0 %2869
          %2871 = vrot.lane.b32.xlu0 %v2866, 45
          %v2872 = vpop.permute.xlu0 %2871
          %v2873 = vsel %vm1569, %v2868, %v2870
          %v2874 = vsel %vm1569, %v2870, %v2872
          %v2877 = vadd.f32 %v2839, %v2873
          %v2878 = vadd.f32 %v2840, %v2874
          %2879 = vrot.lane.b32.xlu0 %v1880, 44
          %v2880 = vpop.permute.xlu0 %2879
          %2881 = vrot.lane.b32.xlu0 %v1881, 44
          %v2882 = vpop.permute.xlu0 %2881
          %2883 = vrot.lane.b32.xlu0 %v1882, 44
          %v2884 = vpop.permute.xlu0 %2883
          %v2885 = vsel %vm1600, %v2880, %v2882
          %v2886 = vsel %vm1600, %v2882, %v2884
          %v2889 = vsel %vm515, %v2885, 0.0
          %v2890 = vsel %vm516, %v2886, 0.0
          %s2891 = sld [smem:[#allocation5 + $0x58]]
          %s2892 = sld [smem:[#allocation5 + $0xba]]
          %v2893 = vstv %s2891
          %v2894 = vmul.f32 %v2893, %v2889
          %v2895 = vmul.f32 %v2893, %v2890
          %v2896 = vadd.f32 %v2859, %v2894
          %v2897 = vadd.f32 %v2860, %v2895
          %v2898 = vstv %s2892
          %v2899 = vmul.f32 %v2898, %v2889
          %v2900 = vmul.f32 %v2898, %v2890
          %v2901 = vadd.f32 %v2877, %v2899
          %v2902 = vadd.f32 %v2878, %v2900
          %2903 = vrot.lane.b32.xlu0 %v1880, 43
          %v2904 = vpop.permute.xlu0 %2903
          %2905 = vrot.lane.b32.xlu0 %v1881, 43
          %v2906 = vpop.permute.xlu0 %2905
          %2907 = vrot.lane.b32.xlu0 %v1882, 43
          %v2908 = vpop.permute.xlu0 %2907
          %v2909 = vsel %vm1625, %v2904, %v2906
          %v2910 = vsel %vm1625, %v2906, %v2908
          %v2913 = vsel %vm521, %v2909, 0.0
          %v2914 = vsel %vm522, %v2910, 0.0
          %s2915 = sld [smem:[#allocation5 + $0x59]]
          %s2916 = sld [smem:[#allocation5 + $0xbb]]
          %v2917 = vstv %s2915
          %v2918 = vmul.f32 %v2917, %v2913
          %v2919 = vmul.f32 %v2917, %v2914
          %v2920 = vadd.f32 %v2896, %v2918
          %v2921 = vadd.f32 %v2897, %v2919
          %v2922 = vstv %s2916
          %v2923 = vmul.f32 %v2922, %v2913
          %v2924 = vmul.f32 %v2922, %v2914
          %v2925 = vadd.f32 %v2901, %v2923
          %v2926 = vadd.f32 %v2902, %v2924
          %2927 = vrot.lane.b32.xlu0 %v1880, 42
          %v2928 = vpop.permute.xlu0 %2927
          %2929 = vrot.lane.b32.xlu0 %v1881, 42
          %v2930 = vpop.permute.xlu0 %2929
          %2931 = vrot.lane.b32.xlu0 %v1882, 42
          %v2932 = vpop.permute.xlu0 %2931
          %v2933 = vsel %vm1650, %v2928, %v2930
          %v2934 = vsel %vm1650, %v2930, %v2932
          %v2937 = vsel %vm527, %v2933, 0.0
          %v2938 = vsel %vm528, %v2934, 0.0
          %s2939 = sld [smem:[#allocation5 + $0x5a]]
          %s2940 = sld [smem:[#allocation5 + $0xbc]]
          %v2941 = vstv %s2939
          %v2942 = vmul.f32 %v2941, %v2937
          %v2943 = vmul.f32 %v2941, %v2938
          %v2944 = vadd.f32 %v2920, %v2942
          %v2945 = vadd.f32 %v2921, %v2943
          %v2946 = vstv %s2940
          %v2947 = vmul.f32 %v2946, %v2937
          %v2948 = vmul.f32 %v2946, %v2938
          %v2949 = vadd.f32 %v2925, %v2947
          %v2950 = vadd.f32 %v2926, %v2948
          %2951 = vrot.lane.b32.xlu0 %v1880, 32
          %v2952 = vpop.permute.xlu0 %2951
          %2953 = vrot.lane.b32.xlu0 %v1881, 32
          %v2954 = vpop.permute.xlu0 %2953
          %2955 = vrot.lane.b32.xlu0 %v1882, 32
          %v2956 = vpop.permute.xlu0 %2955
          %v2957 = vsel %vm1675, %v2952, %v2954
          %v2958 = vsel %vm1675, %v2954, %v2956
          %v2961 = vsel %vm497, %v2957, 0.0
          %v2962 = vsel %vm498, %v2958, 0.0
          %s2963 = sld [smem:[#allocation5 + $0x5b]]
          %s2964 = sld [smem:[#allocation5 + $0xbd]]
          %v2965 = vstv %s2963
          %v2966 = vmul.f32 %v2965, %v2961
          %v2967 = vmul.f32 %v2965, %v2962
          %v2968 = vadd.f32 %v2944, %v2966
          %v2969 = vadd.f32 %v2945, %v2967
          %v2970 = vstv %s2964
          %v2971 = vmul.f32 %v2970, %v2961
          %v2972 = vmul.f32 %v2970, %v2962
          %v2973 = vadd.f32 %v2949, %v2971
          %v2974 = vadd.f32 %v2950, %v2972
          %2975 = vrot.lane.b32.xlu0 %v1880, 31
          %v2976 = vpop.permute.xlu0 %2975
          %2977 = vrot.lane.b32.xlu0 %v1881, 31
          %v2978 = vpop.permute.xlu0 %2977
          %2979 = vrot.lane.b32.xlu0 %v1882, 31
          %v2980 = vpop.permute.xlu0 %2979
          %v2981 = vsel %vm1700, %v2976, %v2978
          %v2982 = vsel %vm1700, %v2978, %v2980
          %v2985 = vsel %vm503, %v2981, 0.0
          %v2986 = vsel %vm504, %v2982, 0.0
          %s2987 = sld [smem:[#allocation5 + $0x5c]]
          %s2988 = sld [smem:[#allocation5 + $0xbe]]
          %v2989 = vstv %s2987
          %v2990 = vmul.f32 %v2989, %v2985
          %v2991 = vmul.f32 %v2989, %v2986
          %v2992 = vadd.f32 %v2968, %v2990
          %v2993 = vadd.f32 %v2969, %v2991
          %v2994 = vstv %s2988
          %v2995 = vmul.f32 %v2994, %v2985
          %v2996 = vmul.f32 %v2994, %v2986
          %v2997 = vadd.f32 %v2973, %v2995
          %v2998 = vadd.f32 %v2974, %v2996
          %2999 = vrot.lane.b32.xlu0 %v1880, 30
          %v3000 = vpop.permute.xlu0 %2999
          %3001 = vrot.lane.b32.xlu0 %v1881, 30
          %v3002 = vpop.permute.xlu0 %3001
          %3003 = vrot.lane.b32.xlu0 %v1882, 30
          %v3004 = vpop.permute.xlu0 %3003
          %v3005 = vsel %vm1725, %v3000, %v3002
          %v3006 = vsel %vm1725, %v3002, %v3004
          %v3009 = vsel %vm509, %v3005, 0.0
          %v3010 = vsel %vm510, %v3006, 0.0
          %s3011 = sld [smem:[#allocation5 + $0x5d]]
          %s3012 = sld [smem:[#allocation5 + $0xbf]]
          %v3013 = vstv %s3011
          %v3014 = vmul.f32 %v3013, %v3009
          %v3015 = vmul.f32 %v3013, %v3010
          %v3016 = vadd.f32 %v2992, %v3014
          %v3017 = vadd.f32 %v2993, %v3015
          %v3018 = vstv %s3012
          %v3019 = vmul.f32 %v3018, %v3009
          %v3020 = vmul.f32 %v3018, %v3010
          %v3021 = vadd.f32 %v2997, %v3019
          %v3022 = vadd.f32 %v2998, %v3020
          %s3023 = sld [smem:[#allocation5 + $0x5e]]
          %s3024 = sld [smem:[#allocation5 + $0xc0]]
          %v3025 = vstv %s3023
          %v3026 = vmul.f32 %v3025, %v1878
          %v3028 = vperm.slane %v3026, 0
          %v3029 = vperm.slane %v3026, 1
          %v3030 = vperm.slane %v3026, 2
          %3031 = vrot.lane.b32.xlu0 %v3028, 29
          %v3032 = vpop.permute.xlu0 %3031
          %3033 = vrot.lane.b32.xlu0 %v3029, 29
          %v3034 = vpop.permute.xlu0 %3033
          %3035 = vrot.lane.b32.xlu0 %v3030, 29
          %v3036 = vpop.permute.xlu0 %3035
          %v3037 = vsel %vm1758, %v3032, %v3034
          %v3038 = vsel %vm1758, %v3034, %v3036
          %v3041 = vadd.f32 %v3016, %v3037
          %v3042 = vadd.f32 %v3017, %v3038
          %v3043 = vstv %s3024
          %v3044 = vmul.f32 %v3043, %v1878
          %v3046 = vperm.slane %v3044, 0
          %v3047 = vperm.slane %v3044, 1
          %v3048 = vperm.slane %v3044, 2
          %3049 = vrot.lane.b32.xlu0 %v3046, 29
          %v3050 = vpop.permute.xlu0 %3049
          %3051 = vrot.lane.b32.xlu0 %v3047, 29
          %v3052 = vpop.permute.xlu0 %3051
          %3053 = vrot.lane.b32.xlu0 %v3048, 29
          %v3054 = vpop.permute.xlu0 %3053
          %v3055 = vsel %vm1758, %v3050, %v3052
          %v3056 = vsel %vm1758, %v3052, %v3054
          %v3059 = vadd.f32 %v3021, %v3055
          %v3060 = vadd.f32 %v3022, %v3056
          %3061 = vrot.lane.b32.xlu0 %v1880, 28
          %v3062 = vpop.permute.xlu0 %3061
          %3063 = vrot.lane.b32.xlu0 %v1881, 28
          %v3064 = vpop.permute.xlu0 %3063
          %3065 = vrot.lane.b32.xlu0 %v1882, 28
          %v3066 = vpop.permute.xlu0 %3065
          %v3067 = vsel %vm1789, %v3062, %v3064
          %v3068 = vsel %vm1789, %v3064, %v3066
          %v3071 = vsel %vm515, %v3067, 0.0
          %v3072 = vsel %vm516, %v3068, 0.0
          %s3073 = sld [smem:[#allocation5 + $0x5f]]
          %s3074 = sld [smem:[#allocation5 + $0xc1]]
          %v3075 = vstv %s3073
          %v3076 = vmul.f32 %v3075, %v3071
          %v3077 = vmul.f32 %v3075, %v3072
          %v3078 = vadd.f32 %v3041, %v3076
          %v3079 = vadd.f32 %v3042, %v3077
          %v3080 = vstv %s3074
          %v3081 = vmul.f32 %v3080, %v3071
          %v3082 = vmul.f32 %v3080, %v3072
          %v3083 = vadd.f32 %v3059, %v3081
          %v3084 = vadd.f32 %v3060, %v3082
          %3085 = vrot.lane.b32.xlu0 %v1880, 27
          %v3086 = vpop.permute.xlu0 %3085
          %3087 = vrot.lane.b32.xlu0 %v1881, 27
          %v3088 = vpop.permute.xlu0 %3087
          %3089 = vrot.lane.b32.xlu0 %v1882, 27
          %v3090 = vpop.permute.xlu0 %3089
          %v3091 = vsel %vm1814, %v3086, %v3088
          %v3092 = vsel %vm1814, %v3088, %v3090
          %v3095 = vsel %vm521, %v3091, 0.0
          %v3096 = vsel %vm522, %v3092, 0.0
          %s3097 = sld [smem:[#allocation5 + $0x60]]
          %s3098 = sld [smem:[#allocation5 + $0xc2]]
          %v3099 = vstv %s3097
          %v3100 = vmul.f32 %v3099, %v3095
          %v3101 = vmul.f32 %v3099, %v3096
          %v3102 = vadd.f32 %v3078, %v3100
          %v3103 = vadd.f32 %v3079, %v3101
          %v3104 = vstv %s3098
          %v3105 = vmul.f32 %v3104, %v3095
          %v3106 = vmul.f32 %v3104, %v3096
          %v3107 = vadd.f32 %v3083, %v3105
          %v3108 = vadd.f32 %v3084, %v3106
          %3109 = vrot.lane.b32.xlu0 %v1880, 26
          %v3110 = vpop.permute.xlu0 %3109
          %3111 = vrot.lane.b32.xlu0 %v1881, 26
          %v3112 = vpop.permute.xlu0 %3111
          %3113 = vrot.lane.b32.xlu0 %v1882, 26
          %v3114 = vpop.permute.xlu0 %3113
          %v3115 = vsel %vm1839, %v3110, %v3112
          %v3116 = vsel %vm1839, %v3112, %v3114
          %v3119 = vsel %vm527, %v3115, 0.0
          %v3120 = vsel %vm528, %v3116, 0.0
          %s3121 = sld [smem:[#allocation5 + $0x61]]
          %s3122 = sld [smem:[#allocation5 + $0xc3]]
          %v3123 = vstv %s3121
          %v3124 = vmul.f32 %v3123, %v3119
          %v3125 = vmul.f32 %v3123, %v3120
          %v3126 = vadd.f32 %v3102, %v3124
          %v3127 = vadd.f32 %v3103, %v3125
          %v3128 = vstv %s3122
          %v3129 = vmul.f32 %v3128, %v3119
          %v3130 = vmul.f32 %v3128, %v3120
          %v3131 = vadd.f32 %v3107, %v3129
          %v3132 = vadd.f32 %v3108, %v3130
          %v3133 = vmax.f32 %v3126, %v3131
          %v3134 = vmax.f32 %v3127, %v3132
          %v3135 = vsub.f32 %v3126, %v3133
          %v3136 = vsub.f32 %v3127, %v3134
          %v3137 = vmul.f32 %v3135, 1.442695
          %v3138 = vpow.pop %v3137
          %v3139 = vmul.f32 %v3136, 1.442695
          %v3140 = vpow.pop %v3139
          %v3141 = vsub.f32 %v3131, %v3133
          %v3142 = vsub.f32 %v3132, %v3134
          %v3143 = vmul.f32 %v3141, 1.442695
          %v3144 = vpow.pop %v3143
          %v3145 = vmul.f32 %v3142, 1.442695
          %v3146 = vpow.pop %v3145
          %v3147 = vadd.f32 %v3138, %v3144
          %v3148 = vadd.f32 %v3140, %v3146
          %v3149 = vrcp.pop %v3147
          %v3150 = vrcp.pop %v3148
          %v3151 = vmul.f32 %v3147, %v3149
          %v3152 = vmul.f32 %v3148, %v3150
          %v3153 = vsub.f32 2.0, %v3151
          %v3154 = vsub.f32 2.0, %v3152
          %v3155 = vmul.f32 %v3149, %v3153
          %v3156 = vmul.f32 %v3150, %v3154
          %v3157 = vmul.f32 %v3138, %v3155
          %v3158 = vmul.f32 %v3140, %v3156
          %v3161 = vrot.slane %v3158, 7
          %vm3162 = vcmask 1040384
          %v3163 = vsel %vm3162, %v3157, %v3161
          %vm3165 = vcmp.ge.s32.totalorder %v452, 0
          %vm3166 = vcmp.lt.s32.totalorder %v452, 256
          %vm3167 = vmand %vm3165, %vm3166
          %3168 = vst.msk [vmem:[%s302] ss:$2 sm:$0x3] %vm3167, %v3163
          %v3169 = vmul.f32 %v3144, %v3155
          %v3170 = vmul.f32 %v3146, %v3156
          %v3173 = vrot.slane %v3170, 7
          %v3174 = vsel %vm3162, %v3169, %v3173
          %s3176 = scalar_lea.vmem %s302, 1 [#allocation14]
          %3177 = vst.msk [vmem:[%s3176] ss:$2 sm:$0x3] %vm3167, %v3174
        $region64: #{tpu_custom_call.1} parent=35 // pred_fallthru
          _
        %s3178 = sand.u32 %s144, 1
        %s3179 = scalar_lea.sflag [#allocation7], %s3178
        %s3180 = sand.u32 %s144, 1
        %s3181 = smul.addr %s3180, 4
        %s3182 = scalar_lea.vmem [#allocation14], %s3181
        // Predicated region
        $region65: #{tpu_custom_call.1} parent=35 // pred_check
          %p3183 = pneg %p154
        $region66: #{tpu_custom_call.1} parent=35 // pred_check_branch
          %3185 = sbr.rel (%p3183) target = $region68
        $region67: #{tpu_custom_call.1} parent=35 // pred_region
          %3187 = vsyncadd %s3179, 0
          %s3188 = smul.addr %s30, 2
          %s3189 = smul.addr %s3188, 2
          %s3190 = scalar_lea.hbm %s4, %s3189
          %s3192 = sshll.u32 %s3182, 4
          %s3193 = int_to_ptr.vmem [resolvable:$true] %s3192
          %s3194 = sshll.u32 %s3190, 4
          %s3195 = int_to_ptr.hbm [resolvable:$true] %s3194
          %3197 = dma.vmem_to_hbm [thread:$0]  %s3193, 64, %s3195, %s3179
        $region68: #{tpu_custom_call.1} parent=35 // pred_fallthru
          _
      $region36: #{tpu_custom_call.1} parent=5 // pred_fallthru
        _
      %p3198 = scmp.le.s32.totalorder 2, %s21
      // Predicated region
      $region69: #{tpu_custom_call.1} parent=5 // pred_check
        %p3199 = pneg %p3198
      $region70: #{tpu_custom_call.1} parent=5 // pred_check_branch
        %3201 = sbr.rel (%p3199) target = $region72
      $region71: #{tpu_custom_call.1} parent=5 // pred_region
        %s3202 = ssub.s32 %s21, 2
        // Predicated region
        $region73: #{tpu_custom_call.1} parent=71 // pred_check
          %p3203 = pneg %p160
        $region74: #{tpu_custom_call.1} parent=71 // pred_check_branch
          %3205 = sbr.rel (%p3203) target = $region76
        $region75: #{tpu_custom_call.1} parent=71 // pred_region
          %s3206 = sand.u32 %s145, 1
          %s3207 = scalar_lea.sflag [#allocation7], %s3206
          %s3208 = sand.u32 %s145, 1
          %s3209 = smul.addr %s3208, 4
          %s3210 = scalar_lea.vmem [#allocation14], %s3209
          %3212 = dma.done %s3207, 64
        $region76: #{tpu_custom_call.1} parent=71 // pred_fallthru
          _
      $region72: #{tpu_custom_call.1} parent=5 // pred_fallthru
        _
    $region6: #{tpu_custom_call.1} parent=1 // loop_footer
      %s25 = sadd.s32 1, %s21
    $region7: #{tpu_custom_call.1} parent=1 // loop_footer_branch
      %20 = sbr.rel target = $region3
    $region8: #{tpu_custom_call.1} parent=1 // loop_exit
      _
    %3213 = vsyncpa [#allocation6], 1
    %s3214 = scalar_lea.sflag [#allocation6], 1
    %3215 = vsyncpa %s3214, 1
    %3216 = vsyncpa [#allocation13], 1
    %s3217 = scalar_lea.sflag [#allocation13], 1
    %3218 = vsyncpa %s3217, 1
    %3219 = vsyncpa [#allocation7], 1
    %s3220 = scalar_lea.sflag [#allocation7], 1
    %3221 = vsyncpa %s3220, 1
    %3222 = vsyncpa [#allocation8], 1
    %s3223 = scalar_lea.sflag [#allocation8], 1
    %3224 = vsyncpa %s3223, 1
    %3225 = vsyncpa [#allocation10], 1

</llo_original>
